<compile_context>
chip_gen: v5e
topology: v5e:2x2
jax: 0.10.0
libtpu: 0.0.40
codegen_flags: <defaults>
</compile_context>

<pallas_src>
import functools

import numpy as np
import jax
import jax.numpy as jnp
from jax.experimental import pallas as pl
from jax.experimental.pallas import tpu as pltpu


_VMEM_LIMIT = 48 * 1024 * 1024   # <= v7x 64 MiB/TC with headroom; generous on v5e/v6e.


def _ceil_to(x, m):
    return ((x + m - 1) // m) * m


def _pick_tile(dim, max_tile, granule):
    """Largest tile <= max_tile that divides dim (granule-aligned).
    Returns (tile, padded_dim). Full dim when it fits; pads only as a last resort."""
    if dim <= max_tile:
        return dim, dim
    t = (max_tile // granule) * granule
    while t >= granule:
        if dim % t == 0:
            return t, dim
        t -= granule
    t = (max_tile // granule) * granule
    return t, _ceil_to(dim, t)


# ----------------------------------------------------------------------------
# Tiled linear: y = act(x @ w + b) (+ residual); bf16 in/out, f32 accumulate.
# ----------------------------------------------------------------------------
def _linear_kernel(*refs, activation, has_bias, has_residual):
    x_ref, w_ref = refs[0], refs[1]
    i = 2
    b_ref = r_ref = None
    if has_bias:
        b_ref = refs[i]; i += 1
    if has_residual:
        r_ref = refs[i]; i += 1
    o_ref, acc_ref = refs[i], refs[i + 1]

    @pl.when(pl.program_id(2) == 0)
    def _():
        acc_ref[...] = jnp.zeros_like(acc_ref)

    acc_ref[...] += jnp.dot(x_ref[...], w_ref[...],
                            preferred_element_type=jnp.float32)

    @pl.when(pl.program_id(2) == pl.num_programs(2) - 1)
    def _():
        acc = acc_ref[...]
        if has_bias:
            acc = acc + b_ref[...]                      # f32 bias
        if activation == "quickgelu":
            acc = acc * jax.nn.sigmoid(1.702 * acc)
        if has_residual:
            acc = acc + r_ref[...].astype(jnp.float32)
        o_ref[...] = acc.astype(o_ref.dtype)


def pallas_linear(x, w, b=None, *, activation=None, residual=None,
                  tm_max=256, tn_max=512, tk_max=1024):
    """y = act(x @ w + b) + residual.  x: (M, K) bf16, w: (K, N) bf16."""
    M, K = x.shape
    _, N = w.shape
    tm, Mp = _pick_tile(M, tm_max, 8)
    tn, Np = _pick_tile(N, tn_max, 128)
    tk, Kp = _pick_tile(K, tk_max, 128)

    xp = x if (Mp, Kp) == (M, K) else jnp.pad(x, ((0, Mp - M), (0, Kp - K)))
    wp = w if (Kp, Np) == (K, N) else jnp.pad(w, ((0, Kp - K), (0, Np - N)))

    args = [xp, wp]
    in_specs = [pl.BlockSpec((tm, tk), lambda i, j, k: (i, k)),
                pl.BlockSpec((tk, tn), lambda i, j, k: (k, j))]

    has_bias = b is not None
    if has_bias:
        bp = b if Np == N else jnp.pad(b, (0, Np - N))
        args.append(bp.reshape(1, Np))
        in_specs.append(pl.BlockSpec((1, tn), lambda i, j, k: (0, j)))

    has_residual = residual is not None
    if has_residual:
        rp = residual if (Mp, Np) == (M, N) else jnp.pad(residual,
                                                         ((0, Mp - M), (0, Np - N)))
        args.append(rp)
        in_specs.append(pl.BlockSpec((tm, tn), lambda i, j, k: (i, j)))

    kernel = functools.partial(_linear_kernel, activation=activation,
                               has_bias=has_bias, has_residual=has_residual)
    out = pl.pallas_call(
        kernel,
        out_shape=jax.ShapeDtypeStruct((Mp, Np), jnp.bfloat16),
        grid=(Mp // tm, Np // tn, Kp // tk),
        in_specs=in_specs,
        out_specs=pl.BlockSpec((tm, tn), lambda i, j, k: (i, j)),
        scratch_shapes=[pltpu.VMEM((tm, tn), jnp.float32)],
        compiler_params=pltpu.CompilerParams(
            dimension_semantics=("parallel", "parallel", "arbitrary"),
            vmem_limit_bytes=_VMEM_LIMIT),
        cost_estimate=pl.CostEstimate(
            flops=2 * Mp * Np * Kp,
            transcendentals=Mp * Np if activation == "quickgelu" else 0,
            bytes_accessed=2 * (Mp * Kp + Kp * Np + Mp * Np)),
    )(*args)
    if (Mp, Np) != (M, N):
        out = out[:M, :N]
    return out


# ----------------------------------------------------------------------------
# LayerNorm fused into the consumer matmul: y = act(LN(x) @ w + b).
# LN of the (tm, K) row tile is computed once per row tile (hoisted to a VMEM
# scratch at the first N tile) and reused for every output-column tile.
# ----------------------------------------------------------------------------
def _ln_linear_kernel(*refs, eps, activation, has_bias):
    if has_bias:
        x_ref, g_ref, bt_ref, w_ref, b_ref, o_ref, xn_ref = refs
    else:
        x_ref, g_ref, bt_ref, w_ref, o_ref, xn_ref = refs
        b_ref = None

    @pl.when(pl.program_id(1) == 0)
    def _():
        x = x_ref[...].astype(jnp.float32)
        mu = jnp.mean(x, axis=-1, keepdims=True)
        xc = x - mu
        var = jnp.mean(xc * xc, axis=-1, keepdims=True)
        y = xc * jax.lax.rsqrt(var + eps)
        y = y * g_ref[...] + bt_ref[...]
        xn_ref[...] = y.astype(xn_ref.dtype)

    acc = jnp.dot(xn_ref[...], w_ref[...], preferred_element_type=jnp.float32)
    if has_bias:
        acc = acc + b_ref[...]
    if activation == "quickgelu":
        acc = acc * jax.nn.sigmoid(1.702 * acc)
    o_ref[...] = acc.astype(o_ref.dtype)


def pallas_ln_linear(x, g, beta, w, b=None, *, activation=None, eps=1e-5,
                     tm_max=256, tn_max=512):
    M, K = x.shape
    _, N = w.shape
    tm, Mp = _pick_tile(M, tm_max, 8)
    tn, Np = _pick_tile(N, tn_max, 128)

    xp = x if Mp == M else jnp.pad(x, ((0, Mp - M), (0, 0)))
    wp = w if Np == N else jnp.pad(w, ((0, 0), (0, Np - N)))

    args = [xp, g.reshape(1, K), beta.reshape(1, K), wp]
    in_specs = [pl.BlockSpec((tm, K), lambda i, j: (i, 0)),
                pl.BlockSpec((1, K), lambda i, j: (0, 0)),
                pl.BlockSpec((1, K), lambda i, j: (0, 0)),
                pl.BlockSpec((K, tn), lambda i, j: (0, j))]
    has_bias = b is not None
    if has_bias:
        bp = b if Np == N else jnp.pad(b, (0, Np - N))
        args.append(bp.reshape(1, Np))
        in_specs.append(pl.BlockSpec((1, tn), lambda i, j: (0, j)))

    kernel = functools.partial(_ln_linear_kernel, eps=eps, activation=activation,
                               has_bias=has_bias)
    out = pl.pallas_call(
        kernel,
        out_shape=jax.ShapeDtypeStruct((Mp, Np), jnp.bfloat16),
        grid=(Mp // tm, Np // tn),
        in_specs=in_specs,
        out_specs=pl.BlockSpec((tm, tn), lambda i, j: (i, j)),
        scratch_shapes=[pltpu.VMEM((tm, K), jnp.bfloat16)],
        compiler_params=pltpu.CompilerParams(
            dimension_semantics=("parallel", "arbitrary"),   # scratch carried across j
            vmem_limit_bytes=_VMEM_LIMIT),
        cost_estimate=pl.CostEstimate(
            flops=2 * Mp * Np * K,
            transcendentals=Mp * Np if activation == "quickgelu" else 0,
            bytes_accessed=2 * (Mp * K + K * Np + Mp * Np)),
    )(*args)
    if (Mp, Np) != (M, N):
        out = out[:M, :N]
    return out


# ----------------------------------------------------------------------------
# Standalone LayerNorm (only ln_pre, whose output is also the residual stream)
# ----------------------------------------------------------------------------
def _layernorm_kernel(x_ref, g_ref, b_ref, o_ref, *, eps):
    x = x_ref[...].astype(jnp.float32)
    mu = jnp.mean(x, axis=-1, keepdims=True)
    xc = x - mu
    var = jnp.mean(xc * xc, axis=-1, keepdims=True)
    y = xc * jax.lax.rsqrt(var + eps)
    o_ref[...] = (y * g_ref[...] + b_ref[...]).astype(o_ref.dtype)


def pallas_layernorm(x2, g, b, *, eps=1e-5, tm_max=512):
    M, D = x2.shape
    tm, Mp = _pick_tile(M, tm_max, 8)
    xp = x2 if Mp == M else jnp.pad(x2, ((0, Mp - M), (0, 0)))
    out = pl.pallas_call(
        functools.partial(_layernorm_kernel, eps=eps),
        out_shape=jax.ShapeDtypeStruct((Mp, D), jnp.bfloat16),
        grid=(Mp // tm,),
        in_specs=[pl.BlockSpec((tm, D), lambda i: (i, 0)),
                  pl.BlockSpec((1, D), lambda i: (0, 0)),
                  pl.BlockSpec((1, D), lambda i: (0, 0))],
        out_specs=pl.BlockSpec((tm, D), lambda i: (i, 0)),
        compiler_params=pltpu.CompilerParams(
            dimension_semantics=("parallel",),
            vmem_limit_bytes=_VMEM_LIMIT),
    )(xp, g.reshape(1, D), b.reshape(1, D))
    return out if Mp == M else out[:M]


# ----------------------------------------------------------------------------
# Multi-head attention: grid over (batch, head); each step processes one head's
# lane-aligned (L, dh) Q/K/V tiles.  Query scale is pre-folded into W_q.
# ----------------------------------------------------------------------------
def _attention_kernel(qkv_ref, o_ref, *, causal, valid_len):
    q = qkv_ref[0, 0, 0]                                   # (L, dh) bf16
    k = qkv_ref[0, 1, 0]
    v = qkv_ref[0, 2, 0]
    L = q.shape[0]
    s = jax.lax.dot_general(q, k, (((1,), (1,)), ((), ())),
                            preferred_element_type=jnp.float32)      # (L, L)
    mask = None
    if causal:
        row = jax.lax.broadcasted_iota(jnp.int32, (L, L), 0)
        col = jax.lax.broadcasted_iota(jnp.int32, (L, L), 1)
        mask = col <= row
    if valid_len < L:                                      # mask padded key positions
        col = jax.lax.broadcasted_iota(jnp.int32, (L, L), 1)
        kmask = col < valid_len
        mask = kmask if mask is None else jnp.logical_and(mask, kmask)
    if mask is not None:
        s = jnp.where(mask, s, -jnp.inf)
    s = s - jnp.max(s, axis=-1, keepdims=True)
    p = jnp.exp(s)
    p = p * pl.reciprocal(jnp.sum(p, axis=-1, keepdims=True), approx=True)
    o_ref[0, 0] = jnp.dot(p.astype(jnp.bfloat16), v,
                          preferred_element_type=jnp.float32).astype(o_ref.dtype)


def pallas_attention(qkv5, *, causal, valid_len):
    """qkv5: (B, 3, n_head, L, dh) bf16.  Returns (B, n_head, L, dh) bf16."""
    B, _, n_head, L, dh = qkv5.shape
    # TODO(synk): for very long sequences a flash-style q-tiled online softmax would
    # keep the (L, L) scores out of VMEM entirely; not needed at CLIP sizes.
    kernel = functools.partial(_attention_kernel, causal=causal, valid_len=valid_len)
    return pl.pallas_call(
        kernel,
        out_shape=jax.ShapeDtypeStruct((B, n_head, L, dh), jnp.bfloat16),
        grid=(B, n_head),
        in_specs=[pl.BlockSpec((1, 3, 1, L, dh), lambda b, h: (b, 0, h, 0, 0))],
        out_specs=pl.BlockSpec((1, 1, L, dh), lambda b, h: (b, h, 0, 0)),
        compiler_params=pltpu.CompilerParams(
            dimension_semantics=("parallel", "parallel"),
            vmem_limit_bytes=_VMEM_LIMIT),
    )(qkv5)


# ----------------------------------------------------------------------------
# Normalized CLIP logits (matches the reference: image features are dense (B, N, E),
# .norm(dim=1) is over the token axis; text .norm(dim=1) over E).
# ----------------------------------------------------------------------------
def _logits_kernel(img_ref, txt_ref, ls_ref, o_ref):
    img = img_ref[0].astype(jnp.float32)                    # (N, E)
    txt = txt_ref[...].astype(jnp.float32)                  # (T, E)
    img_n = img * jax.lax.rsqrt(jnp.sum(img * img, axis=0, keepdims=True))
    txt_n = txt * jax.lax.rsqrt(jnp.sum(txt * txt, axis=1, keepdims=True))
    scale = jnp.exp(ls_ref[0])
    logits = scale * jax.lax.dot_general(
        img_n.astype(jnp.bfloat16), txt_n.astype(jnp.bfloat16),
        (((1,), (1,)), ((), ())), preferred_element_type=jnp.float32)
    o_ref[0] = logits.astype(o_ref.dtype)


def pallas_clip_logits(img_f, txt_f, logit_scale):
    B, N, E = img_f.shape
    T = txt_f.shape[0]
    return pl.pallas_call(
        _logits_kernel,
        out_shape=jax.ShapeDtypeStruct((B, N, T), jnp.float32),
        grid=(B,),
        in_specs=[pl.BlockSpec((1, N, E), lambda i: (i, 0, 0)),
                  pl.BlockSpec((T, E), lambda i: (0, 0)),
                  pl.BlockSpec(memory_space=pltpu.MemorySpace.SMEM)],
        out_specs=pl.BlockSpec((1, N, T), lambda i: (i, 0, 0)),
        compiler_params=pltpu.CompilerParams(
            dimension_semantics=("parallel",),
            vmem_limit_bytes=_VMEM_LIMIT),
    )(img_f, txt_f, logit_scale.reshape(1))


# ----------------------------------------------------------------------------
# Model glue built on the fused Pallas kernels (activations stay (B*Lp, D) bf16).
# ----------------------------------------------------------------------------
def residual_block(x2, p, n_head, causal, *, B, Lp, valid_len):
    D = x2.shape[1]
    dh = D // n_head
    # LN1 fused into the packed QKV projection (q scaling already folded into W_q).
    qkv = pallas_ln_linear(x2, p['ln_1_g'], p['ln_1_b'],
                           p['attn_in_w'], p['attn_in_b'])            # (B*Lp, 3D)
    qkv5 = qkv.reshape(B, Lp, 3, n_head, dh).transpose(0, 2, 3, 1, 4)  # (B,3,H,Lp,dh)
    attn = pallas_attention(qkv5, causal=causal, valid_len=valid_len)  # (B,H,Lp,dh)
    attn = attn.transpose(0, 2, 1, 3).reshape(B * Lp, D)
    # out-proj with the residual add fused into its epilogue.
    x2 = pallas_linear(attn, p['attn_out_w'], p['attn_out_b'], residual=x2)
    # LN2 + c_fc + QuickGELU fused; c_proj with the residual add fused.
    h = pallas_ln_linear(x2, p['ln_2_g'], p['ln_2_b'], p['fc_w'], p['fc_b'],
                         activation="quickgelu")
    x2 = pallas_linear(h, p['proj_w'], p['proj_b'], residual=x2)
    return x2


def encode_image(image, vp, cfg):
    """VisionTransformer forward. image: NCHW. Returns dense features (B, N, embed_dim)."""
    B, C, H, W = image.shape
    p = cfg['vision_patch_size']
    width = cfg['vision_width']
    gh, gw = H // p, W // p
    # patchify (Conv2d with kernel=stride=patch, bias=False) as a matmul; (c, dy, dx) order.
    patches = image.reshape(B, C, gh, p, gw, p).transpose(0, 2, 4, 1, 3, 5)
    patches = patches.reshape(B * gh * gw, C * p * p).astype(jnp.bfloat16)
    x = pallas_linear(patches, vp['conv1_w'])                       # bias-free, full-K tile
    x = x.reshape(B, gh * gw, width)

    cls = jnp.broadcast_to(vp['class_embedding'].reshape(1, 1, width), (B, 1, width))
    x = jnp.concatenate([cls, x], axis=1)                           # (B, L, width)
    L = x.shape[1]
    # F.interpolate(pos_emb, size=L, mode='linear') is the identity here (same length).
    x = x + vp['positional_embedding'][None]
    # pad the sequence ONCE; padded keys are masked inside the attention kernel.
    Lp = _ceil_to(L, 8)
    if Lp != L:
        x = jnp.pad(x, ((0, 0), (0, Lp - L), (0, 0)))
    x2 = pallas_layernorm(x.reshape(B * Lp, width), vp['ln_pre_g'], vp['ln_pre_b'])

    for bp in vp['blocks']:
        x2 = residual_block(x2, bp, cfg['vision_heads'], False, B=B, Lp=Lp, valid_len=L)

    x = x2.reshape(B, Lp, width)[:, 1:L, :]                         # ln_post(x[:, 1:, :]) per spec
    N = L - 1
    # ln_post fused with the output projection (no bias on proj).
    x = pallas_ln_linear(x.reshape(B * N, width),
                         vp['ln_post_g'], vp['ln_post_b'], vp['proj'])
    return x.reshape(B, N, cfg['embed_dim'])


def encode_text(text, tp, cfg):
    """Text tower. text: (B, L) int32 token ids. Returns (B, embed_dim)."""
    B, L = text.shape
    tw = cfg['transformer_width']
    x = jnp.take(tp['token_embedding'], text, axis=0)               # gather (glue)
    x = x + tp['positional_embedding'][None]
    Lp = _ceil_to(L, 8)
    if Lp != L:                                                     # padded keys are behind the
        x = jnp.pad(x, ((0, 0), (0, Lp - L), (0, 0)))               # causal mask + key mask
    x2 = x.reshape(B * Lp, tw)
    for bp in tp['blocks']:
        x2 = residual_block(x2, bp, cfg['transformer_heads'], True, B=B, Lp=Lp, valid_len=L)
    x = x2.reshape(B, Lp, tw)
    eot = jnp.argmax((text == cfg['vocab_size'] - 1).astype(jnp.int32), axis=-1)
    feats = x[jnp.arange(B), eot]                                   # (B, tw); LN is row-wise, so
    # selecting EOT rows before ln_final is equivalent to the reference order.
    feats = pallas_ln_linear(feats, tp['ln_final_g'], tp['ln_final_b'],
                             tp['text_projection'])
    return feats


def clip_forward(params, image, text, cfg):
    img_f = encode_image(image, params['visual'], cfg)              # (B, N, E)
    txt_f = encode_text(text, params['text'], cfg)                  # (B, E)
    logits_per_image = pallas_clip_logits(img_f, txt_f, params['logit_scale'])  # (B, N, T)
    # TODO(synk): torch `.t()` errors on the 3-D logits this dense-feature forward produces;
    # we mirror the intended transpose as a full-axis reversal.
    logits_per_text = jnp.transpose(logits_per_image)
    return logits_per_image, logits_per_text


# ----------------------------------------------------------------------------
# Deterministic parameter initialization (shapes from CLIP.__init__),
# weights stored pre-transposed as (in_features, out_features) in bf16,
# biases / LayerNorm params in f32.  The MultiheadAttention 1/sqrt(dh) query
# scaling is folded into the Q columns of the packed QKV weights/bias.
# ----------------------------------------------------------------------------
def init_params(key, cfg):
    keys = iter(jax.random.split(key, 256))

    def nrm(shape, std, dtype=jnp.bfloat16):
        return (std * jax.random.normal(next(keys), shape, jnp.float32)).astype(dtype)

    def init_block(width, n_head, attn_std, proj_std, fc_std):
        dh = width // n_head
        w_in = attn_std * jax.random.normal(next(keys), (width, 3 * width), jnp.float32)
        w_in = w_in.at[:, :width].multiply(dh ** -0.5)              # fold q scale
        b_in = jnp.zeros((3 * width,), jnp.float32)                 # fold is a no-op on zeros
        return dict(
            ln_1_g=jnp.ones((width,), jnp.float32), ln_1_b=jnp.zeros((width,), jnp.float32),
            attn_in_w=w_in.astype(jnp.bfloat16),
            attn_in_b=b_in,
            attn_out_w=nrm((width, width), proj_std),
            attn_out_b=jnp.zeros((width,), jnp.float32),
            ln_2_g=jnp.ones((width,), jnp.float32), ln_2_b=jnp.zeros((width,), jnp.float32),
            fc_w=nrm((width, 4 * width), fc_std),
            fc_b=jnp.zeros((4 * width,), jnp.float32),
            proj_w=nrm((4 * width, width), proj_std),
            proj_b=jnp.zeros((width,), jnp.float32),
        )

    vw = cfg['vision_width']
    p = cfg['vision_patch_size']
    num_patches = (cfg['image_resolution'] // p) ** 2
    vscale = vw ** -0.5
    v_layers = cfg['vision_layers']
    visual = dict(
        conv1_w=nrm((3 * p * p, vw), 0.02),
        class_embedding=nrm((vw,), vscale),
        positional_embedding=nrm((num_patches + 1, vw), vscale),
        ln_pre_g=jnp.ones((vw,), jnp.float32), ln_pre_b=jnp.zeros((vw,), jnp.float32),
        blocks=[init_block(vw, cfg['vision_heads'], vw ** -0.5,
                           vw ** -0.5 * (2 * v_layers) ** -0.5,
                           (2 * vw) ** -0.5) for _ in range(v_layers)],
        ln_post_g=jnp.ones((vw,), jnp.float32), ln_post_b=jnp.zeros((vw,), jnp.float32),
        proj=nrm((vw, cfg['embed_dim']), vscale),
    )

    tw = cfg['transformer_width']
    t_layers = cfg['transformer_layers']
    proj_std = tw ** -0.5 * (2 * t_layers) ** -0.5
    attn_std = tw ** -0.5
    fc_std = (2 * tw) ** -0.5
    text = dict(
        token_embedding=nrm((cfg['vocab_size'], tw), 0.02),
        positional_embedding=nrm((cfg['context_length'], tw), 0.01),
        blocks=[init_block(tw, cfg['transformer_heads'], attn_std, proj_std, fc_std)
                for _ in range(t_layers)],
        ln_final_g=jnp.ones((tw,), jnp.float32), ln_final_b=jnp.zeros((tw,), jnp.float32),
        text_projection=nrm((tw, cfg['embed_dim']), tw ** -0.5),
    )

    return dict(visual=visual, text=text,
                logit_scale=jnp.array(np.log(1.0 / 0.07), jnp.float32))


# ----------------------------------------------------------------------------
if __name__ == "__main__":
    cfg = dict(
        embed_dim=32,
        image_resolution=16,
        vision_patch_size=8,
        vision_width=64,          # -> vision_heads = 64 // 64 = 1 (as in CLIP.__init__)
        vision_layers=2,
        vision_heads=1,
        context_length=8,
        vocab_size=64,
        transformer_width=32,
        transformer_heads=4,
        transformer_layers=2,
    )

    key = jax.random.PRNGKey(0)
    pkey, ikey, tkey = jax.random.split(key, 3)

    params = init_params(pkey, cfg)

    image = jax.random.normal(ikey, (2, 3, 16, 16), jnp.float32)           # NCHW
    text = jax.random.randint(tkey, (2, cfg['context_length']), 0,
                              cfg['vocab_size'] - 1, dtype=jnp.int32)
    # ensure exactly one EOT (vocab_size - 1) token per sequence
    text = text.at[0, 5].set(cfg['vocab_size'] - 1)
    text = text.at[1, 7].set(cfg['vocab_size'] - 1)

    fwd = jax.jit(lambda prm, img, txt: clip_forward(prm, img, txt, cfg))
    logits_per_image, logits_per_text = fwd(params, image, text)
    jax.block_until_ready((logits_per_image, logits_per_text))
    print("KERNEL_OK")
</pallas_src>

<mosaic_0001>
module attributes {stable_mosaic.version = 11 : i64} {
  func.func @_ln_linear_kernel(%arg0: i32, %arg1: i32, %arg2: memref<16x32xbf16, #tpu.memory_space<vmem>>, %arg3: memref<1x32xf32, #tpu.memory_space<vmem>>, %arg4: memref<1x32xf32, #tpu.memory_space<vmem>>, %arg5: memref<32x96xbf16, #tpu.memory_space<vmem>>, %arg6: memref<1x96xf32, #tpu.memory_space<vmem>>, %arg7: memref<16x96xbf16, #tpu.memory_space<vmem>>, %arg8: memref<16x32xbf16, #tpu.memory_space<vmem>>) attributes {dimension_semantics = [#tpu.dimension_semantics<parallel>, #tpu.dimension_semantics<arbitrary>], iteration_bounds = array<i64: 1, 1>, scalar_prefetch = 0 : i64, scratch_operands = 1 : i64, tpu.core_type = #tpu.core_type<tc>, window_params = [{transform_indices = @transform_0, window_bounds = array<i64: 16, 32>}, {pipeline_mode = #tpu.pipeline_mode<synchronous>, transform_indices = @transform_1, window_bounds = array<i64: 1, 32>}, {pipeline_mode = #tpu.pipeline_mode<synchronous>, transform_indices = @transform_2, window_bounds = array<i64: 1, 32>}, {transform_indices = @transform_3, window_bounds = array<i64: 32, 96>}, {transform_indices = @transform_4, window_bounds = array<i64: 1, 96>}, {transform_indices = @transform_5, window_bounds = array<i64: 16, 96>}]} {
    %c0_i32 = arith.constant 0 : i32
    %0 = arith.cmpi eq, %arg1, %c0_i32 : i32
    %1 = arith.extui %0 : i1 to i32
    %c0_i32_0 = arith.constant 0 : i32
    %2 = arith.cmpi ne, %1, %c0_i32_0 : i32
    scf.if %2 {
      %c0_8 = arith.constant 0 : index
      %c0_9 = arith.constant 0 : index
      %11 = vector.load %arg2[%c0_8, %c0_9] : memref<16x32xbf16, #tpu.memory_space<vmem>>, vector<16x32xbf16>
      %12 = arith.extf %11 : vector<16x32xbf16> to vector<16x32xf32>
      %cst_10 = arith.constant dense<0.000000e+00> : vector<16xf32>
      %13 = vector.multi_reduction <add>, %12, %cst_10 [1] : vector<16x32xf32> to vector<16xf32>
      %14 = vector.shape_cast %13 : vector<16xf32> to vector<16x1xf32>
      %cst_11 = arith.constant 3.200000e+01 : f32
      %15 = vector.broadcast %cst_11 : f32 to vector<16x1xf32>
      %16 = arith.divf %14, %15 : vector<16x1xf32>
      %17 = vector.broadcast %16 : vector<16x1xf32> to vector<16x32xf32>
      %18 = arith.subf %12, %17 : vector<16x32xf32>
      %19 = arith.mulf %18, %18 : vector<16x32xf32>
      %cst_12 = arith.constant dense<0.000000e+00> : vector<16xf32>
      %20 = vector.multi_reduction <add>, %19, %cst_12 [1] : vector<16x32xf32> to vector<16xf32>
      %21 = vector.shape_cast %20 : vector<16xf32> to vector<16x1xf32>
      %cst_13 = arith.constant 3.200000e+01 : f32
      %22 = vector.broadcast %cst_13 : f32 to vector<16x1xf32>
      %23 = arith.divf %21, %22 : vector<16x1xf32>
      %cst_14 = arith.constant 9.99999974E-6 : f32
      %24 = vector.broadcast %cst_14 : f32 to vector<16x1xf32>
      %25 = arith.addf %23, %24 : vector<16x1xf32>
      %26 = math.rsqrt %25 : vector<16x1xf32>
      %27 = vector.broadcast %26 : vector<16x1xf32> to vector<16x32xf32>
      %28 = arith.mulf %18, %27 : vector<16x32xf32>
      %c0_15 = arith.constant 0 : index
      %c0_16 = arith.constant 0 : index
      %29 = vector.load %arg3[%c0_15, %c0_16] : memref<1x32xf32, #tpu.memory_space<vmem>>, vector<1x32xf32>
      %30 = vector.broadcast %29 : vector<1x32xf32> to vector<16x32xf32>
      %31 = arith.mulf %28, %30 : vector<16x32xf32>
      %c0_17 = arith.constant 0 : index
      %c0_18 = arith.constant 0 : index
      %32 = vector.load %arg4[%c0_17, %c0_18] : memref<1x32xf32, #tpu.memory_space<vmem>>, vector<1x32xf32>
      %33 = vector.broadcast %32 : vector<1x32xf32> to vector<16x32xf32>
      %34 = arith.addf %31, %33 : vector<16x32xf32>
      %35 = arith.truncf %34 : vector<16x32xf32> to vector<16x32xbf16>
      %c0_19 = arith.constant 0 : index
      %c0_20 = arith.constant 0 : index
      %36 = vector.load %arg8[%c0_19, %c0_20] : memref<16x32xbf16, #tpu.memory_space<vmem>>, vector<16x32xbf16>
      tpu.vector_store %arg8[%c0_19, %c0_20], %35 {strides = array<i32>} : memref<16x32xbf16, #tpu.memory_space<vmem>>, vector<16x32xbf16>,
    } else {
    }
    %c0 = arith.constant 0 : index
    %c0_1 = arith.constant 0 : index
    %3 = vector.load %arg8[%c0, %c0_1] : memref<16x32xbf16, #tpu.memory_space<vmem>>, vector<16x32xbf16>
    %c0_2 = arith.constant 0 : index
    %c0_3 = arith.constant 0 : index
    %4 = vector.load %arg5[%c0_2, %c0_3] : memref<32x96xbf16, #tpu.memory_space<vmem>>, vector<32x96xbf16>
    %cst = arith.constant dense<0.000000e+00> : vector<16x96xf32>
    %5 = tpu.matmul %3, %4, %cst {dimension_numbers = #tpu.dot_dimension_numbers<[1], [0], [0], [1], [0, 0, 1, 1], [], []>} : vector<16x32xbf16>, vector<32x96xbf16>, vector<16x96xf32> -> vector<16x96xf32>
    %c0_4 = arith.constant 0 : index
    %c0_5 = arith.constant 0 : index
    %6 = vector.load %arg6[%c0_4, %c0_5] : memref<1x96xf32, #tpu.memory_space<vmem>>, vector<1x96xf32>
    %7 = vector.broadcast %6 : vector<1x96xf32> to vector<16x96xf32>
    %8 = arith.addf %5, %7 : vector<16x96xf32>
    %9 = arith.truncf %8 : vector<16x96xf32> to vector<16x96xbf16>
    %c0_6 = arith.constant 0 : index
    %c0_7 = arith.constant 0 : index
    %10 = vector.load %arg7[%c0_6, %c0_7] : memref<16x96xbf16, #tpu.memory_space<vmem>>, vector<16x96xbf16>
    tpu.vector_store %arg7[%c0_6, %c0_7], %9 {strides = array<i32>} : memref<16x96xbf16, #tpu.memory_space<vmem>>, vector<16x96xbf16>,
    return
  }
  func.func @transform_0(%arg0: i32, %arg1: i32) -> (i32, i32) {
    %c0_i32 = arith.constant 0 : i32
    %c0_i32_0 = arith.constant 0 : i32
    return %arg0, %c0_i32 : i32, i32
  }
  func.func @transform_1(%arg0: i32, %arg1: i32) -> (i32, i32) {
    %c0_i32 = arith.constant 0 : i32
    %c0_i32_0 = arith.constant 0 : i32
    %c0_i32_1 = arith.constant 0 : i32
    return %c0_i32, %c0_i32_0 : i32, i32
  }
  func.func @transform_2(%arg0: i32, %arg1: i32) -> (i32, i32) {
    %c0_i32 = arith.constant 0 : i32
    %c0_i32_0 = arith.constant 0 : i32
    %c0_i32_1 = arith.constant 0 : i32
    return %c0_i32, %c0_i32_0 : i32, i32
  }
  func.func @transform_3(%arg0: i32, %arg1: i32) -> (i32, i32) {
    %c0_i32 = arith.constant 0 : i32
    %c0_i32_0 = arith.constant 0 : i32
    return %c0_i32, %arg1 : i32, i32
  }
  func.func @transform_4(%arg0: i32, %arg1: i32) -> (i32, i32) {
    %c0_i32 = arith.constant 0 : i32
    %c0_i32_0 = arith.constant 0 : i32
    return %c0_i32, %arg1 : i32, i32
  }
  func.func @transform_5(%arg0: i32, %arg1: i32) -> (i32, i32) {
    %c0_i32 = arith.constant 0 : i32
    return %arg0, %arg1 : i32, i32
  }
}

module attributes {stable_mosaic.version = 11 : i64} {
  func.func @_attention_kernel(%arg0: i32, %arg1: i32, %arg2: memref<1x3x1x8x8xbf16, #tpu.memory_space<vmem>>, %arg3: memref<1x1x8x8xbf16, #tpu.memory_space<vmem>>) attributes {dimension_semantics = [#tpu.dimension_semantics<parallel>, #tpu.dimension_semantics<parallel>], iteration_bounds = array<i64: 2, 4>, scalar_prefetch = 0 : i64, scratch_operands = 0 : i64, tpu.core_type = #tpu.core_type<tc>, window_params = [{transform_indices = @transform_0, window_bounds = array<i64: 1, 3, 1, 8, 8>}, {transform_indices = @transform_1, window_bounds = array<i64: 1, 1, 8, 8>}]} {
    %c0 = arith.constant 0 : index
    %c0_0 = arith.constant 0 : index
    %c0_1 = arith.constant 0 : index
    %c0_2 = arith.constant 0 : index
    %c0_3 = arith.constant 0 : index
    %0 = vector.load %arg2[%c0, %c0_0, %c0_1, %c0_2, %c0_3] : memref<1x3x1x8x8xbf16, #tpu.memory_space<vmem>>, vector<1x1x1x8x8xbf16>
    %1 = vector.shape_cast %0 : vector<1x1x1x8x8xbf16> to vector<8x8xbf16>
    %c0_4 = arith.constant 0 : index
    %c1 = arith.constant 1 : index
    %c0_5 = arith.constant 0 : index
    %c0_6 = arith.constant 0 : index
    %c0_7 = arith.constant 0 : index
    %2 = vector.load %arg2[%c0_4, %c1, %c0_5, %c0_6, %c0_7] : memref<1x3x1x8x8xbf16, #tpu.memory_space<vmem>>, vector<1x1x1x8x8xbf16>
    %3 = vector.shape_cast %2 : vector<1x1x1x8x8xbf16> to vector<8x8xbf16>
    %c0_8 = arith.constant 0 : index
    %c2 = arith.constant 2 : index
    %c0_9 = arith.constant 0 : index
    %c0_10 = arith.constant 0 : index
    %c0_11 = arith.constant 0 : index
    %4 = vector.load %arg2[%c0_8, %c2, %c0_9, %c0_10, %c0_11] : memref<1x3x1x8x8xbf16, #tpu.memory_space<vmem>>, vector<1x1x1x8x8xbf16>
    %5 = vector.shape_cast %4 : vector<1x1x1x8x8xbf16> to vector<8x8xbf16>
    %cst = arith.constant dense<0.000000e+00> : vector<8x8xf32>
    %6 = tpu.matmul %1, %3, %cst {dimension_numbers = #tpu.dot_dimension_numbers<[1], [1], [0], [0], [0, 0, 1, 0], [], []>} : vector<8x8xbf16>, vector<8x8xbf16>, vector<8x8xf32> -> vector<8x8xf32>
    %7 = tpu.iota {dimensions = array<i32: 0>} : vector<8x8xi32>
    %8 = tpu.iota {dimensions = array<i32: 1>} : vector<8x8xi32>
    %9 = arith.cmpi sle, %8, %7 : vector<8x8xi32>
    %cst_12 = arith.constant 0xFF800000 : f32
    %10 = vector.broadcast %cst_12 : f32 to vector<8x8xf32>
    %11 = arith.select %9, %6, %10 : vector<8x8xi1>, vector<8x8xf32>
    %cst_13 = arith.constant dense<0xFF800000> : vector<8xf32>
    %12 = vector.multi_reduction <maximumf>, %11, %cst_13 [1] : vector<8x8xf32> to vector<8xf32>
    %13 = vector.shape_cast %12 : vector<8xf32> to vector<8x1xf32>
    %14 = vector.broadcast %13 : vector<8x1xf32> to vector<8x8xf32>
    %15 = arith.subf %11, %14 : vector<8x8xf32>
    %16 = math.exp %15 : vector<8x8xf32>
    %cst_14 = arith.constant dense<0.000000e+00> : vector<8xf32>
    %17 = vector.multi_reduction <add>, %16, %cst_14 [1] : vector<8x8xf32> to vector<8xf32>
    %18 = vector.shape_cast %17 : vector<8xf32> to vector<8x1xf32>
    %19 = tpu.reciprocal %18 {approx = true} : vector<8x1xf32> -> vector<8x1xf32>
    %20 = vector.broadcast %19 : vector<8x1xf32> to vector<8x8xf32>
    %21 = arith.mulf %16, %20 : vector<8x8xf32>
    %22 = arith.truncf %21 : vector<8x8xf32> to vector<8x8xbf16>
    %cst_15 = arith.constant dense<0.000000e+00> : vector<8x8xf32>
    %23 = tpu.matmul %22, %5, %cst_15 {dimension_numbers = #tpu.dot_dimension_numbers<[1], [0], [0], [1], [0, 0, 1, 1], [], []>} : vector<8x8xbf16>, vector<8x8xbf16>, vector<8x8xf32> -> vector<8x8xf32>
    %24 = arith.truncf %23 : vector<8x8xf32> to vector<8x8xbf16>
    %c0_16 = arith.constant 0 : index
    %c0_17 = arith.constant 0 : index
    %c0_18 = arith.constant 0 : index
    %c0_19 = arith.constant 0 : index
    %25 = vector.load %arg3[%c0_16, %c0_17, %c0_18, %c0_19] : memref<1x1x8x8xbf16, #tpu.memory_space<vmem>>, vector<1x1x8x8xbf16>
    %26 = vector.shape_cast %25 : vector<1x1x8x8xbf16> to vector<8x8xbf16>
    %27 = vector.shape_cast %24 : vector<8x8xbf16> to vector<1x1x8x8xbf16>
    tpu.vector_store %arg3[%c0_16, %c0_17, %c0_18, %c0_19], %27 {strides = array<i32>} : memref<1x1x8x8xbf16, #tpu.memory_space<vmem>>, vector<1x1x8x8xbf16>,
    return
  }
  func.func @transform_0(%arg0: i32, %arg1: i32) -> (i32, i32, i32, i32, i32) {
    %c0_i32 = arith.constant 0 : i32
    %c0_i32_0 = arith.constant 0 : i32
    %c0_i32_1 = arith.constant 0 : i32
    %c0_i32_2 = arith.constant 0 : i32
    return %arg0, %c0_i32, %arg1, %c0_i32_0, %c0_i32_1 : i32, i32, i32, i32, i32
  }
  func.func @transform_1(%arg0: i32, %arg1: i32) -> (i32, i32, i32, i32) {
    %c0_i32 = arith.constant 0 : i32
    %c0_i32_0 = arith.constant 0 : i32
    %c0_i32_1 = arith.constant 0 : i32
    return %arg0, %arg1, %c0_i32, %c0_i32_0 : i32, i32, i32, i32
  }
}

module attributes {stable_mosaic.version = 11 : i64} {
  func.func @_linear_kernel(%arg0: i32, %arg1: i32, %arg2: i32, %arg3: memref<16x32xbf16, #tpu.memory_space<vmem>>, %arg4: memref<32x32xbf16, #tpu.memory_space<vmem>>, %arg5: memref<1x32xf32, #tpu.memory_space<vmem>>, %arg6: memref<16x32xbf16, #tpu.memory_space<vmem>>, %arg7: memref<16x32xbf16, #tpu.memory_space<vmem>>, %arg8: memref<16x32xf32, #tpu.memory_space<vmem>>) attributes {dimension_semantics = [#tpu.dimension_semantics<parallel>, #tpu.dimension_semantics<parallel>, #tpu.dimension_semantics<arbitrary>], iteration_bounds = array<i64: 1, 1, 1>, scalar_prefetch = 0 : i64, scratch_operands = 1 : i64, tpu.core_type = #tpu.core_type<tc>, window_params = [{transform_indices = @transform_0, window_bounds = array<i64: 16, 32>}, {transform_indices = @transform_1, window_bounds = array<i64: 32, 32>}, {transform_indices = @transform_2, window_bounds = array<i64: 1, 32>}, {transform_indices = @transform_3, window_bounds = array<i64: 16, 32>}, {transform_indices = @transform_4, window_bounds = array<i64: 16, 32>}]} {
    %c0_i32 = arith.constant 0 : i32
    %0 = arith.cmpi eq, %arg2, %c0_i32 : i32
    %1 = arith.extui %0 : i1 to i32
    %c0_i32_0 = arith.constant 0 : i32
    %2 = arith.cmpi ne, %1, %c0_i32_0 : i32
    scf.if %2 {
      %cst_10 = arith.constant 0.000000e+00 : f32
      %12 = vector.broadcast %cst_10 : f32 to vector<16x32xf32>
      %c0_11 = arith.constant 0 : index
      %c0_12 = arith.constant 0 : index
      %13 = vector.load %arg8[%c0_11, %c0_12] : memref<16x32xf32, #tpu.memory_space<vmem>>, vector<16x32xf32>
      tpu.vector_store %arg8[%c0_11, %c0_12], %12 {strides = array<i32>} : memref<16x32xf32, #tpu.memory_space<vmem>>, vector<16x32xf32>,
    } else {
    }
    %c0 = arith.constant 0 : index
    %c0_1 = arith.constant 0 : index
    %3 = vector.load %arg8[%c0, %c0_1] : memref<16x32xf32, #tpu.memory_space<vmem>>, vector<16x32xf32>
    %c0_2 = arith.constant 0 : index
    %c0_3 = arith.constant 0 : index
    %4 = vector.load %arg3[%c0_2, %c0_3] : memref<16x32xbf16, #tpu.memory_space<vmem>>, vector<16x32xbf16>
    %c0_4 = arith.constant 0 : index
    %c0_5 = arith.constant 0 : index
    %5 = vector.load %arg4[%c0_4, %c0_5] : memref<32x32xbf16, #tpu.memory_space<vmem>>, vector<32x32xbf16>
    %cst = arith.constant dense<0.000000e+00> : vector<16x32xf32>
    %6 = tpu.matmul %4, %5, %cst {dimension_numbers = #tpu.dot_dimension_numbers<[1], [0], [0], [1], [0, 0, 1, 1], [], []>} : vector<16x32xbf16>, vector<32x32xbf16>, vector<16x32xf32> -> vector<16x32xf32>
    %7 = arith.addf %3, %6 : vector<16x32xf32>
    %c0_6 = arith.constant 0 : index
    %c0_7 = arith.constant 0 : index
    %8 = vector.load %arg8[%c0_6, %c0_7] : memref<16x32xf32, #tpu.memory_space<vmem>>, vector<16x32xf32>
    tpu.vector_store %arg8[%c0_6, %c0_7], %7 {strides = array<i32>} : memref<16x32xf32, #tpu.memory_space<vmem>>, vector<16x32xf32>,
    %c0_i32_8 = arith.constant 0 : i32
    %9 = arith.cmpi eq, %arg2, %c0_i32_8 : i32
    %10 = arith.extui %9 : i1 to i32
    %c0_i32_9 = arith.constant 0 : i32
    %11 = arith.cmpi ne, %10, %c0_i32_9 : i32
    scf.if %11 {
      %c0_10 = arith.constant 0 : index
      %c0_11 = arith.constant 0 : index
      %12 = vector.load %arg8[%c0_10, %c0_11] : memref<16x32xf32, #tpu.memory_space<vmem>>, vector<16x32xf32>
      %c0_12 = arith.constant 0 : index
      %c0_13 = arith.constant 0 : index
      %13 = vector.load %arg5[%c0_12, %c0_13] : memref<1x32xf32, #tpu.memory_space<vmem>>, vector<1x32xf32>
      %14 = vector.broadcast %13 : vector<1x32xf32> to vector<16x32xf32>
      %15 = arith.addf %12, %14 : vector<16x32xf32>
      %c0_14 = arith.constant 0 : index
      %c0_15 = arith.constant 0 : index
      %16 = vector.load %arg6[%c0_14, %c0_15] : memref<16x32xbf16, #tpu.memory_space<vmem>>, vector<16x32xbf16>
      %17 = arith.extf %16 : vector<16x32xbf16> to vector<16x32xf32>
      %18 = arith.addf %15, %17 : vector<16x32xf32>
      %19 = arith.truncf %18 : vector<16x32xf32> to vector<16x32xbf16>
      %c0_16 = arith.constant 0 : index
      %c0_17 = arith.constant 0 : index
      %20 = vector.load %arg7[%c0_16, %c0_17] : memref<16x32xbf16, #tpu.memory_space<vmem>>, vector<16x32xbf16>
      tpu.vector_store %arg7[%c0_16, %c0_17], %19 {strides = array<i32>} : memref<16x32xbf16, #tpu.memory_space<vmem>>, vector<16x32xbf16>,
    } else {
    }
    return
  }
  func.func @transform_0(%arg0: i32, %arg1: i32, %arg2: i32) -> (i32, i32) {
    %c0_i32 = arith.constant 0 : i32
    return %arg0, %arg2 : i32, i32
  }
  func.func @transform_1(%arg0: i32, %arg1: i32, %arg2: i32) -> (i32, i32) {
    %c0_i32 = arith.constant 0 : i32
    return %arg2, %arg1 : i32, i32
  }
  func.func @transform_2(%arg0: i32, %arg1: i32, %arg2: i32) -> (i32, i32) {
    %c0_i32 = arith.constant 0 : i32
    %c0_i32_0 = arith.constant 0 : i32
    return %c0_i32, %arg1 : i32, i32
  }
  func.func @transform_3(%arg0: i32, %arg1: i32, %arg2: i32) -> (i32, i32) {
    %c0_i32 = arith.constant 0 : i32
    return %arg0, %arg1 : i32, i32
  }
  func.func @transform_4(%arg0: i32, %arg1: i32, %arg2: i32) -> (i32, i32) {
    %c0_i32 = arith.constant 0 : i32
    return %arg0, %arg1 : i32, i32
  }
}

module attributes {stable_mosaic.version = 11 : i64} {
  func.func @_ln_linear_kernel(%arg0: i32, %arg1: i32, %arg2: memref<16x32xbf16, #tpu.memory_space<vmem>>, %arg3: memref<1x32xf32, #tpu.memory_space<vmem>>, %arg4: memref<1x32xf32, #tpu.memory_space<vmem>>, %arg5: memref<32x128xbf16, #tpu.memory_space<vmem>>, %arg6: memref<1x128xf32, #tpu.memory_space<vmem>>, %arg7: memref<16x128xbf16, #tpu.memory_space<vmem>>, %arg8: memref<16x32xbf16, #tpu.memory_space<vmem>>) attributes {dimension_semantics = [#tpu.dimension_semantics<parallel>, #tpu.dimension_semantics<arbitrary>], iteration_bounds = array<i64: 1, 1>, scalar_prefetch = 0 : i64, scratch_operands = 1 : i64, tpu.core_type = #tpu.core_type<tc>, window_params = [{transform_indices = @transform_0, window_bounds = array<i64: 16, 32>}, {pipeline_mode = #tpu.pipeline_mode<synchronous>, transform_indices = @transform_1, window_bounds = array<i64: 1, 32>}, {pipeline_mode = #tpu.pipeline_mode<synchronous>, transform_indices = @transform_2, window_bounds = array<i64: 1, 32>}, {transform_indices = @transform_3, window_bounds = array<i64: 32, 128>}, {transform_indices = @transform_4, window_bounds = array<i64: 1, 128>}, {transform_indices = @transform_5, window_bounds = array<i64: 16, 128>}]} {
    %c0_i32 = arith.constant 0 : i32
    %0 = arith.cmpi eq, %arg1, %c0_i32 : i32
    %1 = arith.extui %0 : i1 to i32
    %c0_i32_0 = arith.constant 0 : i32
    %2 = arith.cmpi ne, %1, %c0_i32_0 : i32
    scf.if %2 {
      %c0_10 = arith.constant 0 : index
      %c0_11 = arith.constant 0 : index
      %19 = vector.load %arg2[%c0_10, %c0_11] : memref<16x32xbf16, #tpu.memory_space<vmem>>, vector<16x32xbf16>
      %20 = arith.extf %19 : vector<16x32xbf16> to vector<16x32xf32>
      %cst_12 = arith.constant dense<0.000000e+00> : vector<16xf32>
      %21 = vector.multi_reduction <add>, %20, %cst_12 [1] : vector<16x32xf32> to vector<16xf32>
      %22 = vector.shape_cast %21 : vector<16xf32> to vector<16x1xf32>
      %cst_13 = arith.constant 3.200000e+01 : f32
      %23 = vector.broadcast %cst_13 : f32 to vector<16x1xf32>
      %24 = arith.divf %22, %23 : vector<16x1xf32>
      %25 = vector.broadcast %24 : vector<16x1xf32> to vector<16x32xf32>
      %26 = arith.subf %20, %25 : vector<16x32xf32>
      %27 = arith.mulf %26, %26 : vector<16x32xf32>
      %cst_14 = arith.constant dense<0.000000e+00> : vector<16xf32>
      %28 = vector.multi_reduction <add>, %27, %cst_14 [1] : vector<16x32xf32> to vector<16xf32>
      %29 = vector.shape_cast %28 : vector<16xf32> to vector<16x1xf32>
      %cst_15 = arith.constant 3.200000e+01 : f32
      %30 = vector.broadcast %cst_15 : f32 to vector<16x1xf32>
      %31 = arith.divf %29, %30 : vector<16x1xf32>
      %cst_16 = arith.constant 9.99999974E-6 : f32
      %32 = vector.broadcast %cst_16 : f32 to vector<16x1xf32>
      %33 = arith.addf %31, %32 : vector<16x1xf32>
      %34 = math.rsqrt %33 : vector<16x1xf32>
      %35 = vector.broadcast %34 : vector<16x1xf32> to vector<16x32xf32>
      %36 = arith.mulf %26, %35 : vector<16x32xf32>
      %c0_17 = arith.constant 0 : index
      %c0_18 = arith.constant 0 : index
      %37 = vector.load %arg3[%c0_17, %c0_18] : memref<1x32xf32, #tpu.memory_space<vmem>>, vector<1x32xf32>
      %38 = vector.broadcast %37 : vector<1x32xf32> to vector<16x32xf32>
      %39 = arith.mulf %36, %38 : vector<16x32xf32>
      %c0_19 = arith.constant 0 : index
      %c0_20 = arith.constant 0 : index
      %40 = vector.load %arg4[%c0_19, %c0_20] : memref<1x32xf32, #tpu.memory_space<vmem>>, vector<1x32xf32>
      %41 = vector.broadcast %40 : vector<1x32xf32> to vector<16x32xf32>
      %42 = arith.addf %39, %41 : vector<16x32xf32>
      %43 = arith.truncf %42 : vector<16x32xf32> to vector<16x32xbf16>
      %c0_21 = arith.constant 0 : index
      %c0_22 = arith.constant 0 : index
      %44 = vector.load %arg8[%c0_21, %c0_22] : memref<16x32xbf16, #tpu.memory_space<vmem>>, vector<16x32xbf16>
      tpu.vector_store %arg8[%c0_21, %c0_22], %43 {strides = array<i32>} : memref<16x32xbf16, #tpu.memory_space<vmem>>, vector<16x32xbf16>,
    } else {
    }
    %c0 = arith.constant 0 : index
    %c0_1 = arith.constant 0 : index
    %3 = vector.load %arg8[%c0, %c0_1] : memref<16x32xbf16, #tpu.memory_space<vmem>>, vector<16x32xbf16>
    %c0_2 = arith.constant 0 : index
    %c0_3 = arith.constant 0 : index
    %4 = vector.load %arg5[%c0_2, %c0_3] : memref<32x128xbf16, #tpu.memory_space<vmem>>, vector<32x128xbf16>
    %cst = arith.constant dense<0.000000e+00> : vector<16x128xf32>
    %5 = tpu.matmul %3, %4, %cst {dimension_numbers = #tpu.dot_dimension_numbers<[1], [0], [0], [1], [0, 0, 1, 1], [], []>} : vector<16x32xbf16>, vector<32x128xbf16>, vector<16x128xf32> -> vector<16x128xf32>
    %c0_4 = arith.constant 0 : index
    %c0_5 = arith.constant 0 : index
    %6 = vector.load %arg6[%c0_4, %c0_5] : memref<1x128xf32, #tpu.memory_space<vmem>>, vector<1x128xf32>
    %7 = vector.broadcast %6 : vector<1x128xf32> to vector<16x128xf32>
    %8 = arith.addf %5, %7 : vector<16x128xf32>
    %cst_6 = arith.constant 1.702000e+00 : f32
    %9 = vector.broadcast %cst_6 : f32 to vector<16x128xf32>
    %10 = arith.mulf %9, %8 : vector<16x128xf32>
    %11 = arith.negf %10 : vector<16x128xf32>
    %12 = math.exp %11 : vector<16x128xf32>
    %cst_7 = arith.constant 1.000000e+00 : f32
    %13 = vector.broadcast %cst_7 : f32 to vector<16x128xf32>
    %14 = arith.addf %13, %12 : vector<16x128xf32>
    %15 = arith.divf %13, %14 : vector<16x128xf32>
    %16 = arith.mulf %8, %15 : vector<16x128xf32>
    %17 = arith.truncf %16 : vector<16x128xf32> to vector<16x128xbf16>
    %c0_8 = arith.constant 0 : index
    %c0_9 = arith.constant 0 : index
    %18 = vector.load %arg7[%c0_8, %c0_9] : memref<16x128xbf16, #tpu.memory_space<vmem>>, vector<16x128xbf16>
    tpu.vector_store %arg7[%c0_8, %c0_9], %17 {strides = array<i32>} : memref<16x128xbf16, #tpu.memory_space<vmem>>, vector<16x128xbf16>,
    return
  }
  func.func @transform_0(%arg0: i32, %arg1: i32) -> (i32, i32) {
    %c0_i32 = arith.constant 0 : i32
    %c0_i32_0 = arith.constant 0 : i32
    return %arg0, %c0_i32 : i32, i32
  }
  func.func @transform_1(%arg0: i32, %arg1: i32) -> (i32, i32) {
    %c0_i32 = arith.constant 0 : i32
    %c0_i32_0 = arith.constant 0 : i32
    %c0_i32_1 = arith.constant 0 : i32
    return %c0_i32, %c0_i32_0 : i32, i32
  }
  func.func @transform_2(%arg0: i32, %arg1: i32) -> (i32, i32) {
    %c0_i32 = arith.constant 0 : i32
    %c0_i32_0 = arith.constant 0 : i32
    %c0_i32_1 = arith.constant 0 : i32
    return %c0_i32, %c0_i32_0 : i32, i32
  }
  func.func @transform_3(%arg0: i32, %arg1: i32) -> (i32, i32) {
    %c0_i32 = arith.constant 0 : i32
    %c0_i32_0 = arith.constant 0 : i32
    return %c0_i32, %arg1 : i32, i32
  }
  func.func @transform_4(%arg0: i32, %arg1: i32) -> (i32, i32) {
    %c0_i32 = arith.constant 0 : i32
    %c0_i32_0 = arith.constant 0 : i32
    return %c0_i32, %arg1 : i32, i32
  }
  func.func @transform_5(%arg0: i32, %arg1: i32) -> (i32, i32) {
    %c0_i32 = arith.constant 0 : i32
    return %arg0, %arg1 : i32, i32
  }
}

module attributes {stable_mosaic.version = 11 : i64} {
  func.func @_linear_kernel(%arg0: i32, %arg1: i32, %arg2: i32, %arg3: memref<16x128xbf16, #tpu.memory_space<vmem>>, %arg4: memref<128x32xbf16, #tpu.memory_space<vmem>>, %arg5: memref<1x32xf32, #tpu.memory_space<vmem>>, %arg6: memref<16x32xbf16, #tpu.memory_space<vmem>>, %arg7: memref<16x32xbf16, #tpu.memory_space<vmem>>, %arg8: memref<16x32xf32, #tpu.memory_space<vmem>>) attributes {dimension_semantics = [#tpu.dimension_semantics<parallel>, #tpu.dimension_semantics<parallel>, #tpu.dimension_semantics<arbitrary>], iteration_bounds = array<i64: 1, 1, 1>, scalar_prefetch = 0 : i64, scratch_operands = 1 : i64, tpu.core_type = #tpu.core_type<tc>, window_params = [{transform_indices = @transform_0, window_bounds = array<i64: 16, 128>}, {transform_indices = @transform_1, window_bounds = array<i64: 128, 32>}, {transform_indices = @transform_2, window_bounds = array<i64: 1, 32>}, {transform_indices = @transform_3, window_bounds = array<i64: 16, 32>}, {transform_indices = @transform_4, window_bounds = array<i64: 16, 32>}]} {
    %c0_i32 = arith.constant 0 : i32
    %0 = arith.cmpi eq, %arg2, %c0_i32 : i32
    %1 = arith.extui %0 : i1 to i32
    %c0_i32_0 = arith.constant 0 : i32
    %2 = arith.cmpi ne, %1, %c0_i32_0 : i32
    scf.if %2 {
      %cst_10 = arith.constant 0.000000e+00 : f32
      %12 = vector.broadcast %cst_10 : f32 to vector<16x32xf32>
      %c0_11 = arith.constant 0 : index
      %c0_12 = arith.constant 0 : index
      %13 = vector.load %arg8[%c0_11, %c0_12] : memref<16x32xf32, #tpu.memory_space<vmem>>, vector<16x32xf32>
      tpu.vector_store %arg8[%c0_11, %c0_12], %12 {strides = array<i32>} : memref<16x32xf32, #tpu.memory_space<vmem>>, vector<16x32xf32>,
    } else {
    }
    %c0 = arith.constant 0 : index
    %c0_1 = arith.constant 0 : index
    %3 = vector.load %arg8[%c0, %c0_1] : memref<16x32xf32, #tpu.memory_space<vmem>>, vector<16x32xf32>
    %c0_2 = arith.constant 0 : index
    %c0_3 = arith.constant 0 : index
    %4 = vector.load %arg3[%c0_2, %c0_3] : memref<16x128xbf16, #tpu.memory_space<vmem>>, vector<16x128xbf16>
    %c0_4 = arith.constant 0 : index
    %c0_5 = arith.constant 0 : index
    %5 = vector.load %arg4[%c0_4, %c0_5] : memref<128x32xbf16, #tpu.memory_space<vmem>>, vector<128x32xbf16>
    %cst = arith.constant dense<0.000000e+00> : vector<16x32xf32>
    %6 = tpu.matmul %4, %5, %cst {dimension_numbers = #tpu.dot_dimension_numbers<[1], [0], [0], [1], [0, 0, 1, 1], [], []>} : vector<16x128xbf16>, vector<128x32xbf16>, vector<16x32xf32> -> vector<16x32xf32>
    %7 = arith.addf %3, %6 : vector<16x32xf32>
    %c0_6 = arith.constant 0 : index
    %c0_7 = arith.constant 0 : index
    %8 = vector.load %arg8[%c0_6, %c0_7] : memref<16x32xf32, #tpu.memory_space<vmem>>, vector<16x32xf32>
    tpu.vector_store %arg8[%c0_6, %c0_7], %7 {strides = array<i32>} : memref<16x32xf32, #tpu.memory_space<vmem>>, vector<16x32xf32>,
    %c0_i32_8 = arith.constant 0 : i32
    %9 = arith.cmpi eq, %arg2, %c0_i32_8 : i32
    %10 = arith.extui %9 : i1 to i32
    %c0_i32_9 = arith.constant 0 : i32
    %11 = arith.cmpi ne, %10, %c0_i32_9 : i32
    scf.if %11 {
      %c0_10 = arith.constant 0 : index
      %c0_11 = arith.constant 0 : index
      %12 = vector.load %arg8[%c0_10, %c0_11] : memref<16x32xf32, #tpu.memory_space<vmem>>, vector<16x32xf32>
      %c0_12 = arith.constant 0 : index
      %c0_13 = arith.constant 0 : index
      %13 = vector.load %arg5[%c0_12, %c0_13] : memref<1x32xf32, #tpu.memory_space<vmem>>, vector<1x32xf32>
      %14 = vector.broadcast %13 : vector<1x32xf32> to vector<16x32xf32>
      %15 = arith.addf %12, %14 : vector<16x32xf32>
      %c0_14 = arith.constant 0 : index
      %c0_15 = arith.constant 0 : index
      %16 = vector.load %arg6[%c0_14, %c0_15] : memref<16x32xbf16, #tpu.memory_space<vmem>>, vector<16x32xbf16>
      %17 = arith.extf %16 : vector<16x32xbf16> to vector<16x32xf32>
      %18 = arith.addf %15, %17 : vector<16x32xf32>
      %19 = arith.truncf %18 : vector<16x32xf32> to vector<16x32xbf16>
      %c0_16 = arith.constant 0 : index
      %c0_17 = arith.constant 0 : index
      %20 = vector.load %arg7[%c0_16, %c0_17] : memref<16x32xbf16, #tpu.memory_space<vmem>>, vector<16x32xbf16>
      tpu.vector_store %arg7[%c0_16, %c0_17], %19 {strides = array<i32>} : memref<16x32xbf16, #tpu.memory_space<vmem>>, vector<16x32xbf16>,
    } else {
    }
    return
  }
  func.func @transform_0(%arg0: i32, %arg1: i32, %arg2: i32) -> (i32, i32) {
    %c0_i32 = arith.constant 0 : i32
    return %arg0, %arg2 : i32, i32
  }
  func.func @transform_1(%arg0: i32, %arg1: i32, %arg2: i32) -> (i32, i32) {
    %c0_i32 = arith.constant 0 : i32
    return %arg2, %arg1 : i32, i32
  }
  func.func @transform_2(%arg0: i32, %arg1: i32, %arg2: i32) -> (i32, i32) {
    %c0_i32 = arith.constant 0 : i32
    %c0_i32_0 = arith.constant 0 : i32
    return %c0_i32, %arg1 : i32, i32
  }
  func.func @transform_3(%arg0: i32, %arg1: i32, %arg2: i32) -> (i32, i32) {
    %c0_i32 = arith.constant 0 : i32
    return %arg0, %arg1 : i32, i32
  }
  func.func @transform_4(%arg0: i32, %arg1: i32, %arg2: i32) -> (i32, i32) {
    %c0_i32 = arith.constant 0 : i32
    return %arg0, %arg1 : i32, i32
  }
}

module attributes {stable_mosaic.version = 11 : i64} {
  func.func @_ln_linear_kernel(%arg0: i32, %arg1: i32, %arg2: memref<2x32xbf16, #tpu.memory_space<vmem>>, %arg3: memref<1x32xf32, #tpu.memory_space<vmem>>, %arg4: memref<1x32xf32, #tpu.memory_space<vmem>>, %arg5: memref<32x32xbf16, #tpu.memory_space<vmem>>, %arg6: memref<2x32xbf16, #tpu.memory_space<vmem>>, %arg7: memref<2x32xbf16, #tpu.memory_space<vmem>>) attributes {dimension_semantics = [#tpu.dimension_semantics<parallel>, #tpu.dimension_semantics<arbitrary>], iteration_bounds = array<i64: 1, 1>, scalar_prefetch = 0 : i64, scratch_operands = 1 : i64, tpu.core_type = #tpu.core_type<tc>, window_params = [{transform_indices = @transform_0, window_bounds = array<i64: 2, 32>}, {pipeline_mode = #tpu.pipeline_mode<synchronous>, transform_indices = @transform_1, window_bounds = array<i64: 1, 32>}, {pipeline_mode = #tpu.pipeline_mode<synchronous>, transform_indices = @transform_2, window_bounds = array<i64: 1, 32>}, {transform_indices = @transform_3, window_bounds = array<i64: 32, 32>}, {transform_indices = @transform_4, window_bounds = array<i64: 2, 32>}]} {
    %c0_i32 = arith.constant 0 : i32
    %0 = arith.cmpi eq, %arg1, %c0_i32 : i32
    %1 = arith.extui %0 : i1 to i32
    %c0_i32_0 = arith.constant 0 : i32
    %2 = arith.cmpi ne, %1, %c0_i32_0 : i32
    scf.if %2 {
      %c0_6 = arith.constant 0 : index
      %c0_7 = arith.constant 0 : index
      %8 = vector.load %arg2[%c0_6, %c0_7] : memref<2x32xbf16, #tpu.memory_space<vmem>>, vector<2x32xbf16>
      %9 = arith.extf %8 : vector<2x32xbf16> to vector<2x32xf32>
      %cst_8 = arith.constant dense<0.000000e+00> : vector<2xf32>
      %10 = vector.multi_reduction <add>, %9, %cst_8 [1] : vector<2x32xf32> to vector<2xf32>
      %11 = vector.shape_cast %10 : vector<2xf32> to vector<2x1xf32>
      %cst_9 = arith.constant 3.200000e+01 : f32
      %12 = vector.broadcast %cst_9 : f32 to vector<2x1xf32>
      %13 = arith.divf %11, %12 : vector<2x1xf32>
      %14 = vector.broadcast %13 : vector<2x1xf32> to vector<2x32xf32>
      %15 = arith.subf %9, %14 : vector<2x32xf32>
      %16 = arith.mulf %15, %15 : vector<2x32xf32>
      %cst_10 = arith.constant dense<0.000000e+00> : vector<2xf32>
      %17 = vector.multi_reduction <add>, %16, %cst_10 [1] : vector<2x32xf32> to vector<2xf32>
      %18 = vector.shape_cast %17 : vector<2xf32> to vector<2x1xf32>
      %cst_11 = arith.constant 3.200000e+01 : f32
      %19 = vector.broadcast %cst_11 : f32 to vector<2x1xf32>
      %20 = arith.divf %18, %19 : vector<2x1xf32>
      %cst_12 = arith.constant 9.99999974E-6 : f32
      %21 = vector.broadcast %cst_12 : f32 to vector<2x1xf32>
      %22 = arith.addf %20, %21 : vector<2x1xf32>
      %23 = math.rsqrt %22 : vector<2x1xf32>
      %24 = vector.broadcast %23 : vector<2x1xf32> to vector<2x32xf32>
      %25 = arith.mulf %15, %24 : vector<2x32xf32>
      %c0_13 = arith.constant 0 : index
      %c0_14 = arith.constant 0 : index
      %26 = vector.load %arg3[%c0_13, %c0_14] : memref<1x32xf32, #tpu.memory_space<vmem>>, vector<1x32xf32>
      %27 = vector.broadcast %26 : vector<1x32xf32> to vector<2x32xf32>
      %28 = arith.mulf %25, %27 : vector<2x32xf32>
      %c0_15 = arith.constant 0 : index
      %c0_16 = arith.constant 0 : index
      %29 = vector.load %arg4[%c0_15, %c0_16] : memref<1x32xf32, #tpu.memory_space<vmem>>, vector<1x32xf32>
      %30 = vector.broadcast %29 : vector<1x32xf32> to vector<2x32xf32>
      %31 = arith.addf %28, %30 : vector<2x32xf32>
      %32 = arith.truncf %31 : vector<2x32xf32> to vector<2x32xbf16>
      %c0_17 = arith.constant 0 : index
      %c0_18 = arith.constant 0 : index
      %33 = vector.load %arg7[%c0_17, %c0_18] : memref<2x32xbf16, #tpu.memory_space<vmem>>, vector<2x32xbf16>
      tpu.vector_store %arg7[%c0_17, %c0_18], %32 {strides = array<i32>} : memref<2x32xbf16, #tpu.memory_space<vmem>>, vector<2x32xbf16>,
    } else {
    }
    %c0 = arith.constant 0 : index
    %c0_1 = arith.constant 0 : index
    %3 = vector.load %arg7[%c0, %c0_1] : memref<2x32xbf16, #tpu.memory_space<vmem>>, vector<2x32xbf16>
    %c0_2 = arith.constant 0 : index
    %c0_3 = arith.constant 0 : index
    %4 = vector.load %arg5[%c0_2, %c0_3] : memref<32x32xbf16, #tpu.memory_space<vmem>>, vector<32x32xbf16>
    %cst = arith.constant dense<0.000000e+00> : vector<2x32xf32>
    %5 = tpu.matmul %3, %4, %cst {dimension_numbers = #tpu.dot_dimension_numbers<[1], [0], [0], [1], [0, 0, 1, 1], [], []>} : vector<2x32xbf16>, vector<32x32xbf16>, vector<2x32xf32> -> vector<2x32xf32>
    %6 = arith.truncf %5 : vector<2x32xf32> to vector<2x32xbf16>
    %c0_4 = arith.constant 0 : index
    %c0_5 = arith.constant 0 : index
    %7 = vector.load %arg6[%c0_4, %c0_5] : memref<2x32xbf16, #tpu.memory_space<vmem>>, vector<2x32xbf16>
    tpu.vector_store %arg6[%c0_4, %c0_5], %6 {strides = array<i32>} : memref<2x32xbf16, #tpu.memory_space<vmem>>, vector<2x32xbf16>,
    return
  }
  func.func @transform_0(%arg0: i32, %arg1: i32) -> (i32, i32) {
    %c0_i32 = arith.constant 0 : i32
    %c0_i32_0 = arith.constant 0 : i32
    return %arg0, %c0_i32 : i32, i32
  }
  func.func @transform_1(%arg0: i32, %arg1: i32) -> (i32, i32) {
    %c0_i32 = arith.constant 0 : i32
    %c0_i32_0 = arith.constant 0 : i32
    %c0_i32_1 = arith.constant 0 : i32
    return %c0_i32, %c0_i32_0 : i32, i32
  }
  func.func @transform_2(%arg0: i32, %arg1: i32) -> (i32, i32) {
    %c0_i32 = arith.constant 0 : i32
    %c0_i32_0 = arith.constant 0 : i32
    %c0_i32_1 = arith.constant 0 : i32
    return %c0_i32, %c0_i32_0 : i32, i32
  }
  func.func @transform_3(%arg0: i32, %arg1: i32) -> (i32, i32) {
    %c0_i32 = arith.constant 0 : i32
    %c0_i32_0 = arith.constant 0 : i32
    return %c0_i32, %arg1 : i32, i32
  }
  func.func @transform_4(%arg0: i32, %arg1: i32) -> (i32, i32) {
    %c0_i32 = arith.constant 0 : i32
    return %arg0, %arg1 : i32, i32
  }
}

module attributes {stable_mosaic.version = 11 : i64} {
  func.func @_linear_kernel(%arg0: i32, %arg1: i32, %arg2: i32, %arg3: memref<8x192xbf16, #tpu.memory_space<vmem>>, %arg4: memref<192x64xbf16, #tpu.memory_space<vmem>>, %arg5: memref<8x64xbf16, #tpu.memory_space<vmem>>, %arg6: memref<8x64xf32, #tpu.memory_space<vmem>>) attributes {dimension_semantics = [#tpu.dimension_semantics<parallel>, #tpu.dimension_semantics<parallel>, #tpu.dimension_semantics<arbitrary>], iteration_bounds = array<i64: 1, 1, 1>, scalar_prefetch = 0 : i64, scratch_operands = 1 : i64, tpu.core_type = #tpu.core_type<tc>, window_params = [{transform_indices = @transform_0, window_bounds = array<i64: 8, 192>}, {transform_indices = @transform_1, window_bounds = array<i64: 192, 64>}, {transform_indices = @transform_2, window_bounds = array<i64: 8, 64>}]} {
    %c0_i32 = arith.constant 0 : i32
    %0 = arith.cmpi eq, %arg2, %c0_i32 : i32
    %1 = arith.extui %0 : i1 to i32
    %c0_i32_0 = arith.constant 0 : i32
    %2 = arith.cmpi ne, %1, %c0_i32_0 : i32
    scf.if %2 {
      %cst_10 = arith.constant 0.000000e+00 : f32
      %12 = vector.broadcast %cst_10 : f32 to vector<8x64xf32>
      %c0_11 = arith.constant 0 : index
      %c0_12 = arith.constant 0 : index
      %13 = vector.load %arg6[%c0_11, %c0_12] : memref<8x64xf32, #tpu.memory_space<vmem>>, vector<8x64xf32>
      tpu.vector_store %arg6[%c0_11, %c0_12], %12 {strides = array<i32>} : memref<8x64xf32, #tpu.memory_space<vmem>>, vector<8x64xf32>,
    } else {
    }
    %c0 = arith.constant 0 : index
    %c0_1 = arith.constant 0 : index
    %3 = vector.load %arg6[%c0, %c0_1] : memref<8x64xf32, #tpu.memory_space<vmem>>, vector<8x64xf32>
    %c0_2 = arith.constant 0 : index
    %c0_3 = arith.constant 0 : index
    %4 = vector.load %arg3[%c0_2, %c0_3] : memref<8x192xbf16, #tpu.memory_space<vmem>>, vector<8x192xbf16>
    %c0_4 = arith.constant 0 : index
    %c0_5 = arith.constant 0 : index
    %5 = vector.load %arg4[%c0_4, %c0_5] : memref<192x64xbf16, #tpu.memory_space<vmem>>, vector<192x64xbf16>
    %cst = arith.constant dense<0.000000e+00> : vector<8x64xf32>
    %6 = tpu.matmul %4, %5, %cst {dimension_numbers = #tpu.dot_dimension_numbers<[1], [0], [0], [1], [0, 0, 1, 1], [], []>} : vector<8x192xbf16>, vector<192x64xbf16>, vector<8x64xf32> -> vector<8x64xf32>
    %7 = arith.addf %3, %6 : vector<8x64xf32>
    %c0_6 = arith.constant 0 : index
    %c0_7 = arith.constant 0 : index
    %8 = vector.load %arg6[%c0_6, %c0_7] : memref<8x64xf32, #tpu.memory_space<vmem>>, vector<8x64xf32>
    tpu.vector_store %arg6[%c0_6, %c0_7], %7 {strides = array<i32>} : memref<8x64xf32, #tpu.memory_space<vmem>>, vector<8x64xf32>,
    %c0_i32_8 = arith.constant 0 : i32
    %9 = arith.cmpi eq, %arg2, %c0_i32_8 : i32
    %10 = arith.extui %9 : i1 to i32
    %c0_i32_9 = arith.constant 0 : i32
    %11 = arith.cmpi ne, %10, %c0_i32_9 : i32
    scf.if %11 {
      %c0_10 = arith.constant 0 : index
      %c0_11 = arith.constant 0 : index
      %12 = vector.load %arg6[%c0_10, %c0_11] : memref<8x64xf32, #tpu.memory_space<vmem>>, vector<8x64xf32>
      %13 = arith.truncf %12 : vector<8x64xf32> to vector<8x64xbf16>
      %c0_12 = arith.constant 0 : index
      %c0_13 = arith.constant 0 : index
      %14 = vector.load %arg5[%c0_12, %c0_13] : memref<8x64xbf16, #tpu.memory_space<vmem>>, vector<8x64xbf16>
      tpu.vector_store %arg5[%c0_12, %c0_13], %13 {strides = array<i32>} : memref<8x64xbf16, #tpu.memory_space<vmem>>, vector<8x64xbf16>,
    } else {
    }
    return
  }
  func.func @transform_0(%arg0: i32, %arg1: i32, %arg2: i32) -> (i32, i32) {
    %c0_i32 = arith.constant 0 : i32
    return %arg0, %arg2 : i32, i32
  }
  func.func @transform_1(%arg0: i32, %arg1: i32, %arg2: i32) -> (i32, i32) {
    %c0_i32 = arith.constant 0 : i32
    return %arg2, %arg1 : i32, i32
  }
  func.func @transform_2(%arg0: i32, %arg1: i32, %arg2: i32) -> (i32, i32) {
    %c0_i32 = arith.constant 0 : i32
    return %arg0, %arg1 : i32, i32
  }
}

module attributes {stable_mosaic.version = 11 : i64} {
  func.func @_ln_linear_kernel(%arg0: i32, %arg1: i32, %arg2: memref<16x64xbf16, #tpu.memory_space<vmem>>, %arg3: memref<1x64xf32, #tpu.memory_space<vmem>>, %arg4: memref<1x64xf32, #tpu.memory_space<vmem>>, %arg5: memref<64x192xbf16, #tpu.memory_space<vmem>>, %arg6: memref<1x192xf32, #tpu.memory_space<vmem>>, %arg7: memref<16x192xbf16, #tpu.memory_space<vmem>>, %arg8: memref<16x64xbf16, #tpu.memory_space<vmem>>) attributes {dimension_semantics = [#tpu.dimension_semantics<parallel>, #tpu.dimension_semantics<arbitrary>], iteration_bounds = array<i64: 1, 1>, scalar_prefetch = 0 : i64, scratch_operands = 1 : i64, tpu.core_type = #tpu.core_type<tc>, window_params = [{transform_indices = @transform_0, window_bounds = array<i64: 16, 64>}, {pipeline_mode = #tpu.pipeline_mode<synchronous>, transform_indices = @transform_1, window_bounds = array<i64: 1, 64>}, {pipeline_mode = #tpu.pipeline_mode<synchronous>, transform_indices = @transform_2, window_bounds = array<i64: 1, 64>}, {transform_indices = @transform_3, window_bounds = array<i64: 64, 192>}, {transform_indices = @transform_4, window_bounds = array<i64: 1, 192>}, {transform_indices = @transform_5, window_bounds = array<i64: 16, 192>}]} {
    %c0_i32 = arith.constant 0 : i32
    %0 = arith.cmpi eq, %arg1, %c0_i32 : i32
    %1 = arith.extui %0 : i1 to i32
    %c0_i32_0 = arith.constant 0 : i32
    %2 = arith.cmpi ne, %1, %c0_i32_0 : i32
    scf.if %2 {
      %c0_8 = arith.constant 0 : index
      %c0_9 = arith.constant 0 : index
      %11 = vector.load %arg2[%c0_8, %c0_9] : memref<16x64xbf16, #tpu.memory_space<vmem>>, vector<16x64xbf16>
      %12 = arith.extf %11 : vector<16x64xbf16> to vector<16x64xf32>
      %cst_10 = arith.constant dense<0.000000e+00> : vector<16xf32>
      %13 = vector.multi_reduction <add>, %12, %cst_10 [1] : vector<16x64xf32> to vector<16xf32>
      %14 = vector.shape_cast %13 : vector<16xf32> to vector<16x1xf32>
      %cst_11 = arith.constant 6.400000e+01 : f32
      %15 = vector.broadcast %cst_11 : f32 to vector<16x1xf32>
      %16 = arith.divf %14, %15 : vector<16x1xf32>
      %17 = vector.broadcast %16 : vector<16x1xf32> to vector<16x64xf32>
      %18 = arith.subf %12, %17 : vector<16x64xf32>
      %19 = arith.mulf %18, %18 : vector<16x64xf32>
      %cst_12 = arith.constant dense<0.000000e+00> : vector<16xf32>
      %20 = vector.multi_reduction <add>, %19, %cst_12 [1] : vector<16x64xf32> to vector<16xf32>
      %21 = vector.shape_cast %20 : vector<16xf32> to vector<16x1xf32>
      %cst_13 = arith.constant 6.400000e+01 : f32
      %22 = vector.broadcast %cst_13 : f32 to vector<16x1xf32>
      %23 = arith.divf %21, %22 : vector<16x1xf32>
      %cst_14 = arith.constant 9.99999974E-6 : f32
      %24 = vector.broadcast %cst_14 : f32 to vector<16x1xf32>
      %25 = arith.addf %23, %24 : vector<16x1xf32>
      %26 = math.rsqrt %25 : vector<16x1xf32>
      %27 = vector.broadcast %26 : vector<16x1xf32> to vector<16x64xf32>
      %28 = arith.mulf %18, %27 : vector<16x64xf32>
      %c0_15 = arith.constant 0 : index
      %c0_16 = arith.constant 0 : index
      %29 = vector.load %arg3[%c0_15, %c0_16] : memref<1x64xf32, #tpu.memory_space<vmem>>, vector<1x64xf32>
      %30 = vector.broadcast %29 : vector<1x64xf32> to vector<16x64xf32>
      %31 = arith.mulf %28, %30 : vector<16x64xf32>
      %c0_17 = arith.constant 0 : index
      %c0_18 = arith.constant 0 : index
      %32 = vector.load %arg4[%c0_17, %c0_18] : memref<1x64xf32, #tpu.memory_space<vmem>>, vector<1x64xf32>
      %33 = vector.broadcast %32 : vector<1x64xf32> to vector<16x64xf32>
      %34 = arith.addf %31, %33 : vector<16x64xf32>
      %35 = arith.truncf %34 : vector<16x64xf32> to vector<16x64xbf16>
      %c0_19 = arith.constant 0 : index
      %c0_20 = arith.constant 0 : index
      %36 = vector.load %arg8[%c0_19, %c0_20] : memref<16x64xbf16, #tpu.memory_space<vmem>>, vector<16x64xbf16>
      tpu.vector_store %arg8[%c0_19, %c0_20], %35 {strides = array<i32>} : memref<16x64xbf16, #tpu.memory_space<vmem>>, vector<16x64xbf16>,
    } else {
    }
    %c0 = arith.constant 0 : index
    %c0_1 = arith.constant 0 : index
    %3 = vector.load %arg8[%c0, %c0_1] : memref<16x64xbf16, #tpu.memory_space<vmem>>, vector<16x64xbf16>
    %c0_2 = arith.constant 0 : index
    %c0_3 = arith.constant 0 : index
    %4 = vector.load %arg5[%c0_2, %c0_3] : memref<64x192xbf16, #tpu.memory_space<vmem>>, vector<64x192xbf16>
    %cst = arith.constant dense<0.000000e+00> : vector<16x192xf32>
    %5 = tpu.matmul %3, %4, %cst {dimension_numbers = #tpu.dot_dimension_numbers<[1], [0], [0], [1], [0, 0, 1, 1], [], []>} : vector<16x64xbf16>, vector<64x192xbf16>, vector<16x192xf32> -> vector<16x192xf32>
    %c0_4 = arith.constant 0 : index
    %c0_5 = arith.constant 0 : index
    %6 = vector.load %arg6[%c0_4, %c0_5] : memref<1x192xf32, #tpu.memory_space<vmem>>, vector<1x192xf32>
    %7 = vector.broadcast %6 : vector<1x192xf32> to vector<16x192xf32>
    %8 = arith.addf %5, %7 : vector<16x192xf32>
    %9 = arith.truncf %8 : vector<16x192xf32> to vector<16x192xbf16>
    %c0_6 = arith.constant 0 : index
    %c0_7 = arith.constant 0 : index
    %10 = vector.load %arg7[%c0_6, %c0_7] : memref<16x192xbf16, #tpu.memory_space<vmem>>, vector<16x192xbf16>
    tpu.vector_store %arg7[%c0_6, %c0_7], %9 {strides = array<i32>} : memref<16x192xbf16, #tpu.memory_space<vmem>>, vector<16x192xbf16>,
    return
  }
  func.func @transform_0(%arg0: i32, %arg1: i32) -> (i32, i32) {
    %c0_i32 = arith.constant 0 : i32
    %c0_i32_0 = arith.constant 0 : i32
    return %arg0, %c0_i32 : i32, i32
  }
  func.func @transform_1(%arg0: i32, %arg1: i32) -> (i32, i32) {
    %c0_i32 = arith.constant 0 : i32
    %c0_i32_0 = arith.constant 0 : i32
    %c0_i32_1 = arith.constant 0 : i32
    return %c0_i32, %c0_i32_0 : i32, i32
  }
  func.func @transform_2(%arg0: i32, %arg1: i32) -> (i32, i32) {
    %c0_i32 = arith.constant 0 : i32
    %c0_i32_0 = arith.constant 0 : i32
    %c0_i32_1 = arith.constant 0 : i32
    return %c0_i32, %c0_i32_0 : i32, i32
  }
  func.func @transform_3(%arg0: i32, %arg1: i32) -> (i32, i32) {
    %c0_i32 = arith.constant 0 : i32
    %c0_i32_0 = arith.constant 0 : i32
    return %c0_i32, %arg1 : i32, i32
  }
  func.func @transform_4(%arg0: i32, %arg1: i32) -> (i32, i32) {
    %c0_i32 = arith.constant 0 : i32
    %c0_i32_0 = arith.constant 0 : i32
    return %c0_i32, %arg1 : i32, i32
  }
  func.func @transform_5(%arg0: i32, %arg1: i32) -> (i32, i32) {
    %c0_i32 = arith.constant 0 : i32
    return %arg0, %arg1 : i32, i32
  }
}

module attributes {stable_mosaic.version = 11 : i64} {
  func.func @_layernorm_kernel(%arg0: i32, %arg1: memref<16x64xbf16, #tpu.memory_space<vmem>>, %arg2: memref<1x64xf32, #tpu.memory_space<vmem>>, %arg3: memref<1x64xf32, #tpu.memory_space<vmem>>, %arg4: memref<16x64xbf16, #tpu.memory_space<vmem>>) attributes {dimension_semantics = [#tpu.dimension_semantics<parallel>], iteration_bounds = array<i64: 1>, scalar_prefetch = 0 : i64, scratch_operands = 0 : i64, tpu.core_type = #tpu.core_type<tc>, window_params = [{transform_indices = @transform_0, window_bounds = array<i64: 16, 64>}, {pipeline_mode = #tpu.pipeline_mode<synchronous>, transform_indices = @transform_1, window_bounds = array<i64: 1, 64>}, {pipeline_mode = #tpu.pipeline_mode<synchronous>, transform_indices = @transform_2, window_bounds = array<i64: 1, 64>}, {transform_indices = @transform_3, window_bounds = array<i64: 16, 64>}]} {
    %c0 = arith.constant 0 : index
    %c0_0 = arith.constant 0 : index
    %0 = vector.load %arg1[%c0, %c0_0] : memref<16x64xbf16, #tpu.memory_space<vmem>>, vector<16x64xbf16>
    %1 = arith.extf %0 : vector<16x64xbf16> to vector<16x64xf32>
    %cst = arith.constant dense<0.000000e+00> : vector<16xf32>
    %2 = vector.multi_reduction <add>, %1, %cst [1] : vector<16x64xf32> to vector<16xf32>
    %3 = vector.shape_cast %2 : vector<16xf32> to vector<16x1xf32>
    %cst_1 = arith.constant 6.400000e+01 : f32
    %4 = vector.broadcast %cst_1 : f32 to vector<16x1xf32>
    %5 = arith.divf %3, %4 : vector<16x1xf32>
    %6 = vector.broadcast %5 : vector<16x1xf32> to vector<16x64xf32>
    %7 = arith.subf %1, %6 : vector<16x64xf32>
    %8 = arith.mulf %7, %7 : vector<16x64xf32>
    %cst_2 = arith.constant dense<0.000000e+00> : vector<16xf32>
    %9 = vector.multi_reduction <add>, %8, %cst_2 [1] : vector<16x64xf32> to vector<16xf32>
    %10 = vector.shape_cast %9 : vector<16xf32> to vector<16x1xf32>
    %cst_3 = arith.constant 6.400000e+01 : f32
    %11 = vector.broadcast %cst_3 : f32 to vector<16x1xf32>
    %12 = arith.divf %10, %11 : vector<16x1xf32>
    %cst_4 = arith.constant 9.99999974E-6 : f32
    %13 = vector.broadcast %cst_4 : f32 to vector<16x1xf32>
    %14 = arith.addf %12, %13 : vector<16x1xf32>
    %15 = math.rsqrt %14 : vector<16x1xf32>
    %16 = vector.broadcast %15 : vector<16x1xf32> to vector<16x64xf32>
    %17 = arith.mulf %7, %16 : vector<16x64xf32>
    %c0_5 = arith.constant 0 : index
    %c0_6 = arith.constant 0 : index
    %18 = vector.load %arg2[%c0_5, %c0_6] : memref<1x64xf32, #tpu.memory_space<vmem>>, vector<1x64xf32>
    %19 = vector.broadcast %18 : vector<1x64xf32> to vector<16x64xf32>
    %20 = arith.mulf %17, %19 : vector<16x64xf32>
    %c0_7 = arith.constant 0 : index
    %c0_8 = arith.constant 0 : index
    %21 = vector.load %arg3[%c0_7, %c0_8] : memref<1x64xf32, #tpu.memory_space<vmem>>, vector<1x64xf32>
    %22 = vector.broadcast %21 : vector<1x64xf32> to vector<16x64xf32>
    %23 = arith.addf %20, %22 : vector<16x64xf32>
    %24 = arith.truncf %23 : vector<16x64xf32> to vector<16x64xbf16>
    %c0_9 = arith.constant 0 : index
    %c0_10 = arith.constant 0 : index
    %25 = vector.load %arg4[%c0_9, %c0_10] : memref<16x64xbf16, #tpu.memory_space<vmem>>, vector<16x64xbf16>
    tpu.vector_store %arg4[%c0_9, %c0_10], %24 {strides = array<i32>} : memref<16x64xbf16, #tpu.memory_space<vmem>>, vector<16x64xbf16>,
    return
  }
  func.func @transform_0(%arg0: i32) -> (i32, i32) {
    %c0_i32 = arith.constant 0 : i32
    %c0_i32_0 = arith.constant 0 : i32
    return %arg0, %c0_i32 : i32, i32
  }
  func.func @transform_1(%arg0: i32) -> (i32, i32) {
    %c0_i32 = arith.constant 0 : i32
    %c0_i32_0 = arith.constant 0 : i32
    %c0_i32_1 = arith.constant 0 : i32
    return %c0_i32, %c0_i32_0 : i32, i32
  }
  func.func @transform_2(%arg0: i32) -> (i32, i32) {
    %c0_i32 = arith.constant 0 : i32
    %c0_i32_0 = arith.constant 0 : i32
    %c0_i32_1 = arith.constant 0 : i32
    return %c0_i32, %c0_i32_0 : i32, i32
  }
  func.func @transform_3(%arg0: i32) -> (i32, i32) {
    %c0_i32 = arith.constant 0 : i32
    %c0_i32_0 = arith.constant 0 : i32
    return %arg0, %c0_i32 : i32, i32
  }
}

module attributes {stable_mosaic.version = 11 : i64} {
  func.func @_attention_kernel(%arg0: i32, %arg1: i32, %arg2: memref<1x3x1x8x64xbf16, #tpu.memory_space<vmem>>, %arg3: memref<1x1x8x64xbf16, #tpu.memory_space<vmem>>) attributes {dimension_semantics = [#tpu.dimension_semantics<parallel>, #tpu.dimension_semantics<parallel>], iteration_bounds = array<i64: 2, 1>, scalar_prefetch = 0 : i64, scratch_operands = 0 : i64, tpu.core_type = #tpu.core_type<tc>, window_params = [{transform_indices = @transform_0, window_bounds = array<i64: 1, 3, 1, 8, 64>}, {transform_indices = @transform_1, window_bounds = array<i64: 1, 1, 8, 64>}]} {
    %c0 = arith.constant 0 : index
    %c0_0 = arith.constant 0 : index
    %c0_1 = arith.constant 0 : index
    %c0_2 = arith.constant 0 : index
    %c0_3 = arith.constant 0 : index
    %0 = vector.load %arg2[%c0, %c0_0, %c0_1, %c0_2, %c0_3] : memref<1x3x1x8x64xbf16, #tpu.memory_space<vmem>>, vector<1x1x1x8x64xbf16>
    %1 = vector.shape_cast %0 : vector<1x1x1x8x64xbf16> to vector<8x64xbf16>
    %c0_4 = arith.constant 0 : index
    %c1 = arith.constant 1 : index
    %c0_5 = arith.constant 0 : index
    %c0_6 = arith.constant 0 : index
    %c0_7 = arith.constant 0 : index
    %2 = vector.load %arg2[%c0_4, %c1, %c0_5, %c0_6, %c0_7] : memref<1x3x1x8x64xbf16, #tpu.memory_space<vmem>>, vector<1x1x1x8x64xbf16>
    %3 = vector.shape_cast %2 : vector<1x1x1x8x64xbf16> to vector<8x64xbf16>
    %c0_8 = arith.constant 0 : index
    %c2 = arith.constant 2 : index
    %c0_9 = arith.constant 0 : index
    %c0_10 = arith.constant 0 : index
    %c0_11 = arith.constant 0 : index
    %4 = vector.load %arg2[%c0_8, %c2, %c0_9, %c0_10, %c0_11] : memref<1x3x1x8x64xbf16, #tpu.memory_space<vmem>>, vector<1x1x1x8x64xbf16>
    %5 = vector.shape_cast %4 : vector<1x1x1x8x64xbf16> to vector<8x64xbf16>
    %cst = arith.constant dense<0.000000e+00> : vector<8x8xf32>
    %6 = tpu.matmul %1, %3, %cst {dimension_numbers = #tpu.dot_dimension_numbers<[1], [1], [0], [0], [0, 0, 1, 0], [], []>} : vector<8x64xbf16>, vector<8x64xbf16>, vector<8x8xf32> -> vector<8x8xf32>
    %7 = tpu.iota {dimensions = array<i32: 1>} : vector<8x8xi32>
    %c5_i32 = arith.constant 5 : i32
    %8 = vector.broadcast %c5_i32 : i32 to vector<8x8xi32>
    %9 = arith.cmpi slt, %7, %8 : vector<8x8xi32>
    %cst_12 = arith.constant 0xFF800000 : f32
    %10 = vector.broadcast %cst_12 : f32 to vector<8x8xf32>
    %11 = arith.select %9, %6, %10 : vector<8x8xi1>, vector<8x8xf32>
    %cst_13 = arith.constant dense<0xFF800000> : vector<8xf32>
    %12 = vector.multi_reduction <maximumf>, %11, %cst_13 [1] : vector<8x8xf32> to vector<8xf32>
    %13 = vector.shape_cast %12 : vector<8xf32> to vector<8x1xf32>
    %14 = vector.broadcast %13 : vector<8x1xf32> to vector<8x8xf32>
    %15 = arith.subf %11, %14 : vector<8x8xf32>
    %16 = math.exp %15 : vector<8x8xf32>
    %cst_14 = arith.constant dense<0.000000e+00> : vector<8xf32>
    %17 = vector.multi_reduction <add>, %16, %cst_14 [1] : vector<8x8xf32> to vector<8xf32>
    %18 = vector.shape_cast %17 : vector<8xf32> to vector<8x1xf32>
    %19 = tpu.reciprocal %18 {approx = true} : vector<8x1xf32> -> vector<8x1xf32>
    %20 = vector.broadcast %19 : vector<8x1xf32> to vector<8x8xf32>
    %21 = arith.mulf %16, %20 : vector<8x8xf32>
    %22 = arith.truncf %21 : vector<8x8xf32> to vector<8x8xbf16>
    %cst_15 = arith.constant dense<0.000000e+00> : vector<8x64xf32>
    %23 = tpu.matmul %22, %5, %cst_15 {dimension_numbers = #tpu.dot_dimension_numbers<[1], [0], [0], [1], [0, 0, 1, 1], [], []>} : vector<8x8xbf16>, vector<8x64xbf16>, vector<8x64xf32> -> vector<8x64xf32>
    %24 = arith.truncf %23 : vector<8x64xf32> to vector<8x64xbf16>
    %c0_16 = arith.constant 0 : index
    %c0_17 = arith.constant 0 : index
    %c0_18 = arith.constant 0 : index
    %c0_19 = arith.constant 0 : index
    %25 = vector.load %arg3[%c0_16, %c0_17, %c0_18, %c0_19] : memref<1x1x8x64xbf16, #tpu.memory_space<vmem>>, vector<1x1x8x64xbf16>
    %26 = vector.shape_cast %25 : vector<1x1x8x64xbf16> to vector<8x64xbf16>
    %27 = vector.shape_cast %24 : vector<8x64xbf16> to vector<1x1x8x64xbf16>
    tpu.vector_store %arg3[%c0_16, %c0_17, %c0_18, %c0_19], %27 {strides = array<i32>} : memref<1x1x8x64xbf16, #tpu.memory_space<vmem>>, vector<1x1x8x64xbf16>,
    return
  }
  func.func @transform_0(%arg0: i32, %arg1: i32) -> (i32, i32, i32, i32, i32) {
    %c0_i32 = arith.constant 0 : i32
    %c0_i32_0 = arith.constant 0 : i32
    %c0_i32_1 = arith.constant 0 : i32
    %c0_i32_2 = arith.constant 0 : i32
    return %arg0, %c0_i32, %arg1, %c0_i32_0, %c0_i32_1 : i32, i32, i32, i32, i32
  }
  func.func @transform_1(%arg0: i32, %arg1: i32) -> (i32, i32, i32, i32) {
    %c0_i32 = arith.constant 0 : i32
    %c0_i32_0 = arith.constant 0 : i32
    %c0_i32_1 = arith.constant 0 : i32
    return %arg0, %arg1, %c0_i32, %c0_i32_0 : i32, i32, i32, i32
  }
}

module attributes {stable_mosaic.version = 11 : i64} {
  func.func @_linear_kernel(%arg0: i32, %arg1: i32, %arg2: i32, %arg3: memref<16x64xbf16, #tpu.memory_space<vmem>>, %arg4: memref<64x64xbf16, #tpu.memory_space<vmem>>, %arg5: memref<1x64xf32, #tpu.memory_space<vmem>>, %arg6: memref<16x64xbf16, #tpu.memory_space<vmem>>, %arg7: memref<16x64xbf16, #tpu.memory_space<vmem>>, %arg8: memref<16x64xf32, #tpu.memory_space<vmem>>) attributes {dimension_semantics = [#tpu.dimension_semantics<parallel>, #tpu.dimension_semantics<parallel>, #tpu.dimension_semantics<arbitrary>], iteration_bounds = array<i64: 1, 1, 1>, scalar_prefetch = 0 : i64, scratch_operands = 1 : i64, tpu.core_type = #tpu.core_type<tc>, window_params = [{transform_indices = @transform_0, window_bounds = array<i64: 16, 64>}, {transform_indices = @transform_1, window_bounds = array<i64: 64, 64>}, {transform_indices = @transform_2, window_bounds = array<i64: 1, 64>}, {transform_indices = @transform_3, window_bounds = array<i64: 16, 64>}, {transform_indices = @transform_4, window_bounds = array<i64: 16, 64>}]} {
    %c0_i32 = arith.constant 0 : i32
    %0 = arith.cmpi eq, %arg2, %c0_i32 : i32
    %1 = arith.extui %0 : i1 to i32
    %c0_i32_0 = arith.constant 0 : i32
    %2 = arith.cmpi ne, %1, %c0_i32_0 : i32
    scf.if %2 {
      %cst_10 = arith.constant 0.000000e+00 : f32
      %12 = vector.broadcast %cst_10 : f32 to vector<16x64xf32>
      %c0_11 = arith.constant 0 : index
      %c0_12 = arith.constant 0 : index
      %13 = vector.load %arg8[%c0_11, %c0_12] : memref<16x64xf32, #tpu.memory_space<vmem>>, vector<16x64xf32>
      tpu.vector_store %arg8[%c0_11, %c0_12], %12 {strides = array<i32>} : memref<16x64xf32, #tpu.memory_space<vmem>>, vector<16x64xf32>,
    } else {
    }
    %c0 = arith.constant 0 : index
    %c0_1 = arith.constant 0 : index
    %3 = vector.load %arg8[%c0, %c0_1] : memref<16x64xf32, #tpu.memory_space<vmem>>, vector<16x64xf32>
    %c0_2 = arith.constant 0 : index
    %c0_3 = arith.constant 0 : index
    %4 = vector.load %arg3[%c0_2, %c0_3] : memref<16x64xbf16, #tpu.memory_space<vmem>>, vector<16x64xbf16>
    %c0_4 = arith.constant 0 : index
    %c0_5 = arith.constant 0 : index
    %5 = vector.load %arg4[%c0_4, %c0_5] : memref<64x64xbf16, #tpu.memory_space<vmem>>, vector<64x64xbf16>
    %cst = arith.constant dense<0.000000e+00> : vector<16x64xf32>
    %6 = tpu.matmul %4, %5, %cst {dimension_numbers = #tpu.dot_dimension_numbers<[1], [0], [0], [1], [0, 0, 1, 1], [], []>} : vector<16x64xbf16>, vector<64x64xbf16>, vector<16x64xf32> -> vector<16x64xf32>
    %7 = arith.addf %3, %6 : vector<16x64xf32>
    %c0_6 = arith.constant 0 : index
    %c0_7 = arith.constant 0 : index
    %8 = vector.load %arg8[%c0_6, %c0_7] : memref<16x64xf32, #tpu.memory_space<vmem>>, vector<16x64xf32>
    tpu.vector_store %arg8[%c0_6, %c0_7], %7 {strides = array<i32>} : memref<16x64xf32, #tpu.memory_space<vmem>>, vector<16x64xf32>,
    %c0_i32_8 = arith.constant 0 : i32
    %9 = arith.cmpi eq, %arg2, %c0_i32_8 : i32
    %10 = arith.extui %9 : i1 to i32
    %c0_i32_9 = arith.constant 0 : i32
    %11 = arith.cmpi ne, %10, %c0_i32_9 : i32
    scf.if %11 {
      %c0_10 = arith.constant 0 : index
      %c0_11 = arith.constant 0 : index
      %12 = vector.load %arg8[%c0_10, %c0_11] : memref<16x64xf32, #tpu.memory_space<vmem>>, vector<16x64xf32>
      %c0_12 = arith.constant 0 : index
      %c0_13 = arith.constant 0 : index
      %13 = vector.load %arg5[%c0_12, %c0_13] : memref<1x64xf32, #tpu.memory_space<vmem>>, vector<1x64xf32>
      %14 = vector.broadcast %13 : vector<1x64xf32> to vector<16x64xf32>
      %15 = arith.addf %12, %14 : vector<16x64xf32>
      %c0_14 = arith.constant 0 : index
      %c0_15 = arith.constant 0 : index
      %16 = vector.load %arg6[%c0_14, %c0_15] : memref<16x64xbf16, #tpu.memory_space<vmem>>, vector<16x64xbf16>
      %17 = arith.extf %16 : vector<16x64xbf16> to vector<16x64xf32>
      %18 = arith.addf %15, %17 : vector<16x64xf32>
      %19 = arith.truncf %18 : vector<16x64xf32> to vector<16x64xbf16>
      %c0_16 = arith.constant 0 : index
      %c0_17 = arith.constant 0 : index
      %20 = vector.load %arg7[%c0_16, %c0_17] : memref<16x64xbf16, #tpu.memory_space<vmem>>, vector<16x64xbf16>
      tpu.vector_store %arg7[%c0_16, %c0_17], %19 {strides = array<i32>} : memref<16x64xbf16, #tpu.memory_space<vmem>>, vector<16x64xbf16>,
    } else {
    }
    return
  }
  func.func @transform_0(%arg0: i32, %arg1: i32, %arg2: i32) -> (i32, i32) {
    %c0_i32 = arith.constant 0 : i32
    return %arg0, %arg2 : i32, i32
  }
  func.func @transform_1(%arg0: i32, %arg1: i32, %arg2: i32) -> (i32, i32) {
    %c0_i32 = arith.constant 0 : i32
    return %arg2, %arg1 : i32, i32
  }
  func.func @transform_2(%arg0: i32, %arg1: i32, %arg2: i32) -> (i32, i32) {
    %c0_i32 = arith.constant 0 : i32
    %c0_i32_0 = arith.constant 0 : i32
    return %c0_i32, %arg1 : i32, i32
  }
  func.func @transform_3(%arg0: i32, %arg1: i32, %arg2: i32) -> (i32, i32) {
    %c0_i32 = arith.constant 0 : i32
    return %arg0, %arg1 : i32, i32
  }
  func.func @transform_4(%arg0: i32, %arg1: i32, %arg2: i32) -> (i32, i32) {
    %c0_i32 = arith.constant 0 : i32
    return %arg0, %arg1 : i32, i32
  }
}

module attributes {stable_mosaic.version = 11 : i64} {
  func.func @_ln_linear_kernel(%arg0: i32, %arg1: i32, %arg2: memref<16x64xbf16, #tpu.memory_space<vmem>>, %arg3: memref<1x64xf32, #tpu.memory_space<vmem>>, %arg4: memref<1x64xf32, #tpu.memory_space<vmem>>, %arg5: memref<64x256xbf16, #tpu.memory_space<vmem>>, %arg6: memref<1x256xf32, #tpu.memory_space<vmem>>, %arg7: memref<16x256xbf16, #tpu.memory_space<vmem>>, %arg8: memref<16x64xbf16, #tpu.memory_space<vmem>>) attributes {dimension_semantics = [#tpu.dimension_semantics<parallel>, #tpu.dimension_semantics<arbitrary>], iteration_bounds = array<i64: 1, 1>, scalar_prefetch = 0 : i64, scratch_operands = 1 : i64, tpu.core_type = #tpu.core_type<tc>, window_params = [{transform_indices = @transform_0, window_bounds = array<i64: 16, 64>}, {pipeline_mode = #tpu.pipeline_mode<synchronous>, transform_indices = @transform_1, window_bounds = array<i64: 1, 64>}, {pipeline_mode = #tpu.pipeline_mode<synchronous>, transform_indices = @transform_2, window_bounds = array<i64: 1, 64>}, {transform_indices = @transform_3, window_bounds = array<i64: 64, 256>}, {transform_indices = @transform_4, window_bounds = array<i64: 1, 256>}, {transform_indices = @transform_5, window_bounds = array<i64: 16, 256>}]} {
    %c0_i32 = arith.constant 0 : i32
    %0 = arith.cmpi eq, %arg1, %c0_i32 : i32
    %1 = arith.extui %0 : i1 to i32
    %c0_i32_0 = arith.constant 0 : i32
    %2 = arith.cmpi ne, %1, %c0_i32_0 : i32
    scf.if %2 {
      %c0_10 = arith.constant 0 : index
      %c0_11 = arith.constant 0 : index
      %19 = vector.load %arg2[%c0_10, %c0_11] : memref<16x64xbf16, #tpu.memory_space<vmem>>, vector<16x64xbf16>
      %20 = arith.extf %19 : vector<16x64xbf16> to vector<16x64xf32>
      %cst_12 = arith.constant dense<0.000000e+00> : vector<16xf32>
      %21 = vector.multi_reduction <add>, %20, %cst_12 [1] : vector<16x64xf32> to vector<16xf32>
      %22 = vector.shape_cast %21 : vector<16xf32> to vector<16x1xf32>
      %cst_13 = arith.constant 6.400000e+01 : f32
      %23 = vector.broadcast %cst_13 : f32 to vector<16x1xf32>
      %24 = arith.divf %22, %23 : vector<16x1xf32>
      %25 = vector.broadcast %24 : vector<16x1xf32> to vector<16x64xf32>
      %26 = arith.subf %20, %25 : vector<16x64xf32>
      %27 = arith.mulf %26, %26 : vector<16x64xf32>
      %cst_14 = arith.constant dense<0.000000e+00> : vector<16xf32>
      %28 = vector.multi_reduction <add>, %27, %cst_14 [1] : vector<16x64xf32> to vector<16xf32>
      %29 = vector.shape_cast %28 : vector<16xf32> to vector<16x1xf32>
      %cst_15 = arith.constant 6.400000e+01 : f32
      %30 = vector.broadcast %cst_15 : f32 to vector<16x1xf32>
      %31 = arith.divf %29, %30 : vector<16x1xf32>
      %cst_16 = arith.constant 9.99999974E-6 : f32
      %32 = vector.broadcast %cst_16 : f32 to vector<16x1xf32>
      %33 = arith.addf %31, %32 : vector<16x1xf32>
      %34 = math.rsqrt %33 : vector<16x1xf32>
      %35 = vector.broadcast %34 : vector<16x1xf32> to vector<16x64xf32>
      %36 = arith.mulf %26, %35 : vector<16x64xf32>
      %c0_17 = arith.constant 0 : index
      %c0_18 = arith.constant 0 : index
      %37 = vector.load %arg3[%c0_17, %c0_18] : memref<1x64xf32, #tpu.memory_space<vmem>>, vector<1x64xf32>
      %38 = vector.broadcast %37 : vector<1x64xf32> to vector<16x64xf32>
      %39 = arith.mulf %36, %38 : vector<16x64xf32>
      %c0_19 = arith.constant 0 : index
      %c0_20 = arith.constant 0 : index
      %40 = vector.load %arg4[%c0_19, %c0_20] : memref<1x64xf32, #tpu.memory_space<vmem>>, vector<1x64xf32>
      %41 = vector.broadcast %40 : vector<1x64xf32> to vector<16x64xf32>
      %42 = arith.addf %39, %41 : vector<16x64xf32>
      %43 = arith.truncf %42 : vector<16x64xf32> to vector<16x64xbf16>
      %c0_21 = arith.constant 0 : index
      %c0_22 = arith.constant 0 : index
      %44 = vector.load %arg8[%c0_21, %c0_22] : memref<16x64xbf16, #tpu.memory_space<vmem>>, vector<16x64xbf16>
      tpu.vector_store %arg8[%c0_21, %c0_22], %43 {strides = array<i32>} : memref<16x64xbf16, #tpu.memory_space<vmem>>, vector<16x64xbf16>,
    } else {
    }
    %c0 = arith.constant 0 : index
    %c0_1 = arith.constant 0 : index
    %3 = vector.load %arg8[%c0, %c0_1] : memref<16x64xbf16, #tpu.memory_space<vmem>>, vector<16x64xbf16>
    %c0_2 = arith.constant 0 : index
    %c0_3 = arith.constant 0 : index
    %4 = vector.load %arg5[%c0_2, %c0_3] : memref<64x256xbf16, #tpu.memory_space<vmem>>, vector<64x256xbf16>
    %cst = arith.constant dense<0.000000e+00> : vector<16x256xf32>
    %5 = tpu.matmul %3, %4, %cst {dimension_numbers = #tpu.dot_dimension_numbers<[1], [0], [0], [1], [0, 0, 1, 1], [], []>} : vector<16x64xbf16>, vector<64x256xbf16>, vector<16x256xf32> -> vector<16x256xf32>
    %c0_4 = arith.constant 0 : index
    %c0_5 = arith.constant 0 : index
    %6 = vector.load %arg6[%c0_4, %c0_5] : memref<1x256xf32, #tpu.memory_space<vmem>>, vector<1x256xf32>
    %7 = vector.broadcast %6 : vector<1x256xf32> to vector<16x256xf32>
    %8 = arith.addf %5, %7 : vector<16x256xf32>
    %cst_6 = arith.constant 1.702000e+00 : f32
    %9 = vector.broadcast %cst_6 : f32 to vector<16x256xf32>
    %10 = arith.mulf %9, %8 : vector<16x256xf32>
    %11 = arith.negf %10 : vector<16x256xf32>
    %12 = math.exp %11 : vector<16x256xf32>
    %cst_7 = arith.constant 1.000000e+00 : f32
    %13 = vector.broadcast %cst_7 : f32 to vector<16x256xf32>
    %14 = arith.addf %13, %12 : vector<16x256xf32>
    %15 = arith.divf %13, %14 : vector<16x256xf32>
    %16 = arith.mulf %8, %15 : vector<16x256xf32>
    %17 = arith.truncf %16 : vector<16x256xf32> to vector<16x256xbf16>
    %c0_8 = arith.constant 0 : index
    %c0_9 = arith.constant 0 : index
    %18 = vector.load %arg7[%c0_8, %c0_9] : memref<16x256xbf16, #tpu.memory_space<vmem>>, vector<16x256xbf16>
    tpu.vector_store %arg7[%c0_8, %c0_9], %17 {strides = array<i32>} : memref<16x256xbf16, #tpu.memory_space<vmem>>, vector<16x256xbf16>,
    return
  }
  func.func @transform_0(%arg0: i32, %arg1: i32) -> (i32, i32) {
    %c0_i32 = arith.constant 0 : i32
    %c0_i32_0 = arith.constant 0 : i32
    return %arg0, %c0_i32 : i32, i32
  }
  func.func @transform_1(%arg0: i32, %arg1: i32) -> (i32, i32) {
    %c0_i32 = arith.constant 0 : i32
    %c0_i32_0 = arith.constant 0 : i32
    %c0_i32_1 = arith.constant 0 : i32
    return %c0_i32, %c0_i32_0 : i32, i32
  }
  func.func @transform_2(%arg0: i32, %arg1: i32) -> (i32, i32) {
    %c0_i32 = arith.constant 0 : i32
    %c0_i32_0 = arith.constant 0 : i32
    %c0_i32_1 = arith.constant 0 : i32
    return %c0_i32, %c0_i32_0 : i32, i32
  }
  func.func @transform_3(%arg0: i32, %arg1: i32) -> (i32, i32) {
    %c0_i32 = arith.constant 0 : i32
    %c0_i32_0 = arith.constant 0 : i32
    return %c0_i32, %arg1 : i32, i32
  }
  func.func @transform_4(%arg0: i32, %arg1: i32) -> (i32, i32) {
    %c0_i32 = arith.constant 0 : i32
    %c0_i32_0 = arith.constant 0 : i32
    return %c0_i32, %arg1 : i32, i32
  }
  func.func @transform_5(%arg0: i32, %arg1: i32) -> (i32, i32) {
    %c0_i32 = arith.constant 0 : i32
    return %arg0, %arg1 : i32, i32
  }
}

module attributes {stable_mosaic.version = 11 : i64} {
  func.func @_linear_kernel(%arg0: i32, %arg1: i32, %arg2: i32, %arg3: memref<16x256xbf16, #tpu.memory_space<vmem>>, %arg4: memref<256x64xbf16, #tpu.memory_space<vmem>>, %arg5: memref<1x64xf32, #tpu.memory_space<vmem>>, %arg6: memref<16x64xbf16, #tpu.memory_space<vmem>>, %arg7: memref<16x64xbf16, #tpu.memory_space<vmem>>, %arg8: memref<16x64xf32, #tpu.memory_space<vmem>>) attributes {dimension_semantics = [#tpu.dimension_semantics<parallel>, #tpu.dimension_semantics<parallel>, #tpu.dimension_semantics<arbitrary>], iteration_bounds = array<i64: 1, 1, 1>, scalar_prefetch = 0 : i64, scratch_operands = 1 : i64, tpu.core_type = #tpu.core_type<tc>, window_params = [{transform_indices = @transform_0, window_bounds = array<i64: 16, 256>}, {transform_indices = @transform_1, window_bounds = array<i64: 256, 64>}, {transform_indices = @transform_2, window_bounds = array<i64: 1, 64>}, {transform_indices = @transform_3, window_bounds = array<i64: 16, 64>}, {transform_indices = @transform_4, window_bounds = array<i64: 16, 64>}]} {
    %c0_i32 = arith.constant 0 : i32
    %0 = arith.cmpi eq, %arg2, %c0_i32 : i32
    %1 = arith.extui %0 : i1 to i32
    %c0_i32_0 = arith.constant 0 : i32
    %2 = arith.cmpi ne, %1, %c0_i32_0 : i32
    scf.if %2 {
      %cst_10 = arith.constant 0.000000e+00 : f32
      %12 = vector.broadcast %cst_10 : f32 to vector<16x64xf32>
      %c0_11 = arith.constant 0 : index
      %c0_12 = arith.constant 0 : index
      %13 = vector.load %arg8[%c0_11, %c0_12] : memref<16x64xf32, #tpu.memory_space<vmem>>, vector<16x64xf32>
      tpu.vector_store %arg8[%c0_11, %c0_12], %12 {strides = array<i32>} : memref<16x64xf32, #tpu.memory_space<vmem>>, vector<16x64xf32>,
    } else {
    }
    %c0 = arith.constant 0 : index
    %c0_1 = arith.constant 0 : index
    %3 = vector.load %arg8[%c0, %c0_1] : memref<16x64xf32, #tpu.memory_space<vmem>>, vector<16x64xf32>
    %c0_2 = arith.constant 0 : index
    %c0_3 = arith.constant 0 : index
    %4 = vector.load %arg3[%c0_2, %c0_3] : memref<16x256xbf16, #tpu.memory_space<vmem>>, vector<16x256xbf16>
    %c0_4 = arith.constant 0 : index
    %c0_5 = arith.constant 0 : index
    %5 = vector.load %arg4[%c0_4, %c0_5] : memref<256x64xbf16, #tpu.memory_space<vmem>>, vector<256x64xbf16>
    %cst = arith.constant dense<0.000000e+00> : vector<16x64xf32>
    %6 = tpu.matmul %4, %5, %cst {dimension_numbers = #tpu.dot_dimension_numbers<[1], [0], [0], [1], [0, 0, 1, 1], [], []>} : vector<16x256xbf16>, vector<256x64xbf16>, vector<16x64xf32> -> vector<16x64xf32>
    %7 = arith.addf %3, %6 : vector<16x64xf32>
    %c0_6 = arith.constant 0 : index
    %c0_7 = arith.constant 0 : index
    %8 = vector.load %arg8[%c0_6, %c0_7] : memref<16x64xf32, #tpu.memory_space<vmem>>, vector<16x64xf32>
    tpu.vector_store %arg8[%c0_6, %c0_7], %7 {strides = array<i32>} : memref<16x64xf32, #tpu.memory_space<vmem>>, vector<16x64xf32>,
    %c0_i32_8 = arith.constant 0 : i32
    %9 = arith.cmpi eq, %arg2, %c0_i32_8 : i32
    %10 = arith.extui %9 : i1 to i32
    %c0_i32_9 = arith.constant 0 : i32
    %11 = arith.cmpi ne, %10, %c0_i32_9 : i32
    scf.if %11 {
      %c0_10 = arith.constant 0 : index
      %c0_11 = arith.constant 0 : index
      %12 = vector.load %arg8[%c0_10, %c0_11] : memref<16x64xf32, #tpu.memory_space<vmem>>, vector<16x64xf32>
      %c0_12 = arith.constant 0 : index
      %c0_13 = arith.constant 0 : index
      %13 = vector.load %arg5[%c0_12, %c0_13] : memref<1x64xf32, #tpu.memory_space<vmem>>, vector<1x64xf32>
      %14 = vector.broadcast %13 : vector<1x64xf32> to vector<16x64xf32>
      %15 = arith.addf %12, %14 : vector<16x64xf32>
      %c0_14 = arith.constant 0 : index
      %c0_15 = arith.constant 0 : index
      %16 = vector.load %arg6[%c0_14, %c0_15] : memref<16x64xbf16, #tpu.memory_space<vmem>>, vector<16x64xbf16>
      %17 = arith.extf %16 : vector<16x64xbf16> to vector<16x64xf32>
      %18 = arith.addf %15, %17 : vector<16x64xf32>
      %19 = arith.truncf %18 : vector<16x64xf32> to vector<16x64xbf16>
      %c0_16 = arith.constant 0 : index
      %c0_17 = arith.constant 0 : index
      %20 = vector.load %arg7[%c0_16, %c0_17] : memref<16x64xbf16, #tpu.memory_space<vmem>>, vector<16x64xbf16>
      tpu.vector_store %arg7[%c0_16, %c0_17], %19 {strides = array<i32>} : memref<16x64xbf16, #tpu.memory_space<vmem>>, vector<16x64xbf16>,
    } else {
    }
    return
  }
  func.func @transform_0(%arg0: i32, %arg1: i32, %arg2: i32) -> (i32, i32) {
    %c0_i32 = arith.constant 0 : i32
    return %arg0, %arg2 : i32, i32
  }
  func.func @transform_1(%arg0: i32, %arg1: i32, %arg2: i32) -> (i32, i32) {
    %c0_i32 = arith.constant 0 : i32
    return %arg2, %arg1 : i32, i32
  }
  func.func @transform_2(%arg0: i32, %arg1: i32, %arg2: i32) -> (i32, i32) {
    %c0_i32 = arith.constant 0 : i32
    %c0_i32_0 = arith.constant 0 : i32
    return %c0_i32, %arg1 : i32, i32
  }
  func.func @transform_3(%arg0: i32, %arg1: i32, %arg2: i32) -> (i32, i32) {
    %c0_i32 = arith.constant 0 : i32
    return %arg0, %arg1 : i32, i32
  }
  func.func @transform_4(%arg0: i32, %arg1: i32, %arg2: i32) -> (i32, i32) {
    %c0_i32 = arith.constant 0 : i32
    return %arg0, %arg1 : i32, i32
  }
}

module attributes {stable_mosaic.version = 11 : i64} {
  func.func @_ln_linear_kernel(%arg0: i32, %arg1: i32, %arg2: memref<8x64xbf16, #tpu.memory_space<vmem>>, %arg3: memref<1x64xf32, #tpu.memory_space<vmem>>, %arg4: memref<1x64xf32, #tpu.memory_space<vmem>>, %arg5: memref<64x32xbf16, #tpu.memory_space<vmem>>, %arg6: memref<8x32xbf16, #tpu.memory_space<vmem>>, %arg7: memref<8x64xbf16, #tpu.memory_space<vmem>>) attributes {dimension_semantics = [#tpu.dimension_semantics<parallel>, #tpu.dimension_semantics<arbitrary>], iteration_bounds = array<i64: 1, 1>, scalar_prefetch = 0 : i64, scratch_operands = 1 : i64, tpu.core_type = #tpu.core_type<tc>, window_params = [{transform_indices = @transform_0, window_bounds = array<i64: 8, 64>}, {pipeline_mode = #tpu.pipeline_mode<synchronous>, transform_indices = @transform_1, window_bounds = array<i64: 1, 64>}, {pipeline_mode = #tpu.pipeline_mode<synchronous>, transform_indices = @transform_2, window_bounds = array<i64: 1, 64>}, {transform_indices = @transform_3, window_bounds = array<i64: 64, 32>}, {transform_indices = @transform_4, window_bounds = array<i64: 8, 32>}]} {
    %c0_i32 = arith.constant 0 : i32
    %0 = arith.cmpi eq, %arg1, %c0_i32 : i32
    %1 = arith.extui %0 : i1 to i32
    %c0_i32_0 = arith.constant 0 : i32
    %2 = arith.cmpi ne, %1, %c0_i32_0 : i32
    scf.if %2 {
      %c0_6 = arith.constant 0 : index
      %c0_7 = arith.constant 0 : index
      %8 = vector.load %arg2[%c0_6, %c0_7] : memref<8x64xbf16, #tpu.memory_space<vmem>>, vector<8x64xbf16>
      %9 = arith.extf %8 : vector<8x64xbf16> to vector<8x64xf32>
      %cst_8 = arith.constant dense<0.000000e+00> : vector<8xf32>
      %10 = vector.multi_reduction <add>, %9, %cst_8 [1] : vector<8x64xf32> to vector<8xf32>
      %11 = vector.shape_cast %10 : vector<8xf32> to vector<8x1xf32>
      %cst_9 = arith.constant 6.400000e+01 : f32
      %12 = vector.broadcast %cst_9 : f32 to vector<8x1xf32>
      %13 = arith.divf %11, %12 : vector<8x1xf32>
      %14 = vector.broadcast %13 : vector<8x1xf32> to vector<8x64xf32>
      %15 = arith.subf %9, %14 : vector<8x64xf32>
      %16 = arith.mulf %15, %15 : vector<8x64xf32>
      %cst_10 = arith.constant dense<0.000000e+00> : vector<8xf32>
      %17 = vector.multi_reduction <add>, %16, %cst_10 [1] : vector<8x64xf32> to vector<8xf32>
      %18 = vector.shape_cast %17 : vector<8xf32> to vector<8x1xf32>
      %cst_11 = arith.constant 6.400000e+01 : f32
      %19 = vector.broadcast %cst_11 : f32 to vector<8x1xf32>
      %20 = arith.divf %18, %19 : vector<8x1xf32>
      %cst_12 = arith.constant 9.99999974E-6 : f32
      %21 = vector.broadcast %cst_12 : f32 to vector<8x1xf32>
      %22 = arith.addf %20, %21 : vector<8x1xf32>
      %23 = math.rsqrt %22 : vector<8x1xf32>
      %24 = vector.broadcast %23 : vector<8x1xf32> to vector<8x64xf32>
      %25 = arith.mulf %15, %24 : vector<8x64xf32>
      %c0_13 = arith.constant 0 : index
      %c0_14 = arith.constant 0 : index
      %26 = vector.load %arg3[%c0_13, %c0_14] : memref<1x64xf32, #tpu.memory_space<vmem>>, vector<1x64xf32>
      %27 = vector.broadcast %26 : vector<1x64xf32> to vector<8x64xf32>
      %28 = arith.mulf %25, %27 : vector<8x64xf32>
      %c0_15 = arith.constant 0 : index
      %c0_16 = arith.constant 0 : index
      %29 = vector.load %arg4[%c0_15, %c0_16] : memref<1x64xf32, #tpu.memory_space<vmem>>, vector<1x64xf32>
      %30 = vector.broadcast %29 : vector<1x64xf32> to vector<8x64xf32>
      %31 = arith.addf %28, %30 : vector<8x64xf32>
      %32 = arith.truncf %31 : vector<8x64xf32> to vector<8x64xbf16>
      %c0_17 = arith.constant 0 : index
      %c0_18 = arith.constant 0 : index
      %33 = vector.load %arg7[%c0_17, %c0_18] : memref<8x64xbf16, #tpu.memory_space<vmem>>, vector<8x64xbf16>
      tpu.vector_store %arg7[%c0_17, %c0_18], %32 {strides = array<i32>} : memref<8x64xbf16, #tpu.memory_space<vmem>>, vector<8x64xbf16>,
    } else {
    }
    %c0 = arith.constant 0 : index
    %c0_1 = arith.constant 0 : index
    %3 = vector.load %arg7[%c0, %c0_1] : memref<8x64xbf16, #tpu.memory_space<vmem>>, vector<8x64xbf16>
    %c0_2 = arith.constant 0 : index
    %c0_3 = arith.constant 0 : index
    %4 = vector.load %arg5[%c0_2, %c0_3] : memref<64x32xbf16, #tpu.memory_space<vmem>>, vector<64x32xbf16>
    %cst = arith.constant dense<0.000000e+00> : vector<8x32xf32>
    %5 = tpu.matmul %3, %4, %cst {dimension_numbers = #tpu.dot_dimension_numbers<[1], [0], [0], [1], [0, 0, 1, 1], [], []>} : vector<8x64xbf16>, vector<64x32xbf16>, vector<8x32xf32> -> vector<8x32xf32>
    %6 = arith.truncf %5 : vector<8x32xf32> to vector<8x32xbf16>
    %c0_4 = arith.constant 0 : index
    %c0_5 = arith.constant 0 : index
    %7 = vector.load %arg6[%c0_4, %c0_5] : memref<8x32xbf16, #tpu.memory_space<vmem>>, vector<8x32xbf16>
    tpu.vector_store %arg6[%c0_4, %c0_5], %6 {strides = array<i32>} : memref<8x32xbf16, #tpu.memory_space<vmem>>, vector<8x32xbf16>,
    return
  }
  func.func @transform_0(%arg0: i32, %arg1: i32) -> (i32, i32) {
    %c0_i32 = arith.constant 0 : i32
    %c0_i32_0 = arith.constant 0 : i32
    return %arg0, %c0_i32 : i32, i32
  }
  func.func @transform_1(%arg0: i32, %arg1: i32) -> (i32, i32) {
    %c0_i32 = arith.constant 0 : i32
    %c0_i32_0 = arith.constant 0 : i32
    %c0_i32_1 = arith.constant 0 : i32
    return %c0_i32, %c0_i32_0 : i32, i32
  }
  func.func @transform_2(%arg0: i32, %arg1: i32) -> (i32, i32) {
    %c0_i32 = arith.constant 0 : i32
    %c0_i32_0 = arith.constant 0 : i32
    %c0_i32_1 = arith.constant 0 : i32
    return %c0_i32, %c0_i32_0 : i32, i32
  }
  func.func @transform_3(%arg0: i32, %arg1: i32) -> (i32, i32) {
    %c0_i32 = arith.constant 0 : i32
    %c0_i32_0 = arith.constant 0 : i32
    return %c0_i32, %arg1 : i32, i32
  }
  func.func @transform_4(%arg0: i32, %arg1: i32) -> (i32, i32) {
    %c0_i32 = arith.constant 0 : i32
    return %arg0, %arg1 : i32, i32
  }
}

module attributes {stable_mosaic.version = 11 : i64} {
  func.func @_logits_kernel(%arg0: i32, %arg1: memref<1x4x32xbf16, #tpu.memory_space<vmem>>, %arg2: memref<2x32xbf16, #tpu.memory_space<vmem>>, %arg3: memref<1xf32, #tpu.memory_space<smem>>, %arg4: memref<1x4x2xf32, #tpu.memory_space<vmem>>) attributes {dimension_semantics = [#tpu.dimension_semantics<parallel>], iteration_bounds = array<i64: 2>, scalar_prefetch = 0 : i64, scratch_operands = 0 : i64, tpu.core_type = #tpu.core_type<tc>, window_params = [{transform_indices = @transform_0, window_bounds = array<i64: 1, 4, 32>}, {pipeline_mode = #tpu.pipeline_mode<synchronous>, transform_indices = @transform_1, window_bounds = array<i64: 2, 32>}, {transform_indices = @transform_2, window_bounds = array<i64: 1>}, {transform_indices = @transform_3, window_bounds = array<i64: 1, 4, 2>}]} {
    %c0 = arith.constant 0 : index
    %c0_0 = arith.constant 0 : index
    %c0_1 = arith.constant 0 : index
    %0 = vector.load %arg1[%c0, %c0_0, %c0_1] : memref<1x4x32xbf16, #tpu.memory_space<vmem>>, vector<1x4x32xbf16>
    %1 = vector.shape_cast %0 : vector<1x4x32xbf16> to vector<4x32xbf16>
    %2 = arith.extf %1 : vector<4x32xbf16> to vector<4x32xf32>
    %c0_2 = arith.constant 0 : index
    %c0_3 = arith.constant 0 : index
    %3 = vector.load %arg2[%c0_2, %c0_3] : memref<2x32xbf16, #tpu.memory_space<vmem>>, vector<2x32xbf16>
    %4 = arith.extf %3 : vector<2x32xbf16> to vector<2x32xf32>
    %5 = arith.mulf %2, %2 : vector<4x32xf32>
    %cst = arith.constant dense<0.000000e+00> : vector<32xf32>
    %6 = vector.multi_reduction <add>, %5, %cst [0] : vector<4x32xf32> to vector<32xf32>
    %7 = vector.shape_cast %6 : vector<32xf32> to vector<1x32xf32>
    %8 = math.rsqrt %7 : vector<1x32xf32>
    %9 = vector.broadcast %8 : vector<1x32xf32> to vector<4x32xf32>
    %10 = arith.mulf %2, %9 : vector<4x32xf32>
    %11 = arith.mulf %4, %4 : vector<2x32xf32>
    %cst_4 = arith.constant dense<0.000000e+00> : vector<2xf32>
    %12 = vector.multi_reduction <add>, %11, %cst_4 [1] : vector<2x32xf32> to vector<2xf32>
    %13 = vector.shape_cast %12 : vector<2xf32> to vector<2x1xf32>
    %14 = math.rsqrt %13 : vector<2x1xf32>
    %15 = vector.broadcast %14 : vector<2x1xf32> to vector<2x32xf32>
    %16 = arith.mulf %4, %15 : vector<2x32xf32>
    %c0_5 = arith.constant 0 : index
    %17 = memref.load %arg3[%c0_5] : memref<1xf32, #tpu.memory_space<smem>>
    %18 = math.exp %17 : f32
    %19 = arith.truncf %10 : vector<4x32xf32> to vector<4x32xbf16>
    %20 = arith.truncf %16 : vector<2x32xf32> to vector<2x32xbf16>
    %cst_6 = arith.constant dense<0.000000e+00> : vector<4x2xf32>
    %21 = tpu.matmul %19, %20, %cst_6 {dimension_numbers = #tpu.dot_dimension_numbers<[1], [1], [0], [0], [0, 0, 1, 0], [], []>} : vector<4x32xbf16>, vector<2x32xbf16>, vector<4x2xf32> -> vector<4x2xf32>
    %22 = vector.broadcast %18 : f32 to vector<4x2xf32>
    %23 = arith.mulf %22, %21 : vector<4x2xf32>
    %c0_7 = arith.constant 0 : index
    %c0_8 = arith.constant 0 : index
    %c0_9 = arith.constant 0 : index
    %24 = vector.load %arg4[%c0_7, %c0_8, %c0_9] : memref<1x4x2xf32, #tpu.memory_space<vmem>>, vector<1x4x2xf32>
    %25 = vector.shape_cast %24 : vector<1x4x2xf32> to vector<4x2xf32>
    %26 = vector.shape_cast %23 : vector<4x2xf32> to vector<1x4x2xf32>
    tpu.vector_store %arg4[%c0_7, %c0_8, %c0_9], %26 {strides = array<i32>} : memref<1x4x2xf32, #tpu.memory_space<vmem>>, vector<1x4x2xf32>,
    return
  }
  func.func @transform_0(%arg0: i32) -> (i32, i32, i32) {
    %c0_i32 = arith.constant 0 : i32
    %c0_i32_0 = arith.constant 0 : i32
    %c0_i32_1 = arith.constant 0 : i32
    return %arg0, %c0_i32, %c0_i32_0 : i32, i32, i32
  }
  func.func @transform_1(%arg0: i32) -> (i32, i32) {
    %c0_i32 = arith.constant 0 : i32
    %c0_i32_0 = arith.constant 0 : i32
    %c0_i32_1 = arith.constant 0 : i32
    return %c0_i32, %c0_i32_0 : i32, i32
  }
  func.func @transform_2(%arg0: i32) -> i32 {
    %c0_i32 = arith.constant 0 : i32
    %c0_i32_0 = arith.constant 0 : i32
    return %c0_i32 : i32
  }
  func.func @transform_3(%arg0: i32) -> (i32, i32, i32) {
    %c0_i32 = arith.constant 0 : i32
    %c0_i32_0 = arith.constant 0 : i32
    %c0_i32_1 = arith.constant 0 : i32
    return %arg0, %c0_i32, %c0_i32_0 : i32, i32, i32
  }
}

</mosaic_0001>

<llo_original>
// kernel: _lambda_.39
$region0: #{_lambda_.39}
  #allocation0 [shape = 'u32[]', space=smem, size = 0x4, offset = 0x4, fixed_abs, tag = 'smem constant byte address 0x4 - core index']
  #allocation1 [shape = 'u32[72,128]{1,0:T(1,128)}', space=vmem, size = 0x9000, scoped, tag = 'internal scratch']
  %s0 = inlined_call_operand.vmem [shape: bf16[2,3,4,8,8], index: 0, kind: input, shape index: {}]
  %s1 = inlined_call_operand.vmem [shape: bf16[2,4,8,8], index: 1, kind: output, shape index: {}]
  %s2 = sld [smem:[#allocation0]]
  $region78: #{_lambda_.39} parent=0
    _
  %s4 = ssub.s32 1, %s2
  %s5 = scalar_select 0, %s4, %s2
  $region1: #{_lambda_.39} parent=0
    #allocation2 [shape = 'u8[12288]{0}', space=vmem, size = 0x3000, scoped, tag = 'input window, operand 0']
    loop: start=0, step=1, limit=10
    $region2: #{_lambda_.39} parent=1 // loop_pre_header
      _
    $region3: #{_lambda_.39} parent=1 // loop_header
      %s7 = sphi 0, %s11
      %p8 = scmp.ge.s32.totalorder %s7, 10
      %s14 = sphi 0, %s26
      %s15 = sphi 0, %s22
      %s16 = sphi 0, %s14
      %s17 = sphi 0, %s15
      %s18 = sphi 0, %s16
      %s19 = sphi 0, %s17
      %s31 = sphi 0, %s33
      %s34 = sphi 0, %s31
      %s35 = sphi 0, %s34
      %s51 = sphi 0, %s35
      %s59 = sphi 0, %s61
      %s62 = sphi 0, %s59
      %s63 = sphi 0, %s62
      %s79 = sphi 0, %s63
    $region4: #{_lambda_.39} parent=1 // loop_header_branch
      %10 = sbr.rel (%p8) target = $region8
    $region5: #{_lambda_.39} parent=1 // loop_body
      %s12 = ssub.s32 %s7, 1
      %s13 = ssub.s32 %s7, 2
      %s20 = sadd.s32 1, %s15
      %p21 = scmp.ge.s32.totalorder %s20, 4
      %s22 = scalar_select %p21, 0, %s20
      %s23 = sadd.s32 1, %s14
      %s24 = scalar_select %p21, %s23, %s14
      %p25 = scmp.ge.s32.totalorder %s24, 2
      %s26 = scalar_select %p25, 0, %s24
      %s27 = ssub.s32 %s14, %s26
      %s28 = ssub.s32 %s15, %s22
      %s29 = sor.u32 %s27, %s28
      %p30 = scmp.eq.s32.totalorder %s29, 0
      %s32 = sadd.s32 %s31, 1
      %s33 = scalar_select %p30, %s31, %s32
      %p36 = pneg %p30
      %p37 = scmp.eq.s32.totalorder %s7, 7
      %p38 = por %p36, %p37
      %p39 = scmp.ne.s32.totalorder %s31, %s34
      %p40 = scmp.eq.s32.totalorder %s7, 0
      %p41 = por %p39, %p40
      %p42 = scmp.ne.s32.totalorder %s31, %s34
      %p43 = scmp.eq.s32.totalorder %s12, 7
      %p44 = por %p42, %p43
      %p45 = scmp.ne.s32.totalorder %s34, %s35
      %p46 = scmp.eq.s32.totalorder %s12, 0
      %p47 = por %p45, %p46
      %p48 = scmp.ne.s32.totalorder %s34, %s35
      %p49 = scmp.eq.s32.totalorder %s13, 7
      %p50 = por %p48, %p49
      %p52 = scmp.ne.s32.totalorder %s35, %s51
      %p53 = scmp.eq.s32.totalorder %s13, 0
      %p54 = por %p52, %p53
      %s55 = ssub.s32 %s14, %s26
      %s56 = ssub.s32 %s15, %s22
      %s57 = sor.u32 %s55, %s56
      %p58 = scmp.eq.s32.totalorder %s57, 0
      %s60 = sadd.s32 %s59, 1
      %s61 = scalar_select %p58, %s59, %s60
      %p64 = pneg %p58
      %p65 = scmp.eq.s32.totalorder %s7, 7
      %p66 = por %p64, %p65
      %p67 = scmp.ne.s32.totalorder %s59, %s62
      %p68 = scmp.eq.s32.totalorder %s7, 0
      %p69 = por %p67, %p68
      %p70 = scmp.ne.s32.totalorder %s59, %s62
      %p71 = scmp.eq.s32.totalorder %s12, 7
      %p72 = por %p70, %p71
      %p73 = scmp.ne.s32.totalorder %s62, %s63
      %p74 = scmp.eq.s32.totalorder %s12, 0
      %p75 = por %p73, %p74
      %p76 = scmp.ne.s32.totalorder %s62, %s63
      %p77 = scmp.eq.s32.totalorder %s13, 7
      %p78 = por %p76, %p77
      %p80 = scmp.ne.s32.totalorder %s63, %s79
      %p81 = scmp.eq.s32.totalorder %s13, 0
      %p82 = por %p80, %p81
      %p83 = scmp.le.s32.totalorder 1, %s7
      %p84 = scmp.lt.s32.totalorder %s7, 9
      %p85 = pnand %p83, %p84
      %p86 = pneg %p85
      // Predicated region
      $region9: #{_lambda_.39} parent=5 // pred_check
        _
      $region10: #{_lambda_.39} parent=5 // pred_check_branch
        %88 = sbr.rel (%p85) target = $region12
      $region11: #{_lambda_.39} parent=5 // pred_region
        %s89 = ssub.s32 %s7, 1
      $region12: #{_lambda_.39} parent=5 // pred_fallthru
        _
      %p90 = scmp.lt.s32.totalorder %s7, 8
      // Predicated region
      $region13: #{_lambda_.39} parent=5 // pred_check
        %p91 = pneg %p90
      $region14: #{_lambda_.39} parent=5 // pred_check_branch
        %93 = sbr.rel (%p91) target = $region16
      $region15: #{_lambda_.39} parent=5 // pred_region
        // Predicated region
        $region17: #{_lambda_.39} parent=15 // pred_check
          %p94 = pneg %p41
        $region18: #{_lambda_.39} parent=15 // pred_check_branch
          %96 = sbr.rel (%p94) target = $region20
        $region19: #{_lambda_.39} parent=15 // pred_region
          %s97 = sand.u32 %s31, 1
          %s98 = sand.u32 %s31, 1
          %s99 = smul.addr %s98, 12
          %s100 = scalar_lea.vmem [#allocation2], %s99
          %s101 = smul.addr %s14, 12
          %s102 = sadd.s32 %s15, %s101
          %s103 = smul.addr %s102, 4
          %s104 = scalar_lea.vmem %s0, %s103
          // Predicated region
          $region21: #{_lambda_.39} parent=19 // pred_check
            _
          $region22: #{_lambda_.39} parent=19 // pred_check_branch
            %106 = sbr.rel (0) target = $region24
          $region23: #{_lambda_.39} parent=19 // pred_region
            // Predicated region
            $region25: #{_lambda_.39} parent=23 // pred_check
              _
            $region26: #{_lambda_.39} parent=23 // pred_check_branch
              %108 = sbr.rel target = $region28
            $region27: #{_lambda_.39} parent=23 // pred_region
              // Predicated region
              $region40: #{_lambda_.39} parent=27 // pred_check
                _
              $region41: #{_lambda_.39} parent=27 // pred_check_branch
                %128 = sbr.rel (0) target = $region43
              $region42: #{_lambda_.39} parent=27 // pred_region
                loop: start=0, step=1, limit=1
                $region44: #{_lambda_.39} parent=42 // loop_pre_header
                  _
                $region45: #{_lambda_.39} parent=42 // loop_header
                  %s130 = sphi 0, %s134
                  %p131 = scmp.ge.s32.totalorder %s130, 1
                  %s135 = sphi %s104, %s104
                  %s136 = sphi %s100, %s100
                $region46: #{_lambda_.39} parent=42 // loop_header_branch
                  %133 = sbr.rel (%p131) target = $region50
                $region47: #{_lambda_.39} parent=42 // loop_body
                  _
                $region48: #{_lambda_.39} parent=42 // loop_footer
                  %s134 = sadd.s32 1, %s130
                $region49: #{_lambda_.39} parent=42 // loop_footer_branch
                  %129 = sbr.rel target = $region45
                $region50: #{_lambda_.39} parent=42 // loop_exit
                  _
                %s138 = ssub.s32 16, 1
                loop: start=0, step=1, limit=1
                $region51: #{_lambda_.39} parent=42 // loop_pre_header
                  _
                $region52: #{_lambda_.39} parent=42 // loop_header
                  %s140 = sphi 0, %s144
                  %p141 = scmp.ge.s32.totalorder %s140, 1
                  %s145 = sphi %s104, %s104
                  %s146 = sphi %s100, %s100
                $region53: #{_lambda_.39} parent=42 // loop_header_branch
                  %143 = sbr.rel (%p141) target = $region57
                $region54: #{_lambda_.39} parent=42 // loop_body
                  %v147 = vld [vmem:[%s145] sm:%s138]
                  %148 = vst [vmem:[%s146] sm:%s138] %v147
                  %v149 = vld [vmem:[%s145 + $0x10] sm:%s138]
                  %150 = vst [vmem:[%s146 + $0x4] sm:%s138] %v149
                  %v151 = vld [vmem:[%s145 + $0x20] sm:%s138]
                  %152 = vst [vmem:[%s146 + $0x8] sm:%s138] %v151
                $region55: #{_lambda_.39} parent=42 // loop_footer
                  %s144 = sadd.s32 1, %s140
                $region56: #{_lambda_.39} parent=42 // loop_footer_branch
                  %139 = sbr.rel target = $region52
                $region57: #{_lambda_.39} parent=42 // loop_exit
                  _
              $region43: #{_lambda_.39} parent=27 // pred_fallthru
                _
            $region28: #{_lambda_.39} parent=23 // pred_fallthru
              _
            // Predicated region
            $region29: #{_lambda_.39} parent=23 // pred_check
              _
            $region30: #{_lambda_.39} parent=23 // pred_check_branch
              %110 = sbr.rel (0) target = $region32
            $region31: #{_lambda_.39} parent=23 // pred_region
              %s112 = ssub.s32 16, 1
              loop: start=0, step=1, limit=1
              $region33: #{_lambda_.39} parent=31 // loop_pre_header
                _
              $region34: #{_lambda_.39} parent=31 // loop_header
                %s114 = sphi 0, %s118
                %p115 = scmp.ge.s32.totalorder %s114, 1
                %s119 = sphi %s104, %s104
                %s120 = sphi %s100, %s100
              $region35: #{_lambda_.39} parent=31 // loop_header_branch
                %117 = sbr.rel (%p115) target = $region39
              $region36: #{_lambda_.39} parent=31 // loop_body
                %v121 = vld [vmem:[%s119] sm:%s112]
                %122 = vst [vmem:[%s120] sm:%s112] %v121
                %v123 = vld [vmem:[%s119 + $0x10] sm:%s112]
                %124 = vst [vmem:[%s120 + $0x4] sm:%s112] %v123
                %v125 = vld [vmem:[%s119 + $0x20] sm:%s112]
                %126 = vst [vmem:[%s120 + $0x8] sm:%s112] %v125
              $region37: #{_lambda_.39} parent=31 // loop_footer
                %s118 = sadd.s32 1, %s114
              $region38: #{_lambda_.39} parent=31 // loop_footer_branch
                %113 = sbr.rel target = $region34
              $region39: #{_lambda_.39} parent=31 // loop_exit
                _
            $region32: #{_lambda_.39} parent=23 // pred_fallthru
              _
          $region24: #{_lambda_.39} parent=19 // pred_fallthru
            _
          %153 = vnop
        $region20: #{_lambda_.39} parent=15 // pred_fallthru
          _
      $region16: #{_lambda_.39} parent=5 // pred_fallthru
        _
      %p154 = scmp.le.s32.totalorder 1, %s7
      %p155 = scmp.lt.s32.totalorder %s7, 9
      %p156 = pnand %p154, %p155
      %p157 = pneg %p156
      // Predicated region
      $region58: #{_lambda_.39} parent=5 // pred_check
        _
      $region59: #{_lambda_.39} parent=5 // pred_check_branch
        %159 = sbr.rel (%p156) target = $region61
      $region60: #{_lambda_.39} parent=5 // pred_region
        %s160 = ssub.s32 %s7, 1
        %s161 = sand.u32 %s34, 1
        %s162 = sand.u32 %s34, 1
        %s163 = smul.addr %s162, 12
        %s164 = scalar_lea.vmem [#allocation2], %s163
        // Predicated region
        $region62: #{_lambda_.39} parent=60 // pred_check
          %p165 = pneg %p47
        $region63: #{_lambda_.39} parent=60 // pred_check_branch
          %167 = sbr.rel (%p165) target = $region65
        $region64: #{_lambda_.39} parent=60 // pred_region
          _
        $region65: #{_lambda_.39} parent=60 // pred_fallthru
          _
        %s168 = sand.u32 %s34, 1
        %s169 = sand.u32 %s34, 1
        %s170 = smul.addr %s169, 12
        %s171 = scalar_lea.vmem [#allocation2], %s170
        %p172 = pneg %p47
        %p173 = pneg %p44
        %p174 = pneg %p75
        %p175 = pneg %p72
        %p176 = scmp.lt.s32.totalorder %s16, 1
        %s177 = scalar_select %p176, %s16, 1
        %p178 = scmp.lt.s32.totalorder %s17, 3
        %s179 = scalar_select %p178, %s17, 3
        %s180 = smul.addr %s177, 4
        %s181 = sadd.s32 %s179, %s180
        %s182 = smul.addr %s181, 4
        %s183 = scalar_lea.vmem %s1, %s182
        %p184 = scmp.lt.s32.totalorder %s16, 1
        %s185 = scalar_select %p184, %s16, 1
        %p186 = scmp.lt.s32.totalorder %s17, 3
        %s187 = scalar_select %p186, %s17, 3
        %s188 = smul.addr %s185, 4
        %s189 = sadd.s32 %s187, %s188
        %s190 = smul.addr %s189, 4
        %s191 = scalar_lea.vmem %s1, %s190
        %v193 = vld [vmem:[%s164] sm:$0xf]
        %s194 = scalar_lea.vmem %s164, 4 [#allocation2]
        %v195 = vld [vmem:[%s194] sm:$0xf]
        %s196 = scalar_lea.vmem %s164, 8 [#allocation2]
        %v197 = vld [vmem:[%s196] sm:$0xf]
        %vm198 = vcmask 64512
        %v200 = vsel %vm198, %v193, 0
        %v203 = vsel %vm198, %v195, 0
        %205 = vmatpush.bf16.xpose.msra.mxu0 0
        %206 = vmatpush.bf16.xpose.msra.mxu0 0
        %207 = vmatpush.bf16.xpose.msra.mxu0 0
        %208 = vmatpush.bf16.xpose.msra.mxu0 0
        %209 = vmatpush.bf16.xpose.msra.mxu0 0
        %210 = vmatpush.bf16.xpose.msra.mxu0 0
        %211 = vmatpush.bf16.xpose.msra.mxu0 0
        %212 = vmatpush.bf16.xpose.msra.mxu0 %v203
        %213 = vmatmul.bf16.gmra.mxu0 %v200
        %v214 = vpop.f32.mrf.mxu0
        %v215 = vadd.f32 0.0, %v214
        %v216 = vpop.f32.mrf.mxu0
        %217 = vdwg.mxu0
        %v218 = vlaneseq
        %v219 = vshrl.u32 %v218, 7
        %v220 = vlaneseq
        %v221 = vand.u32 %v220, 127
        %vm222 = vcmp.le.s32.totalorder %v221, %v219
        %v223 = vsel %vm222, %v215, -inf
        %v224 = vsel %vm198, %v223, -inf
        %225 = vmax.xlane.f32.xlu0 %v224
        %v226 = vpop.xlane.xlu0 %225
        %v227 = vsub.f32 %v223, %v226
        %v228 = vmul.f32 %v227, 1.442695
        %v229 = vpow.pop %v228
        %v230 = vsel %vm198, %v229, 0.0
        %231 = vadd.xlane.f32.xlu0 %v230
        %v232 = vpop.xlane.xlu0 %231
        %v233 = vrcp.pop %v232
        %v234 = vmul.f32 %v229, %v233
        %v235 = vpack.c.bf16 %v234, %v234
        %v237 = vsel %vm198, %v235, 0
        %vm239 = vcmask 1043456
        %v241 = vsel %vm239, %v197, 0
        %243 = vmatpush.bf16.msra.mxu0 0
        %244 = vmatpush.bf16.msra.mxu0 0
        %245 = vmatpush.bf16.msra.mxu0 0
        %246 = vmatpush.bf16.msra.mxu0 0
        %247 = vmatpush.bf16.msra.mxu0 0
        %248 = vmatpush.bf16.msra.mxu0 0
        %249 = vmatpush.bf16.msra.mxu0 0
        %250 = vmatpush.bf16.msra.mxu0 %v241
        %251 = vmatmul.bf16.gmra.mxu0 %v237
        %v252 = vpop.f32.mrf.mxu0
        %v253 = vadd.f32 0.0, %v252
        %v254 = vpop.f32.mrf.mxu0
        %255 = vdwg.mxu0
        %v256 = vpack.c.bf16 %v253, %v253
        %vm257 = vcmask 60416
        %258 = vst.msk [vmem:[%s191] sm:$0xf] %vm257, %v256
        %p259 = scmp.lt.s32.totalorder %s16, 1
        %s260 = scalar_select %p259, %s16, 1
        %p261 = scmp.lt.s32.totalorder %s17, 3
        %s262 = scalar_select %p261, %s17, 3
        %s263 = smul.addr %s260, 4
        %s264 = sadd.s32 %s262, %s263
        %s265 = smul.addr %s264, 4
        %s266 = scalar_lea.vmem %s1, %s265
        // Predicated region
        $region66: #{_lambda_.39} parent=60 // pred_check
          %p267 = pneg %p72
        $region67: #{_lambda_.39} parent=60 // pred_check_branch
          %269 = sbr.rel (%p267) target = $region69
        $region68: #{_lambda_.39} parent=60 // pred_region
          _
        $region69: #{_lambda_.39} parent=60 // pred_fallthru
          _
      $region61: #{_lambda_.39} parent=5 // pred_fallthru
        _
      %p270 = scmp.le.s32.totalorder 2, %s7
      // Predicated region
      $region70: #{_lambda_.39} parent=5 // pred_check
        %p271 = pneg %p270
      $region71: #{_lambda_.39} parent=5 // pred_check_branch
        %273 = sbr.rel (%p271) target = $region73
      $region72: #{_lambda_.39} parent=5 // pred_region
        %s274 = ssub.s32 %s7, 2
        // Predicated region
        $region74: #{_lambda_.39} parent=72 // pred_check
          %p275 = pneg %p78
        $region75: #{_lambda_.39} parent=72 // pred_check_branch
          %277 = sbr.rel (%p275) target = $region77
        $region76: #{_lambda_.39} parent=72 // pred_region
          %p278 = scmp.lt.s32.totalorder %s18, 1
          %s279 = scalar_select %p278, %s18, 1
          %p280 = scmp.lt.s32.totalorder %s19, 3
          %s281 = scalar_select %p280, %s19, 3
          %s282 = smul.addr %s279, 4
          %s283 = sadd.s32 %s281, %s282
          %s284 = smul.addr %s283, 4
          %s285 = scalar_lea.vmem %s1, %s284
        $region77: #{_lambda_.39} parent=72 // pred_fallthru
          _
      $region73: #{_lambda_.39} parent=5 // pred_fallthru
        _
    $region6: #{_lambda_.39} parent=1 // loop_footer
      %s11 = sadd.s32 1, %s7
    $region7: #{_lambda_.39} parent=1 // loop_footer_branch
      %6 = sbr.rel target = $region3
    $region8: #{_lambda_.39} parent=1 // loop_exit
      _

// kernel: _lambda_.38
$region0: #{_lambda_.38}
  #allocation0 [shape = 'u32[]', space=smem, size = 0x4, offset = 0x4, fixed_abs, tag = 'smem constant byte address 0x4 - core index']
  #allocation1 [shape = 'u32[72,128]{1,0:T(1,128)}', space=vmem, size = 0x9000, scoped, tag = 'internal scratch']
  #allocation2 [shape = 'bf16[16,32]{1,0:T(8,128)(2,1)}', space=vmem, size = 0x1000, scoped, tag = 'scratch operand']
  %s0 = inlined_call_operand.vmem [shape: bf16[16,32], index: 0, kind: input, shape index: {}]
  %s1 = inlined_call_operand.vmem [shape: f32[1,32], index: 1, kind: input, shape index: {}]
  %s2 = inlined_call_operand.vmem [shape: f32[1,32], index: 2, kind: input, shape index: {}]
  %s3 = inlined_call_operand.vmem [shape: bf16[32,96], index: 3, kind: input, shape index: {}]
  %s4 = inlined_call_operand.vmem [shape: f32[1,96], index: 4, kind: input, shape index: {}]
  %s5 = inlined_call_operand.vmem [shape: bf16[16,96], index: 5, kind: output, shape index: {}]
  %s6 = sld [smem:[#allocation0]]
  $region34: #{_lambda_.38} parent=0
    _
  %s8 = ssub.s32 1, %s6
  %s9 = scalar_select 0, %s8, %s6
  // Predicated region
  $region2: #{_lambda_.38} parent=0 // pred_check
    _
  $region3: #{_lambda_.38} parent=0 // pred_check_branch
    %11 = sbr.rel (0) target = $region5
  $region4: #{_lambda_.38} parent=0 // pred_region
    _
  $region5: #{_lambda_.38} parent=0 // pred_fallthru
    _
  // Predicated region
  $region6: #{_lambda_.38} parent=0 // pred_check
    _
  $region7: #{_lambda_.38} parent=0 // pred_check_branch
    %13 = sbr.rel (0) target = $region9
  $region8: #{_lambda_.38} parent=0 // pred_region
    _
  $region9: #{_lambda_.38} parent=0 // pred_fallthru
    _
  // Predicated region
  $region10: #{_lambda_.38} parent=0 // pred_check
    _
  $region11: #{_lambda_.38} parent=0 // pred_check_branch
    %15 = sbr.rel (0) target = $region13
  $region12: #{_lambda_.38} parent=0 // pred_region
    _
  $region13: #{_lambda_.38} parent=0 // pred_fallthru
    _
  // Predicated region
  $region14: #{_lambda_.38} parent=0 // pred_check
    _
  $region15: #{_lambda_.38} parent=0 // pred_check_branch
    %17 = sbr.rel (0) target = $region17
  $region16: #{_lambda_.38} parent=0 // pred_region
    _
  $region17: #{_lambda_.38} parent=0 // pred_fallthru
    _
  // Predicated region
  $region18: #{_lambda_.38} parent=0 // pred_check
    _
  $region19: #{_lambda_.38} parent=0 // pred_check_branch
    %19 = sbr.rel (0) target = $region21
  $region20: #{_lambda_.38} parent=0 // pred_region
    _
  $region21: #{_lambda_.38} parent=0 // pred_fallthru
    _
  %p21 = scmp.eq.s32.totalorder 0, 0
  // Predicated region
  $region22: #{_lambda_.38} parent=0 // pred_check
    %p22 = pneg %p21
  $region23: #{_lambda_.38} parent=0 // pred_check_branch
    %24 = sbr.rel (%p22) target = $region25
  $region24: #{_lambda_.38} parent=0 // pred_region
    %v25 = vld [vmem:[%s0] sm:$0xf]
    %v26 = vld [vmem:[%s0 + $0x4] sm:$0xf]
    %v27 = vunpack.c.l.bf16 %v25
    %v28 = vunpack.c.l.bf16 %v26
    %vm29 = vcmask 261120
    %v30 = vsel %vm29, %v27, 0.0
    %31 = vadd.xlane.f32.xlu0 %v30
    %v32 = vpop.xlane.xlu0 %31
    %v33 = vsel %vm29, %v28, 0.0
    %34 = vadd.xlane.f32.xlu0 %v33
    %v35 = vpop.xlane.xlu0 %34
    %v36 = vrcp.pop 32.0
    %v37 = vmul.f32 32.0, %v36
    %v38 = vsub.f32 1.0, %v37
    %v39 = vmul.f32 %v36, %v38
    %v40 = vadd.f32 %v36, %v39
    %vm41 = vweird.f32 %v36
    %v42 = vsel %vm41, %v36, %v40
    %v43 = vmul.f32 %v32, %v42
    %v44 = vmul.f32 %v35, %v42
    %v45 = vsub.f32 %v27, %v43
    %v46 = vsub.f32 %v28, %v44
    %v47 = vmul.f32 %v45, %v45
    %v48 = vmul.f32 %v46, %v46
    %v49 = vsel %vm29, %v47, 0.0
    %50 = vadd.xlane.f32.xlu0 %v49
    %v51 = vpop.xlane.xlu0 %50
    %v52 = vsel %vm29, %v48, 0.0
    %53 = vadd.xlane.f32.xlu0 %v52
    %v54 = vpop.xlane.xlu0 %53
    %v55 = vmul.f32 %v51, %v42
    %v56 = vmul.f32 %v54, %v42
    %v57 = vadd.f32 %v55, 1e-05
    %v58 = vadd.f32 %v56, 1e-05
    %v59 = vrsqrt.pop %v57
    %v60 = vmul.f32 %v59, %v57
    %v61 = vmul.f32 %v60, %v59
    %v62 = vmul.f32 0.5, %v61
    %v63 = vsub.f32 1.5, %v62
    %v64 = vmul.f32 %v59, %v63
    %vm65 = vweird.f32 %v57
    %vm66 = vweird.f32 %v59
    %vm67 = vmor %vm65, %vm66
    %v68 = vsel %vm67, %v59, %v64
    %v69 = vrsqrt.pop %v58
    %v70 = vmul.f32 %v69, %v58
    %v71 = vmul.f32 %v70, %v69
    %v72 = vmul.f32 0.5, %v71
    %v73 = vsub.f32 1.5, %v72
    %v74 = vmul.f32 %v69, %v73
    %vm75 = vweird.f32 %v58
    %vm76 = vweird.f32 %v69
    %vm77 = vmor %vm75, %vm76
    %v78 = vsel %vm77, %v69, %v74
    %v79 = vmul.f32 %v45, %v68
    %v80 = vmul.f32 %v46, %v78
    %v81 = vld [vmem:[%s1] sm:$0x1]
    %v83 = vperm.slane %v81, 0
    %v85 = vmul.f32 %v79, %v83
    %v86 = vmul.f32 %v80, %v83
    %v87 = vld [vmem:[%s2] sm:$0x1]
    %v89 = vperm.slane %v87, 0
    %v91 = vadd.f32 %v85, %v89
    %v92 = vadd.f32 %v86, %v89
    %v93 = vpack.c.bf16 %v91, %v91
    %v94 = vpack.c.bf16 %v92, %v92
    %vm95 = vcmask 257024
    %96 = vst.msk [vmem:[#allocation2] sm:$0xf] %vm95, %v93
    %97 = vst.msk [vmem:[#allocation2 + $0x4] sm:$0xf] %vm95, %v94
  $region25: #{_lambda_.38} parent=0 // pred_fallthru
    _
  %v98 = vld [vmem:[#allocation2] sm:$0xf]
  %v99 = vld [vmem:[#allocation2 + $0x4] sm:$0xf]
  %v100 = vld [vmem:[%s3] sm:$0xf]
  %v101 = vld [vmem:[%s3 + $0x4] sm:$0xf]
  %v102 = vld [vmem:[%s3 + $0x8] sm:$0xf]
  %v103 = vld [vmem:[%s3 + $0xc] sm:$0xf]
  %v104 = vld [vmem:[%s4] sm:$0x1]
  %v106 = vperm.slane %v104, 0
  %v110 = vunpack.c.l.b16 %v98
  %v111 = vunpack.c.l.b16 %v99
  %v112 = vpack.c.b16 %v111, %v110
  %v117 = vunpack.c.l.b16 %v100
  %v118 = vunpack.c.l.b16 %v101
  %v119 = vunpack.c.l.b16 %v102
  %v120 = vunpack.c.l.b16 %v103
  %v121 = vpack.c.b16 %v118, %v117
  %v122 = vpack.c.b16 %v120, %v119
  %vm125 = vcmask 261120
  %v127 = vsel %vm125, %v112, 0
  %129 = vmatpush.bf16.msra.mxu0 0
  %130 = vmatpush.bf16.msra.mxu0 0
  %131 = vmatpush.bf16.msra.mxu0 0
  %132 = vmatpush.bf16.msra.mxu0 0
  %133 = vmatpush.bf16.msra.mxu0 0
  %134 = vmatpush.bf16.msra.mxu0 0
  %135 = vmatpush.bf16.msra.mxu0 %v122
  %136 = vmatpush.bf16.msra.mxu0 %v121
  %137 = vmatmul.bf16.gmra.mxu0 %v127
  %v138 = vpop.f32.mrf.mxu0
  %v139 = vadd.f32 %v106, %v138
  %v140 = vpop.f32.mrf.mxu0
  %v141 = vadd.f32 %v106, %v140
  %142 = vdwg.mxu0
  %v143 = vpack.c.bf16 %v139, %v139
  %v144 = vpack.c.bf16 %v141, %v141
  %vm145 = vcmask 781312
  %146 = vst.msk [vmem:[%s5] sm:$0xf] %vm145, %v143
  %147 = vst.msk [vmem:[%s5 + $0x4] sm:$0xf] %vm145, %v144
  // Predicated region
  $region26: #{_lambda_.38} parent=0 // pred_check
    _
  $region27: #{_lambda_.38} parent=0 // pred_check_branch
    %149 = sbr.rel (0) target = $region29
  $region28: #{_lambda_.38} parent=0 // pred_region
    _
  $region29: #{_lambda_.38} parent=0 // pred_fallthru
    _
  // Predicated region
  $region30: #{_lambda_.38} parent=0 // pred_check
    _
  $region31: #{_lambda_.38} parent=0 // pred_check_branch
    %151 = sbr.rel (0) target = $region33
  $region32: #{_lambda_.38} parent=0 // pred_region
    _
  $region33: #{_lambda_.38} parent=0 // pred_fallthru
    _

// kernel: _lambda_.40
$region0: #{_lambda_.40}
  #allocation0 [shape = 'u32[]', space=smem, size = 0x4, offset = 0x4, fixed_abs, tag = 'smem constant byte address 0x4 - core index']
  #allocation1 [shape = 'u32[72,128]{1,0:T(1,128)}', space=vmem, size = 0x9000, scoped, tag = 'internal scratch']
  #allocation2 [shape = 'f32[16,32]{1,0:T(8,128)}', space=vmem, size = 0x2000, scoped, tag = 'scratch operand']
  %s0 = inlined_call_operand.vmem [shape: bf16[16,32], index: 0, kind: input, shape index: {}]
  %s1 = inlined_call_operand.vmem [shape: bf16[32,32], index: 1, kind: input, shape index: {}]
  %s2 = inlined_call_operand.vmem [shape: f32[1,32], index: 2, kind: input, shape index: {}]
  %s3 = inlined_call_operand.vmem [shape: bf16[16,32], index: 3, kind: input, shape index: {}]
  %s4 = inlined_call_operand.vmem [shape: bf16[16,32], index: 4, kind: output, shape index: {}]
  %s5 = sld [smem:[#allocation0]]
  $region34: #{_lambda_.40} parent=0
    _
  %s7 = ssub.s32 1, %s5
  %s8 = scalar_select 0, %s7, %s5
  // Predicated region
  $region2: #{_lambda_.40} parent=0 // pred_check
    _
  $region3: #{_lambda_.40} parent=0 // pred_check_branch
    %10 = sbr.rel (0) target = $region5
  $region4: #{_lambda_.40} parent=0 // pred_region
    _
  $region5: #{_lambda_.40} parent=0 // pred_fallthru
    _
  // Predicated region
  $region6: #{_lambda_.40} parent=0 // pred_check
    _
  $region7: #{_lambda_.40} parent=0 // pred_check_branch
    %12 = sbr.rel (0) target = $region9
  $region8: #{_lambda_.40} parent=0 // pred_region
    _
  $region9: #{_lambda_.40} parent=0 // pred_fallthru
    _
  // Predicated region
  $region10: #{_lambda_.40} parent=0 // pred_check
    _
  $region11: #{_lambda_.40} parent=0 // pred_check_branch
    %14 = sbr.rel (0) target = $region13
  $region12: #{_lambda_.40} parent=0 // pred_region
    _
  $region13: #{_lambda_.40} parent=0 // pred_fallthru
    _
  // Predicated region
  $region14: #{_lambda_.40} parent=0 // pred_check
    _
  $region15: #{_lambda_.40} parent=0 // pred_check_branch
    %16 = sbr.rel (0) target = $region17
  $region16: #{_lambda_.40} parent=0 // pred_region
    _
  $region17: #{_lambda_.40} parent=0 // pred_fallthru
    _
  %p18 = scmp.eq.s32.totalorder 0, 0
  // Predicated region
  $region18: #{_lambda_.40} parent=0 // pred_check
    %p19 = pneg %p18
  $region19: #{_lambda_.40} parent=0 // pred_check_branch
    %21 = sbr.rel (%p19) target = $region21
  $region20: #{_lambda_.40} parent=0 // pred_region
    %vm22 = vcmask 261120
    %23 = vst.msk [vmem:[#allocation2] sm:$0xff] %vm22, 0.0
    %24 = vst.msk [vmem:[#allocation2 + $0x8] sm:$0xff] %vm22, 0.0
  $region21: #{_lambda_.40} parent=0 // pred_fallthru
    _
  %v25 = vld [vmem:[#allocation2] sm:$0xff]
  %v26 = vld [vmem:[#allocation2 + $0x8] sm:$0xff]
  %v27 = vld [vmem:[%s0] sm:$0xf]
  %v28 = vld [vmem:[%s0 + $0x4] sm:$0xf]
  %v29 = vld [vmem:[%s1] sm:$0xf]
  %v30 = vld [vmem:[%s1 + $0x4] sm:$0xf]
  %v31 = vld [vmem:[%s1 + $0x8] sm:$0xf]
  %v32 = vld [vmem:[%s1 + $0xc] sm:$0xf]
  %v35 = vunpack.c.l.b16 %v27
  %v36 = vunpack.c.l.b16 %v28
  %v37 = vpack.c.b16 %v36, %v35
  %v42 = vunpack.c.l.b16 %v29
  %v43 = vunpack.c.l.b16 %v30
  %v44 = vunpack.c.l.b16 %v31
  %v45 = vunpack.c.l.b16 %v32
  %v46 = vpack.c.b16 %v43, %v42
  %v47 = vpack.c.b16 %v45, %v44
  %vm50 = vcmask 261120
  %v52 = vsel %vm50, %v37, 0
  %54 = vmatpush.bf16.msra.mxu0 0
  %55 = vmatpush.bf16.msra.mxu0 0
  %56 = vmatpush.bf16.msra.mxu0 0
  %57 = vmatpush.bf16.msra.mxu0 0
  %58 = vmatpush.bf16.msra.mxu0 0
  %59 = vmatpush.bf16.msra.mxu0 0
  %60 = vmatpush.bf16.msra.mxu0 %v47
  %61 = vmatpush.bf16.msra.mxu0 %v46
  %62 = vmatmul.bf16.gmra.mxu0 %v52
  %v63 = vpop.f32.mrf.mxu0
  %v64 = vadd.f32 0.0, %v63
  %v65 = vpop.f32.mrf.mxu0
  %v66 = vadd.f32 0.0, %v65
  %67 = vdwg.mxu0
  %v68 = vadd.f32 %v25, %v64
  %v69 = vadd.f32 %v26, %v66
  %70 = vst.msk [vmem:[#allocation2] sm:$0xff] %vm50, %v68
  %71 = vst.msk [vmem:[#allocation2 + $0x8] sm:$0xff] %vm50, %v69
  // Predicated region
  $region22: #{_lambda_.40} parent=0 // pred_check
    %p72 = pneg %p18
  $region23: #{_lambda_.40} parent=0 // pred_check_branch
    %74 = sbr.rel (%p72) target = $region25
  $region24: #{_lambda_.40} parent=0 // pred_region
    %v75 = vld [vmem:[#allocation2] sm:$0xff]
    %v76 = vld [vmem:[#allocation2 + $0x8] sm:$0xff]
    %v77 = vld [vmem:[%s2] sm:$0x1]
    %v79 = vperm.slane %v77, 0
    %v81 = vadd.f32 %v75, %v79
    %v82 = vadd.f32 %v76, %v79
    %v83 = vld [vmem:[%s3] sm:$0xf]
    %v84 = vld [vmem:[%s3 + $0x4] sm:$0xf]
    %v85 = vunpack.c.l.bf16 %v83
    %v86 = vunpack.c.l.bf16 %v84
    %v87 = vadd.f32 %v81, %v85
    %v88 = vadd.f32 %v82, %v86
    %v89 = vpack.c.bf16 %v87, %v87
    %v90 = vpack.c.bf16 %v88, %v88
    %vm91 = vcmask 257024
    %92 = vst.msk [vmem:[%s4] sm:$0xf] %vm91, %v89
    %93 = vst.msk [vmem:[%s4 + $0x4] sm:$0xf] %vm91, %v90
  $region25: #{_lambda_.40} parent=0 // pred_fallthru
    _
  // Predicated region
  $region26: #{_lambda_.40} parent=0 // pred_check
    _
  $region27: #{_lambda_.40} parent=0 // pred_check_branch
    %95 = sbr.rel (0) target = $region29
  $region28: #{_lambda_.40} parent=0 // pred_region
    _
  $region29: #{_lambda_.40} parent=0 // pred_fallthru
    _
  // Predicated region
  $region30: #{_lambda_.40} parent=0 // pred_check
    _
  $region31: #{_lambda_.40} parent=0 // pred_check_branch
    %97 = sbr.rel (0) target = $region33
  $region32: #{_lambda_.40} parent=0 // pred_region
    _
  $region33: #{_lambda_.40} parent=0 // pred_fallthru
    _

// kernel: _lambda_.41
$region0: #{_lambda_.41}
  #allocation0 [shape = 'u32[]', space=smem, size = 0x4, offset = 0x4, fixed_abs, tag = 'smem constant byte address 0x4 - core index']
  #allocation1 [shape = 'u32[72,128]{1,0:T(1,128)}', space=vmem, size = 0x9000, scoped, tag = 'internal scratch']
  #allocation2 [shape = 'bf16[16,32]{1,0:T(8,128)(2,1)}', space=vmem, size = 0x1000, scoped, tag = 'scratch operand']
  %s0 = inlined_call_operand.vmem [shape: bf16[16,32], index: 0, kind: input, shape index: {}]
  %s1 = inlined_call_operand.vmem [shape: f32[1,32], index: 1, kind: input, shape index: {}]
  %s2 = inlined_call_operand.vmem [shape: f32[1,32], index: 2, kind: input, shape index: {}]
  %s3 = inlined_call_operand.vmem [shape: bf16[32,128], index: 3, kind: input, shape index: {}]
  %s4 = inlined_call_operand.vmem [shape: f32[1,128], index: 4, kind: input, shape index: {}]
  %s5 = inlined_call_operand.vmem [shape: bf16[16,128], index: 5, kind: output, shape index: {}]
  %s6 = sld [smem:[#allocation0]]
  $region34: #{_lambda_.41} parent=0
    _
  %s8 = ssub.s32 1, %s6
  %s9 = scalar_select 0, %s8, %s6
  // Predicated region
  $region2: #{_lambda_.41} parent=0 // pred_check
    _
  $region3: #{_lambda_.41} parent=0 // pred_check_branch
    %11 = sbr.rel (0) target = $region5
  $region4: #{_lambda_.41} parent=0 // pred_region
    _
  $region5: #{_lambda_.41} parent=0 // pred_fallthru
    _
  // Predicated region
  $region6: #{_lambda_.41} parent=0 // pred_check
    _
  $region7: #{_lambda_.41} parent=0 // pred_check_branch
    %13 = sbr.rel (0) target = $region9
  $region8: #{_lambda_.41} parent=0 // pred_region
    _
  $region9: #{_lambda_.41} parent=0 // pred_fallthru
    _
  // Predicated region
  $region10: #{_lambda_.41} parent=0 // pred_check
    _
  $region11: #{_lambda_.41} parent=0 // pred_check_branch
    %15 = sbr.rel (0) target = $region13
  $region12: #{_lambda_.41} parent=0 // pred_region
    _
  $region13: #{_lambda_.41} parent=0 // pred_fallthru
    _
  // Predicated region
  $region14: #{_lambda_.41} parent=0 // pred_check
    _
  $region15: #{_lambda_.41} parent=0 // pred_check_branch
    %17 = sbr.rel (0) target = $region17
  $region16: #{_lambda_.41} parent=0 // pred_region
    _
  $region17: #{_lambda_.41} parent=0 // pred_fallthru
    _
  // Predicated region
  $region18: #{_lambda_.41} parent=0 // pred_check
    _
  $region19: #{_lambda_.41} parent=0 // pred_check_branch
    %19 = sbr.rel (0) target = $region21
  $region20: #{_lambda_.41} parent=0 // pred_region
    _
  $region21: #{_lambda_.41} parent=0 // pred_fallthru
    _
  %p21 = scmp.eq.s32.totalorder 0, 0
  // Predicated region
  $region22: #{_lambda_.41} parent=0 // pred_check
    %p22 = pneg %p21
  $region23: #{_lambda_.41} parent=0 // pred_check_branch
    %24 = sbr.rel (%p22) target = $region25
  $region24: #{_lambda_.41} parent=0 // pred_region
    %v25 = vld [vmem:[%s0] sm:$0xf]
    %v26 = vld [vmem:[%s0 + $0x4] sm:$0xf]
    %v27 = vunpack.c.l.bf16 %v25
    %v28 = vunpack.c.l.bf16 %v26
    %vm29 = vcmask 261120
    %v30 = vsel %vm29, %v27, 0.0
    %31 = vadd.xlane.f32.xlu0 %v30
    %v32 = vpop.xlane.xlu0 %31
    %v33 = vsel %vm29, %v28, 0.0
    %34 = vadd.xlane.f32.xlu0 %v33
    %v35 = vpop.xlane.xlu0 %34
    %v36 = vrcp.pop 32.0
    %v37 = vmul.f32 32.0, %v36
    %v38 = vsub.f32 1.0, %v37
    %v39 = vmul.f32 %v36, %v38
    %v40 = vadd.f32 %v36, %v39
    %vm41 = vweird.f32 %v36
    %v42 = vsel %vm41, %v36, %v40
    %v43 = vmul.f32 %v32, %v42
    %v44 = vmul.f32 %v35, %v42
    %v45 = vsub.f32 %v27, %v43
    %v46 = vsub.f32 %v28, %v44
    %v47 = vmul.f32 %v45, %v45
    %v48 = vmul.f32 %v46, %v46
    %v49 = vsel %vm29, %v47, 0.0
    %50 = vadd.xlane.f32.xlu0 %v49
    %v51 = vpop.xlane.xlu0 %50
    %v52 = vsel %vm29, %v48, 0.0
    %53 = vadd.xlane.f32.xlu0 %v52
    %v54 = vpop.xlane.xlu0 %53
    %v55 = vmul.f32 %v51, %v42
    %v56 = vmul.f32 %v54, %v42
    %v57 = vadd.f32 %v55, 1e-05
    %v58 = vadd.f32 %v56, 1e-05
    %v59 = vrsqrt.pop %v57
    %v60 = vmul.f32 %v59, %v57
    %v61 = vmul.f32 %v60, %v59
    %v62 = vmul.f32 0.5, %v61
    %v63 = vsub.f32 1.5, %v62
    %v64 = vmul.f32 %v59, %v63
    %vm65 = vweird.f32 %v57
    %vm66 = vweird.f32 %v59
    %vm67 = vmor %vm65, %vm66
    %v68 = vsel %vm67, %v59, %v64
    %v69 = vrsqrt.pop %v58
    %v70 = vmul.f32 %v69, %v58
    %v71 = vmul.f32 %v70, %v69
    %v72 = vmul.f32 0.5, %v71
    %v73 = vsub.f32 1.5, %v72
    %v74 = vmul.f32 %v69, %v73
    %vm75 = vweird.f32 %v58
    %vm76 = vweird.f32 %v69
    %vm77 = vmor %vm75, %vm76
    %v78 = vsel %vm77, %v69, %v74
    %v79 = vmul.f32 %v45, %v68
    %v80 = vmul.f32 %v46, %v78
    %v81 = vld [vmem:[%s1] sm:$0x1]
    %v83 = vperm.slane %v81, 0
    %v85 = vmul.f32 %v79, %v83
    %v86 = vmul.f32 %v80, %v83
    %v87 = vld [vmem:[%s2] sm:$0x1]
    %v89 = vperm.slane %v87, 0
    %v91 = vadd.f32 %v85, %v89
    %v92 = vadd.f32 %v86, %v89
    %v93 = vpack.c.bf16 %v91, %v91
    %v94 = vpack.c.bf16 %v92, %v92
    %vm95 = vcmask 257024
    %96 = vst.msk [vmem:[#allocation2] sm:$0xf] %vm95, %v93
    %97 = vst.msk [vmem:[#allocation2 + $0x4] sm:$0xf] %vm95, %v94
  $region25: #{_lambda_.41} parent=0 // pred_fallthru
    _
  %v98 = vld [vmem:[#allocation2] sm:$0xf]
  %v99 = vld [vmem:[#allocation2 + $0x4] sm:$0xf]
  %v100 = vld [vmem:[%s3] sm:$0xf]
  %v101 = vld [vmem:[%s3 + $0x4] sm:$0xf]
  %v102 = vld [vmem:[%s3 + $0x8] sm:$0xf]
  %v103 = vld [vmem:[%s3 + $0xc] sm:$0xf]
  %v104 = vld [vmem:[%s4] sm:$0x1]
  %v106 = vperm.slane %v104, 0
  %v110 = vunpack.c.l.b16 %v98
  %v111 = vunpack.c.l.b16 %v99
  %v112 = vpack.c.b16 %v111, %v110
  %v117 = vunpack.c.l.b16 %v100
  %v118 = vunpack.c.l.b16 %v101
  %v119 = vunpack.c.l.b16 %v102
  %v120 = vunpack.c.l.b16 %v103
  %v121 = vpack.c.b16 %v118, %v117
  %v122 = vpack.c.b16 %v120, %v119
  %vm125 = vcmask 261120
  %v127 = vsel %vm125, %v112, 0
  %129 = vmatpush.bf16.msra.mxu0 0
  %130 = vmatpush.bf16.msra.mxu0 0
  %131 = vmatpush.bf16.msra.mxu0 0
  %132 = vmatpush.bf16.msra.mxu0 0
  %133 = vmatpush.bf16.msra.mxu0 0
  %134 = vmatpush.bf16.msra.mxu0 0
  %135 = vmatpush.bf16.msra.mxu0 %v122
  %136 = vmatpush.bf16.msra.mxu0 %v121
  %137 = vmatmul.bf16.gmra.mxu0 %v127
  %v138 = vpop.f32.mrf.mxu0
  %v139 = vadd.f32 %v106, %v138
  %v140 = vpop.f32.mrf.mxu0
  %v141 = vadd.f32 %v106, %v140
  %142 = vdwg.mxu0
  %v143 = vmul.f32 %v139, 1.702
  %v144 = vmul.f32 %v141, 1.702
  %v145 = vxor.u32 %v143, 2147483648
  %v146 = vxor.u32 %v144, 2147483648
  %v147 = vmul.f32 %v145, 1.442695
  %v148 = vpow.pop %v147
  %v149 = vmul.f32 %v146, 1.442695
  %v150 = vpow.pop %v149
  %v151 = vadd.f32 %v148, 1.0
  %v152 = vadd.f32 %v150, 1.0
  %v153 = vrcp.pop %v151
  %v154 = vmul.f32 %v151, %v153
  %v155 = vsub.f32 1.0, %v154
  %v156 = vmul.f32 %v153, %v155
  %v157 = vadd.f32 %v153, %v156
  %vm158 = vweird.f32 %v151
  %vm159 = vweird.f32 %v153
  %vm160 = vmor %vm158, %vm159
  %v161 = vsel %vm160, %v153, %v157
  %v162 = vand.u32 2147483647, %v151
  %vm163 = vcmp.eq.f32.partialorder %v162, 8.507059e+37
  %v164 = vand.u32 %v151, 2147483648
  %v165 = vor.u32 1.1754944e-38, %v164
  %v166 = vsel %vm163, %v165, %v161
  %v167 = vmul.f32 1.0, %v166
  %v168 = vrcp.pop %v152
  %v169 = vmul.f32 %v152, %v168
  %v170 = vsub.f32 1.0, %v169
  %v171 = vmul.f32 %v168, %v170
  %v172 = vadd.f32 %v168, %v171
  %vm173 = vweird.f32 %v152
  %vm174 = vweird.f32 %v168
  %vm175 = vmor %vm173, %vm174
  %v176 = vsel %vm175, %v168, %v172
  %v177 = vand.u32 2147483647, %v152
  %vm178 = vcmp.eq.f32.partialorder %v177, 8.507059e+37
  %v179 = vand.u32 %v152, 2147483648
  %v180 = vor.u32 1.1754944e-38, %v179
  %v181 = vsel %vm178, %v180, %v176
  %v182 = vmul.f32 1.0, %v181
  %v183 = vmul.f32 %v139, %v167
  %v184 = vmul.f32 %v141, %v182
  %v185 = vpack.c.bf16 %v183, %v183
  %v186 = vpack.c.bf16 %v184, %v184
  %187 = vst [vmem:[%s5] sm:$0xf] %v185
  %188 = vst [vmem:[%s5 + $0x4] sm:$0xf] %v186
  // Predicated region
  $region26: #{_lambda_.41} parent=0 // pred_check
    _
  $region27: #{_lambda_.41} parent=0 // pred_check_branch
    %190 = sbr.rel (0) target = $region29
  $region28: #{_lambda_.41} parent=0 // pred_region
    _
  $region29: #{_lambda_.41} parent=0 // pred_fallthru
    _
  // Predicated region
  $region30: #{_lambda_.41} parent=0 // pred_check
    _
  $region31: #{_lambda_.41} parent=0 // pred_check_branch
    %192 = sbr.rel (0) target = $region33
  $region32: #{_lambda_.41} parent=0 // pred_region
    _
  $region33: #{_lambda_.41} parent=0 // pred_fallthru
    _

// kernel: _lambda_.48
$region0: #{_lambda_.48}
  #allocation0 [shape = 'u32[]', space=smem, size = 0x4, offset = 0x4, fixed_abs, tag = 'smem constant byte address 0x4 - core index']
  #allocation1 [shape = 'u32[72,128]{1,0:T(1,128)}', space=vmem, size = 0x9000, scoped, tag = 'internal scratch']
  #allocation2 [shape = 'bf16[2,32]{1,0:T(2,128)(2,1)}', space=vmem, size = 0x200, scoped, tag = 'scratch operand']
  %s0 = inlined_call_operand.vmem [shape: bf16[2,32], index: 0, kind: input, shape index: {}]
  %s1 = inlined_call_operand.vmem [shape: f32[1,32], index: 1, kind: input, shape index: {}]
  %s2 = inlined_call_operand.vmem [shape: f32[1,32], index: 2, kind: input, shape index: {}]
  %s3 = inlined_call_operand.vmem [shape: bf16[32,32], index: 3, kind: input, shape index: {}]
  %s4 = inlined_call_operand.vmem [shape: bf16[2,32], index: 4, kind: output, shape index: {}]
  %s5 = sld [smem:[#allocation0]]
  $region30: #{_lambda_.48} parent=0
    _
  %s7 = ssub.s32 1, %s5
  %s8 = scalar_select 0, %s7, %s5
  // Predicated region
  $region2: #{_lambda_.48} parent=0 // pred_check
    _
  $region3: #{_lambda_.48} parent=0 // pred_check_branch
    %10 = sbr.rel (0) target = $region5
  $region4: #{_lambda_.48} parent=0 // pred_region
    _
  $region5: #{_lambda_.48} parent=0 // pred_fallthru
    _
  // Predicated region
  $region6: #{_lambda_.48} parent=0 // pred_check
    _
  $region7: #{_lambda_.48} parent=0 // pred_check_branch
    %12 = sbr.rel (0) target = $region9
  $region8: #{_lambda_.48} parent=0 // pred_region
    _
  $region9: #{_lambda_.48} parent=0 // pred_fallthru
    _
  // Predicated region
  $region10: #{_lambda_.48} parent=0 // pred_check
    _
  $region11: #{_lambda_.48} parent=0 // pred_check_branch
    %14 = sbr.rel (0) target = $region13
  $region12: #{_lambda_.48} parent=0 // pred_region
    _
  $region13: #{_lambda_.48} parent=0 // pred_fallthru
    _
  // Predicated region
  $region14: #{_lambda_.48} parent=0 // pred_check
    _
  $region15: #{_lambda_.48} parent=0 // pred_check_branch
    %16 = sbr.rel (0) target = $region17
  $region16: #{_lambda_.48} parent=0 // pred_region
    _
  $region17: #{_lambda_.48} parent=0 // pred_fallthru
    _
  %p18 = scmp.eq.s32.totalorder 0, 0
  // Predicated region
  $region18: #{_lambda_.48} parent=0 // pred_check
    %p19 = pneg %p18
  $region19: #{_lambda_.48} parent=0 // pred_check_branch
    %21 = sbr.rel (%p19) target = $region21
  $region20: #{_lambda_.48} parent=0 // pred_region
    %v22 = vld [vmem:[%s0] sm:$0x1]
    %v23 = vunpack.c.l.bf16 %v22
    %vm24 = vcmask 254976
    %v25 = vsel %vm24, %v23, 0.0
    %26 = vadd.xlane.f32.xlu0 %v25
    %v27 = vpop.xlane.xlu0 %26
    %v28 = vrcp.pop 32.0
    %v29 = vmul.f32 32.0, %v28
    %v30 = vsub.f32 1.0, %v29
    %v31 = vmul.f32 %v28, %v30
    %v32 = vadd.f32 %v28, %v31
    %vm33 = vweird.f32 %v28
    %v34 = vsel %vm33, %v28, %v32
    %v35 = vmul.f32 %v27, %v34
    %v36 = vsub.f32 %v23, %v35
    %v37 = vmul.f32 %v36, %v36
    %v38 = vsel %vm24, %v37, 0.0
    %39 = vadd.xlane.f32.xlu0 %v38
    %v40 = vpop.xlane.xlu0 %39
    %v41 = vmul.f32 %v40, %v34
    %v42 = vadd.f32 %v41, 1e-05
    %v43 = vrsqrt.pop %v42
    %v44 = vmul.f32 %v43, %v42
    %v45 = vmul.f32 %v44, %v43
    %v46 = vmul.f32 0.5, %v45
    %v47 = vsub.f32 1.5, %v46
    %v48 = vmul.f32 %v43, %v47
    %vm49 = vweird.f32 %v42
    %vm50 = vweird.f32 %v43
    %vm51 = vmor %vm49, %vm50
    %v52 = vsel %vm51, %v43, %v48
    %v53 = vmul.f32 %v36, %v52
    %v54 = vld [vmem:[%s1] sm:$0x1]
    %v56 = vperm.slane %v54, 0
    %v58 = vmul.f32 %v53, %v56
    %v59 = vld [vmem:[%s2] sm:$0x1]
    %v61 = vperm.slane %v59, 0
    %v63 = vadd.f32 %v58, %v61
    %v64 = vpack.c.bf16 %v63, %v63
    %vm65 = vcmask 253952
    %66 = vst.msk [vmem:[#allocation2] sm:$0x1] %vm65, %v64
  $region21: #{_lambda_.48} parent=0 // pred_fallthru
    _
  %v67 = vld [vmem:[#allocation2] sm:$0x1]
  %v68 = vld [vmem:[%s3] sm:$0xf]
  %v69 = vld [vmem:[%s3 + $0x4] sm:$0xf]
  %v70 = vld [vmem:[%s3 + $0x8] sm:$0xf]
  %v71 = vld [vmem:[%s3 + $0xc] sm:$0xf]
  %v76 = vunpack.c.l.b16 %v68
  %v77 = vunpack.c.l.b16 %v69
  %v78 = vunpack.c.l.b16 %v70
  %v79 = vunpack.c.l.b16 %v71
  %v80 = vpack.c.b16 %v77, %v76
  %v81 = vpack.c.b16 %v79, %v78
  %vm84 = vcmask 261120
  %v86 = vsel %vm84, %v67, 0
  %88 = vmatpush.bf16.msra.mxu0 0
  %89 = vmatpush.bf16.msra.mxu0 0
  %90 = vmatpush.bf16.msra.mxu0 0
  %91 = vmatpush.bf16.msra.mxu0 0
  %92 = vmatpush.bf16.msra.mxu0 0
  %93 = vmatpush.bf16.msra.mxu0 0
  %94 = vmatpush.bf16.msra.mxu0 %v81
  %95 = vmatpush.bf16.msra.mxu0 %v80
  %96 = vmatmul.bf16.gmra.mxu0 %v86
  %v97 = vpop.f32.mrf.mxu0
  %v98 = vadd.f32 0.0, %v97
  %v99 = vpop.f32.mrf.mxu0
  %100 = vdwg.mxu0
  %v101 = vpack.c.bf16 %v98, %v98
  %vm102 = vcmask 253952
  %103 = vst.msk [vmem:[%s4] sm:$0x1] %vm102, %v101
  // Predicated region
  $region22: #{_lambda_.48} parent=0 // pred_check
    _
  $region23: #{_lambda_.48} parent=0 // pred_check_branch
    %105 = sbr.rel (0) target = $region25
  $region24: #{_lambda_.48} parent=0 // pred_region
    _
  $region25: #{_lambda_.48} parent=0 // pred_fallthru
    _
  // Predicated region
  $region26: #{_lambda_.48} parent=0 // pred_check
    _
  $region27: #{_lambda_.48} parent=0 // pred_check_branch
    %107 = sbr.rel (0) target = $region29
  $region28: #{_lambda_.48} parent=0 // pred_region
    _
  $region29: #{_lambda_.48} parent=0 // pred_fallthru
    _

// kernel: _lambda_.42
$region0: #{_lambda_.42}
  #allocation0 [shape = 'u32[]', space=smem, size = 0x4, offset = 0x4, fixed_abs, tag = 'smem constant byte address 0x4 - core index']
  #allocation1 [shape = 'u32[72,128]{1,0:T(1,128)}', space=vmem, size = 0x9000, scoped, tag = 'internal scratch']
  #allocation2 [shape = 'f32[16,32]{1,0:T(8,128)}', space=vmem, size = 0x2000, scoped, tag = 'scratch operand']
  %s0 = inlined_call_operand.vmem [shape: bf16[16,128], index: 0, kind: input, shape index: {}]
  %s1 = inlined_call_operand.vmem [shape: bf16[128,32], index: 1, kind: input, shape index: {}]
  %s2 = inlined_call_operand.vmem [shape: f32[1,32], index: 2, kind: input, shape index: {}]
  %s3 = inlined_call_operand.vmem [shape: bf16[16,32], index: 3, kind: input, shape index: {}]
  %s4 = inlined_call_operand.vmem [shape: bf16[16,32], index: 4, kind: output, shape index: {}]
  %s5 = sld [smem:[#allocation0]]
  $region34: #{_lambda_.42} parent=0
    _
  %s7 = ssub.s32 1, %s5
  %s8 = scalar_select 0, %s7, %s5
  // Predicated region
  $region2: #{_lambda_.42} parent=0 // pred_check
    _
  $region3: #{_lambda_.42} parent=0 // pred_check_branch
    %10 = sbr.rel (0) target = $region5
  $region4: #{_lambda_.42} parent=0 // pred_region
    _
  $region5: #{_lambda_.42} parent=0 // pred_fallthru
    _
  // Predicated region
  $region6: #{_lambda_.42} parent=0 // pred_check
    _
  $region7: #{_lambda_.42} parent=0 // pred_check_branch
    %12 = sbr.rel (0) target = $region9
  $region8: #{_lambda_.42} parent=0 // pred_region
    _
  $region9: #{_lambda_.42} parent=0 // pred_fallthru
    _
  // Predicated region
  $region10: #{_lambda_.42} parent=0 // pred_check
    _
  $region11: #{_lambda_.42} parent=0 // pred_check_branch
    %14 = sbr.rel (0) target = $region13
  $region12: #{_lambda_.42} parent=0 // pred_region
    _
  $region13: #{_lambda_.42} parent=0 // pred_fallthru
    _
  // Predicated region
  $region14: #{_lambda_.42} parent=0 // pred_check
    _
  $region15: #{_lambda_.42} parent=0 // pred_check_branch
    %16 = sbr.rel (0) target = $region17
  $region16: #{_lambda_.42} parent=0 // pred_region
    _
  $region17: #{_lambda_.42} parent=0 // pred_fallthru
    _
  %p17 = scmp.eq.s32.totalorder 0, 0
  // Predicated region
  $region18: #{_lambda_.42} parent=0 // pred_check
    %p18 = pneg %p17
  $region19: #{_lambda_.42} parent=0 // pred_check_branch
    %20 = sbr.rel (%p18) target = $region21
  $region20: #{_lambda_.42} parent=0 // pred_region
    %vm21 = vcmask 261120
    %22 = vst.msk [vmem:[#allocation2] sm:$0xff] %vm21, 0.0
    %23 = vst.msk [vmem:[#allocation2 + $0x8] sm:$0xff] %vm21, 0.0
  $region21: #{_lambda_.42} parent=0 // pred_fallthru
    _
  %v24 = vld [vmem:[#allocation2] sm:$0xff]
  %v25 = vld [vmem:[#allocation2 + $0x8] sm:$0xff]
  %v26 = vld [vmem:[%s0] sm:$0xf]
  %v27 = vld [vmem:[%s0 + $0x4] sm:$0xf]
  %v28 = vld [vmem:[%s1] sm:$0xf]
  %v29 = vld [vmem:[%s1 + $0x4] sm:$0xf]
  %v30 = vld [vmem:[%s1 + $0x8] sm:$0xf]
  %v31 = vld [vmem:[%s1 + $0xc] sm:$0xf]
  %v32 = vld [vmem:[%s1 + $0x10] sm:$0xf]
  %v33 = vld [vmem:[%s1 + $0x14] sm:$0xf]
  %v34 = vld [vmem:[%s1 + $0x18] sm:$0xf]
  %v35 = vld [vmem:[%s1 + $0x1c] sm:$0xf]
  %v36 = vld [vmem:[%s1 + $0x20] sm:$0xf]
  %v37 = vld [vmem:[%s1 + $0x24] sm:$0xf]
  %v38 = vld [vmem:[%s1 + $0x28] sm:$0xf]
  %v39 = vld [vmem:[%s1 + $0x2c] sm:$0xf]
  %v40 = vld [vmem:[%s1 + $0x30] sm:$0xf]
  %v41 = vld [vmem:[%s1 + $0x34] sm:$0xf]
  %v42 = vld [vmem:[%s1 + $0x38] sm:$0xf]
  %v43 = vld [vmem:[%s1 + $0x3c] sm:$0xf]
  %v46 = vunpack.c.l.b16 %v26
  %v47 = vunpack.c.l.b16 %v27
  %v48 = vpack.c.b16 %v47, %v46
  %v66 = vunpack.c.l.b16 %v28
  %v67 = vunpack.c.l.b16 %v29
  %v68 = vunpack.c.l.b16 %v30
  %v69 = vunpack.c.l.b16 %v31
  %v70 = vunpack.c.l.b16 %v32
  %v71 = vunpack.c.l.b16 %v33
  %v72 = vunpack.c.l.b16 %v34
  %v73 = vunpack.c.l.b16 %v35
  %v74 = vunpack.c.l.b16 %v36
  %v75 = vunpack.c.l.b16 %v37
  %v76 = vunpack.c.l.b16 %v38
  %v77 = vunpack.c.l.b16 %v39
  %v78 = vunpack.c.l.b16 %v40
  %v79 = vunpack.c.l.b16 %v41
  %v80 = vunpack.c.l.b16 %v42
  %v81 = vunpack.c.l.b16 %v43
  %v82 = vpack.c.b16 %v67, %v66
  %v83 = vpack.c.b16 %v69, %v68
  %v84 = vpack.c.b16 %v71, %v70
  %v85 = vpack.c.b16 %v73, %v72
  %v86 = vpack.c.b16 %v75, %v74
  %v87 = vpack.c.b16 %v77, %v76
  %v88 = vpack.c.b16 %v79, %v78
  %v89 = vpack.c.b16 %v81, %v80
  %98 = vmatpush.bf16.msra.mxu0 %v89
  %99 = vmatpush.bf16.msra.mxu0 %v88
  %100 = vmatpush.bf16.msra.mxu0 %v87
  %101 = vmatpush.bf16.msra.mxu0 %v86
  %102 = vmatpush.bf16.msra.mxu0 %v85
  %103 = vmatpush.bf16.msra.mxu0 %v84
  %104 = vmatpush.bf16.msra.mxu0 %v83
  %105 = vmatpush.bf16.msra.mxu0 %v82
  %106 = vmatmul.bf16.gmra.mxu0 %v48
  %v107 = vpop.f32.mrf.mxu0
  %v108 = vadd.f32 0.0, %v107
  %v109 = vpop.f32.mrf.mxu0
  %v110 = vadd.f32 0.0, %v109
  %111 = vdwg.mxu0
  %v112 = vadd.f32 %v24, %v108
  %v113 = vadd.f32 %v25, %v110
  %vm114 = vcmask 261120
  %115 = vst.msk [vmem:[#allocation2] sm:$0xff] %vm114, %v112
  %116 = vst.msk [vmem:[#allocation2 + $0x8] sm:$0xff] %vm114, %v113
  // Predicated region
  $region22: #{_lambda_.42} parent=0 // pred_check
    %p117 = pneg %p17
  $region23: #{_lambda_.42} parent=0 // pred_check_branch
    %119 = sbr.rel (%p117) target = $region25
  $region24: #{_lambda_.42} parent=0 // pred_region
    %v120 = vld [vmem:[#allocation2] sm:$0xff]
    %v121 = vld [vmem:[#allocation2 + $0x8] sm:$0xff]
    %v122 = vld [vmem:[%s2] sm:$0x1]
    %v124 = vperm.slane %v122, 0
    %v126 = vadd.f32 %v120, %v124
    %v127 = vadd.f32 %v121, %v124
    %v128 = vld [vmem:[%s3] sm:$0xf]
    %v129 = vld [vmem:[%s3 + $0x4] sm:$0xf]
    %v130 = vunpack.c.l.bf16 %v128
    %v131 = vunpack.c.l.bf16 %v129
    %v132 = vadd.f32 %v126, %v130
    %v133 = vadd.f32 %v127, %v131
    %v134 = vpack.c.bf16 %v132, %v132
    %v135 = vpack.c.bf16 %v133, %v133
    %vm136 = vcmask 257024
    %137 = vst.msk [vmem:[%s4] sm:$0xf] %vm136, %v134
    %138 = vst.msk [vmem:[%s4 + $0x4] sm:$0xf] %vm136, %v135
  $region25: #{_lambda_.42} parent=0 // pred_fallthru
    _
  // Predicated region
  $region26: #{_lambda_.42} parent=0 // pred_check
    _
  $region27: #{_lambda_.42} parent=0 // pred_check_branch
    %140 = sbr.rel (0) target = $region29
  $region28: #{_lambda_.42} parent=0 // pred_region
    _
  $region29: #{_lambda_.42} parent=0 // pred_fallthru
    _
  // Predicated region
  $region30: #{_lambda_.42} parent=0 // pred_check
    _
  $region31: #{_lambda_.42} parent=0 // pred_check_branch
    %142 = sbr.rel (0) target = $region33
  $region32: #{_lambda_.42} parent=0 // pred_region
    _
  $region33: #{_lambda_.42} parent=0 // pred_fallthru
    _

// kernel: _lambda_.25
$region0: #{_lambda_.25}
  #allocation0 [shape = 'u32[]', space=smem, size = 0x4, offset = 0x4, fixed_abs, tag = 'smem constant byte address 0x4 - core index']
  #allocation1 [shape = 'u32[72,128]{1,0:T(1,128)}', space=vmem, size = 0x9000, scoped, tag = 'internal scratch']
  #allocation2 [shape = 'f32[8,64]{1,0:T(8,128)}', space=vmem, size = 0x1000, scoped, tag = 'scratch operand']
  %s0 = inlined_call_operand.vmem [shape: bf16[8,192], index: 0, kind: input, shape index: {}]
  %s1 = inlined_call_operand.vmem [shape: bf16[192,64], index: 1, kind: input, shape index: {}]
  %s2 = inlined_call_operand.vmem [shape: bf16[8,64], index: 2, kind: output, shape index: {}]
  %s3 = sld [smem:[#allocation0]]
  $region26: #{_lambda_.25} parent=0
    _
  %s5 = ssub.s32 1, %s3
  %s6 = scalar_select 0, %s5, %s3
  // Predicated region
  $region2: #{_lambda_.25} parent=0 // pred_check
    _
  $region3: #{_lambda_.25} parent=0 // pred_check_branch
    %8 = sbr.rel (0) target = $region5
  $region4: #{_lambda_.25} parent=0 // pred_region
    _
  $region5: #{_lambda_.25} parent=0 // pred_fallthru
    _
  // Predicated region
  $region6: #{_lambda_.25} parent=0 // pred_check
    _
  $region7: #{_lambda_.25} parent=0 // pred_check_branch
    %10 = sbr.rel (0) target = $region9
  $region8: #{_lambda_.25} parent=0 // pred_region
    _
  $region9: #{_lambda_.25} parent=0 // pred_fallthru
    _
  %p12 = scmp.eq.s32.totalorder 0, 0
  // Predicated region
  $region10: #{_lambda_.25} parent=0 // pred_check
    %p13 = pneg %p12
  $region11: #{_lambda_.25} parent=0 // pred_check_branch
    %15 = sbr.rel (%p13) target = $region13
  $region12: #{_lambda_.25} parent=0 // pred_region
    %vm16 = vcmask 523264
    %17 = vst.msk [vmem:[#allocation2] sm:$0xff] %vm16, 0.0
  $region13: #{_lambda_.25} parent=0 // pred_fallthru
    _
  %v18 = vld [vmem:[#allocation2] sm:$0xff]
  %v19 = vld [vmem:[%s0] sm:$0xff]
  %v20 = vld [vmem:[%s1] sm:$0xf]
  %v21 = vld [vmem:[%s1 + $0x4] sm:$0xf]
  %v22 = vld [vmem:[%s1 + $0x8] sm:$0xf]
  %v23 = vld [vmem:[%s1 + $0xc] sm:$0xf]
  %v24 = vld [vmem:[%s1 + $0x10] sm:$0xf]
  %v25 = vld [vmem:[%s1 + $0x14] sm:$0xf]
  %v26 = vld [vmem:[%s1 + $0x18] sm:$0xf]
  %v27 = vld [vmem:[%s1 + $0x1c] sm:$0xf]
  %v28 = vld [vmem:[%s1 + $0x20] sm:$0xf]
  %v29 = vld [vmem:[%s1 + $0x24] sm:$0xf]
  %v30 = vld [vmem:[%s1 + $0x28] sm:$0xf]
  %v31 = vld [vmem:[%s1 + $0x2c] sm:$0xf]
  %v32 = vld [vmem:[%s1 + $0x30] sm:$0xf]
  %v33 = vld [vmem:[%s1 + $0x34] sm:$0xf]
  %v34 = vld [vmem:[%s1 + $0x38] sm:$0xf]
  %v35 = vld [vmem:[%s1 + $0x3c] sm:$0xf]
  %v36 = vld [vmem:[%s1 + $0x40] sm:$0xf]
  %v37 = vld [vmem:[%s1 + $0x44] sm:$0xf]
  %v38 = vld [vmem:[%s1 + $0x48] sm:$0xf]
  %v39 = vld [vmem:[%s1 + $0x4c] sm:$0xf]
  %v40 = vld [vmem:[%s1 + $0x50] sm:$0xf]
  %v41 = vld [vmem:[%s1 + $0x54] sm:$0xf]
  %v42 = vld [vmem:[%s1 + $0x58] sm:$0xf]
  %v43 = vld [vmem:[%s1 + $0x5c] sm:$0xf]
  %v45 = vunpack.c.l.b16 %v19
  %v46 = vunpack.c.h.b16 %v19
  %v47 = vpack.c.b16 %v45, %v45
  %v48 = vpack.c.b16 %v46, %v46
  %v74 = vunpack.c.l.b16 %v20
  %v75 = vunpack.c.l.b16 %v21
  %v76 = vunpack.c.l.b16 %v22
  %v77 = vunpack.c.l.b16 %v23
  %v78 = vunpack.c.l.b16 %v24
  %v79 = vunpack.c.l.b16 %v25
  %v80 = vunpack.c.l.b16 %v26
  %v81 = vunpack.c.l.b16 %v27
  %v82 = vunpack.c.l.b16 %v28
  %v83 = vunpack.c.l.b16 %v29
  %v84 = vunpack.c.l.b16 %v30
  %v85 = vunpack.c.l.b16 %v31
  %v86 = vunpack.c.l.b16 %v32
  %v87 = vunpack.c.l.b16 %v33
  %v88 = vunpack.c.l.b16 %v34
  %v89 = vunpack.c.l.b16 %v35
  %v90 = vunpack.c.l.b16 %v36
  %v91 = vunpack.c.l.b16 %v37
  %v92 = vunpack.c.l.b16 %v38
  %v93 = vunpack.c.l.b16 %v39
  %v94 = vunpack.c.l.b16 %v40
  %v95 = vunpack.c.l.b16 %v41
  %v96 = vunpack.c.l.b16 %v42
  %v97 = vunpack.c.l.b16 %v43
  %v98 = vpack.c.b16 %v75, %v74
  %v99 = vpack.c.b16 %v77, %v76
  %v100 = vpack.c.b16 %v79, %v78
  %v101 = vpack.c.b16 %v81, %v80
  %v102 = vpack.c.b16 %v83, %v82
  %v103 = vpack.c.b16 %v85, %v84
  %v104 = vpack.c.b16 %v87, %v86
  %v105 = vpack.c.b16 %v89, %v88
  %v106 = vpack.c.b16 %v91, %v90
  %v107 = vpack.c.b16 %v93, %v92
  %v108 = vpack.c.b16 %v95, %v94
  %v109 = vpack.c.b16 %v97, %v96
  %vm122 = vcmask 523264
  %v124 = vsel %vm122, %v48, 0
  %126 = vmatpush.bf16.msra.mxu0 %v105
  %127 = vmatpush.bf16.msra.mxu0 %v104
  %128 = vmatpush.bf16.msra.mxu0 %v103
  %129 = vmatpush.bf16.msra.mxu0 %v102
  %130 = vmatpush.bf16.msra.mxu0 %v101
  %131 = vmatpush.bf16.msra.mxu0 %v100
  %132 = vmatpush.bf16.msra.mxu0 %v99
  %133 = vmatpush.bf16.msra.mxu0 %v98
  %134 = vmatmul.bf16.gmra.mxu0 %v47
  %v135 = vpop.f32.mrf.mxu0
  %v136 = vadd.f32 0.0, %v135
  %v137 = vpop.f32.mrf.mxu0
  %138 = vdwg.mxu0
  %139 = vmatpush.bf16.msra.mxu0 0
  %140 = vmatpush.bf16.msra.mxu0 0
  %141 = vmatpush.bf16.msra.mxu0 0
  %142 = vmatpush.bf16.msra.mxu0 0
  %143 = vmatpush.bf16.msra.mxu0 %v109
  %144 = vmatpush.bf16.msra.mxu0 %v108
  %145 = vmatpush.bf16.msra.mxu0 %v107
  %146 = vmatpush.bf16.msra.mxu0 %v106
  %147 = vmatmul.bf16.gmra.mxu0 %v124
  %v148 = vpop.f32.mrf.mxu0
  %v149 = vadd.f32 %v136, %v148
  %v150 = vpop.f32.mrf.mxu0
  %151 = vdwg.mxu0
  %v152 = vadd.f32 %v18, %v149
  %153 = vst.msk [vmem:[#allocation2] sm:$0xff] %vm122, %v152
  // Predicated region
  $region14: #{_lambda_.25} parent=0 // pred_check
    %p154 = pneg %p12
  $region15: #{_lambda_.25} parent=0 // pred_check_branch
    %156 = sbr.rel (%p154) target = $region17
  $region16: #{_lambda_.25} parent=0 // pred_region
    %v157 = vld [vmem:[#allocation2] sm:$0xff]
    %v158 = vpack.c.bf16 %v157, %v157
    %vm159 = vcmask 519168
    %160 = vst.msk [vmem:[%s2] sm:$0xf] %vm159, %v158
  $region17: #{_lambda_.25} parent=0 // pred_fallthru
    _
  // Predicated region
  $region18: #{_lambda_.25} parent=0 // pred_check
    _
  $region19: #{_lambda_.25} parent=0 // pred_check_branch
    %162 = sbr.rel (0) target = $region21
  $region20: #{_lambda_.25} parent=0 // pred_region
    _
  $region21: #{_lambda_.25} parent=0 // pred_fallthru
    _
  // Predicated region
  $region22: #{_lambda_.25} parent=0 // pred_check
    _
  $region23: #{_lambda_.25} parent=0 // pred_check_branch
    %164 = sbr.rel (0) target = $region25
  $region24: #{_lambda_.25} parent=0 // pred_region
    _
  $region25: #{_lambda_.25} parent=0 // pred_fallthru
    _

// kernel: _lambda_.27
$region0: #{_lambda_.27}
  #allocation0 [shape = 'u32[]', space=smem, size = 0x4, offset = 0x4, fixed_abs, tag = 'smem constant byte address 0x4 - core index']
  #allocation1 [shape = 'u32[72,128]{1,0:T(1,128)}', space=vmem, size = 0x9000, scoped, tag = 'internal scratch']
  #allocation2 [shape = 'bf16[16,64]{1,0:T(8,128)(2,1)}', space=vmem, size = 0x1000, scoped, tag = 'scratch operand']
  %s0 = inlined_call_operand.vmem [shape: bf16[16,64], index: 0, kind: input, shape index: {}]
  %s1 = inlined_call_operand.vmem [shape: f32[1,64], index: 1, kind: input, shape index: {}]
  %s2 = inlined_call_operand.vmem [shape: f32[1,64], index: 2, kind: input, shape index: {}]
  %s3 = inlined_call_operand.vmem [shape: bf16[64,192], index: 3, kind: input, shape index: {}]
  %s4 = inlined_call_operand.vmem [shape: f32[1,192], index: 4, kind: input, shape index: {}]
  %s5 = inlined_call_operand.vmem [shape: bf16[16,192], index: 5, kind: output, shape index: {}]
  %s6 = sld [smem:[#allocation0]]
  $region34: #{_lambda_.27} parent=0
    _
  %s8 = ssub.s32 1, %s6
  %s9 = scalar_select 0, %s8, %s6
  // Predicated region
  $region2: #{_lambda_.27} parent=0 // pred_check
    _
  $region3: #{_lambda_.27} parent=0 // pred_check_branch
    %11 = sbr.rel (0) target = $region5
  $region4: #{_lambda_.27} parent=0 // pred_region
    _
  $region5: #{_lambda_.27} parent=0 // pred_fallthru
    _
  // Predicated region
  $region6: #{_lambda_.27} parent=0 // pred_check
    _
  $region7: #{_lambda_.27} parent=0 // pred_check_branch
    %13 = sbr.rel (0) target = $region9
  $region8: #{_lambda_.27} parent=0 // pred_region
    _
  $region9: #{_lambda_.27} parent=0 // pred_fallthru
    _
  // Predicated region
  $region10: #{_lambda_.27} parent=0 // pred_check
    _
  $region11: #{_lambda_.27} parent=0 // pred_check_branch
    %15 = sbr.rel (0) target = $region13
  $region12: #{_lambda_.27} parent=0 // pred_region
    _
  $region13: #{_lambda_.27} parent=0 // pred_fallthru
    _
  // Predicated region
  $region14: #{_lambda_.27} parent=0 // pred_check
    _
  $region15: #{_lambda_.27} parent=0 // pred_check_branch
    %17 = sbr.rel (0) target = $region17
  $region16: #{_lambda_.27} parent=0 // pred_region
    _
  $region17: #{_lambda_.27} parent=0 // pred_fallthru
    _
  // Predicated region
  $region18: #{_lambda_.27} parent=0 // pred_check
    _
  $region19: #{_lambda_.27} parent=0 // pred_check_branch
    %19 = sbr.rel (0) target = $region21
  $region20: #{_lambda_.27} parent=0 // pred_region
    _
  $region21: #{_lambda_.27} parent=0 // pred_fallthru
    _
  %p21 = scmp.eq.s32.totalorder 0, 0
  // Predicated region
  $region22: #{_lambda_.27} parent=0 // pred_check
    %p22 = pneg %p21
  $region23: #{_lambda_.27} parent=0 // pred_check_branch
    %24 = sbr.rel (%p22) target = $region25
  $region24: #{_lambda_.27} parent=0 // pred_region
    %v25 = vld [vmem:[%s0] sm:$0xf]
    %v26 = vld [vmem:[%s0 + $0x4] sm:$0xf]
    %v27 = vunpack.c.l.bf16 %v25
    %v28 = vunpack.c.l.bf16 %v26
    %vm29 = vcmask 523264
    %v30 = vsel %vm29, %v27, 0.0
    %31 = vadd.xlane.f32.xlu0 %v30
    %v32 = vpop.xlane.xlu0 %31
    %v33 = vsel %vm29, %v28, 0.0
    %34 = vadd.xlane.f32.xlu0 %v33
    %v35 = vpop.xlane.xlu0 %34
    %v36 = vrcp.pop 64.0
    %v37 = vmul.f32 64.0, %v36
    %v38 = vsub.f32 1.0, %v37
    %v39 = vmul.f32 %v36, %v38
    %v40 = vadd.f32 %v36, %v39
    %vm41 = vweird.f32 %v36
    %v42 = vsel %vm41, %v36, %v40
    %v43 = vmul.f32 %v32, %v42
    %v44 = vmul.f32 %v35, %v42
    %v45 = vsub.f32 %v27, %v43
    %v46 = vsub.f32 %v28, %v44
    %v47 = vmul.f32 %v45, %v45
    %v48 = vmul.f32 %v46, %v46
    %v49 = vsel %vm29, %v47, 0.0
    %50 = vadd.xlane.f32.xlu0 %v49
    %v51 = vpop.xlane.xlu0 %50
    %v52 = vsel %vm29, %v48, 0.0
    %53 = vadd.xlane.f32.xlu0 %v52
    %v54 = vpop.xlane.xlu0 %53
    %v55 = vmul.f32 %v51, %v42
    %v56 = vmul.f32 %v54, %v42
    %v57 = vadd.f32 %v55, 1e-05
    %v58 = vadd.f32 %v56, 1e-05
    %v59 = vrsqrt.pop %v57
    %v60 = vmul.f32 %v59, %v57
    %v61 = vmul.f32 %v60, %v59
    %v62 = vmul.f32 0.5, %v61
    %v63 = vsub.f32 1.5, %v62
    %v64 = vmul.f32 %v59, %v63
    %vm65 = vweird.f32 %v57
    %vm66 = vweird.f32 %v59
    %vm67 = vmor %vm65, %vm66
    %v68 = vsel %vm67, %v59, %v64
    %v69 = vrsqrt.pop %v58
    %v70 = vmul.f32 %v69, %v58
    %v71 = vmul.f32 %v70, %v69
    %v72 = vmul.f32 0.5, %v71
    %v73 = vsub.f32 1.5, %v72
    %v74 = vmul.f32 %v69, %v73
    %vm75 = vweird.f32 %v58
    %vm76 = vweird.f32 %v69
    %vm77 = vmor %vm75, %vm76
    %v78 = vsel %vm77, %v69, %v74
    %v79 = vmul.f32 %v45, %v68
    %v80 = vmul.f32 %v46, %v78
    %v81 = vld [vmem:[%s1] sm:$0x1]
    %v83 = vperm.slane %v81, 0
    %v85 = vmul.f32 %v79, %v83
    %v86 = vmul.f32 %v80, %v83
    %v87 = vld [vmem:[%s2] sm:$0x1]
    %v89 = vperm.slane %v87, 0
    %v91 = vadd.f32 %v85, %v89
    %v92 = vadd.f32 %v86, %v89
    %v93 = vpack.c.bf16 %v91, %v91
    %v94 = vpack.c.bf16 %v92, %v92
    %vm95 = vcmask 519168
    %96 = vst.msk [vmem:[#allocation2] sm:$0xf] %vm95, %v93
    %97 = vst.msk [vmem:[#allocation2 + $0x4] sm:$0xf] %vm95, %v94
  $region25: #{_lambda_.27} parent=0 // pred_fallthru
    _
  %v98 = vld [vmem:[#allocation2] sm:$0xf]
  %v99 = vld [vmem:[#allocation2 + $0x4] sm:$0xf]
  %v100 = vld [vmem:[%s3] sm:$0xff]
  %v101 = vld [vmem:[%s3 + $0x8] sm:$0xff]
  %v102 = vld [vmem:[%s3 + $0x10] sm:$0xff]
  %v103 = vld [vmem:[%s3 + $0x18] sm:$0xff]
  %v104 = vld [vmem:[%s3 + $0x20] sm:$0xff]
  %v105 = vld [vmem:[%s3 + $0x28] sm:$0xff]
  %v106 = vld [vmem:[%s3 + $0x30] sm:$0xff]
  %v107 = vld [vmem:[%s3 + $0x38] sm:$0xff]
  %v108 = vld [vmem:[%s4] sm:$0x3]
  %v110 = vperm.slane %v108, 0
  %v111 = vperm.slane %v108, 1
  %v116 = vunpack.c.l.b16 %v98
  %v117 = vunpack.c.l.b16 %v99
  %v118 = vpack.c.b16 %v117, %v116
  %v127 = vunpack.c.l.b16 %v100
  %v128 = vunpack.c.h.b16 %v100
  %v129 = vunpack.c.l.b16 %v101
  %v130 = vunpack.c.h.b16 %v101
  %v131 = vunpack.c.l.b16 %v102
  %v132 = vunpack.c.h.b16 %v102
  %v133 = vunpack.c.l.b16 %v103
  %v134 = vunpack.c.h.b16 %v103
  %v135 = vunpack.c.l.b16 %v104
  %v136 = vunpack.c.h.b16 %v104
  %v137 = vunpack.c.l.b16 %v105
  %v138 = vunpack.c.h.b16 %v105
  %v139 = vunpack.c.l.b16 %v106
  %v140 = vunpack.c.h.b16 %v106
  %v141 = vunpack.c.l.b16 %v107
  %v142 = vunpack.c.h.b16 %v107
  %v143 = vpack.c.b16 %v129, %v127
  %v144 = vpack.c.b16 %v130, %v128
  %v145 = vpack.c.b16 %v133, %v131
  %v146 = vpack.c.b16 %v134, %v132
  %v147 = vpack.c.b16 %v137, %v135
  %v148 = vpack.c.b16 %v138, %v136
  %v149 = vpack.c.b16 %v141, %v139
  %v150 = vpack.c.b16 %v142, %v140
  %vm159 = vcmask 523264
  %v161 = vsel %vm159, %v118, 0
  %163 = vmatpush.bf16.msra.mxu0 0
  %164 = vmatpush.bf16.msra.mxu0 0
  %165 = vmatpush.bf16.msra.mxu0 0
  %166 = vmatpush.bf16.msra.mxu0 0
  %167 = vmatpush.bf16.msra.mxu0 %v149
  %168 = vmatpush.bf16.msra.mxu0 %v147
  %169 = vmatpush.bf16.msra.mxu0 %v145
  %170 = vmatpush.bf16.msra.mxu0 %v143
  %171 = vmatmul.bf16.gmra.mxu0 %v161
  %v172 = vpop.f32.mrf.mxu0
  %v173 = vadd.f32 %v110, %v172
  %v174 = vpop.f32.mrf.mxu0
  %v175 = vadd.f32 %v110, %v174
  %176 = vdwg.mxu0
  %177 = vmatpush.bf16.msra.mxu0 0
  %178 = vmatpush.bf16.msra.mxu0 0
  %179 = vmatpush.bf16.msra.mxu0 0
  %180 = vmatpush.bf16.msra.mxu0 0
  %181 = vmatpush.bf16.msra.mxu0 %v150
  %182 = vmatpush.bf16.msra.mxu0 %v148
  %183 = vmatpush.bf16.msra.mxu0 %v146
  %184 = vmatpush.bf16.msra.mxu0 %v144
  %185 = vmatmul.bf16.gmra.mxu0 %v161
  %v186 = vpop.f32.mrf.mxu0
  %v187 = vadd.f32 %v111, %v186
  %v188 = vpop.f32.mrf.mxu0
  %v189 = vadd.f32 %v111, %v188
  %190 = vdwg.mxu0
  %v191 = vpack.c.bf16 %v187, %v173
  %v192 = vpack.c.bf16 %v189, %v175
  %vm193 = vcmask 1043456
  %vm194 = vcmask 523268
  %vm195 = vmor %vm194, %vm193
  %196 = vst.msk [vmem:[%s5] sm:$0xff] %vm195, %v191
  %197 = vst.msk [vmem:[%s5 + $0x8] sm:$0xff] %vm195, %v192
  // Predicated region
  $region26: #{_lambda_.27} parent=0 // pred_check
    _
  $region27: #{_lambda_.27} parent=0 // pred_check_branch
    %199 = sbr.rel (0) target = $region29
  $region28: #{_lambda_.27} parent=0 // pred_region
    _
  $region29: #{_lambda_.27} parent=0 // pred_fallthru
    _
  // Predicated region
  $region30: #{_lambda_.27} parent=0 // pred_check
    _
  $region31: #{_lambda_.27} parent=0 // pred_check_branch
    %201 = sbr.rel (0) target = $region33
  $region32: #{_lambda_.27} parent=0 // pred_region
    _
  $region33: #{_lambda_.27} parent=0 // pred_fallthru
    _

// kernel: _lambda_.26
$region0: #{_lambda_.26}
  #allocation0 [shape = 'u32[]', space=smem, size = 0x4, offset = 0x4, fixed_abs, tag = 'smem constant byte address 0x4 - core index']
  #allocation1 [shape = 'u32[72,128]{1,0:T(1,128)}', space=vmem, size = 0x9000, scoped, tag = 'internal scratch']
  %s0 = inlined_call_operand.vmem [shape: bf16[16,64], index: 0, kind: input, shape index: {}]
  %s1 = inlined_call_operand.vmem [shape: f32[1,64], index: 1, kind: input, shape index: {}]
  %s2 = inlined_call_operand.vmem [shape: f32[1,64], index: 2, kind: input, shape index: {}]
  %s3 = inlined_call_operand.vmem [shape: bf16[16,64], index: 3, kind: output, shape index: {}]
  %s4 = sld [smem:[#allocation0]]
  $region22: #{_lambda_.26} parent=0
    _
  %s6 = ssub.s32 1, %s4
  %s7 = scalar_select 0, %s6, %s4
  // Predicated region
  $region2: #{_lambda_.26} parent=0 // pred_check
    _
  $region3: #{_lambda_.26} parent=0 // pred_check_branch
    %9 = sbr.rel (0) target = $region5
  $region4: #{_lambda_.26} parent=0 // pred_region
    _
  $region5: #{_lambda_.26} parent=0 // pred_fallthru
    _
  // Predicated region
  $region6: #{_lambda_.26} parent=0 // pred_check
    _
  $region7: #{_lambda_.26} parent=0 // pred_check_branch
    %11 = sbr.rel (0) target = $region9
  $region8: #{_lambda_.26} parent=0 // pred_region
    _
  $region9: #{_lambda_.26} parent=0 // pred_fallthru
    _
  // Predicated region
  $region10: #{_lambda_.26} parent=0 // pred_check
    _
  $region11: #{_lambda_.26} parent=0 // pred_check_branch
    %13 = sbr.rel (0) target = $region13
  $region12: #{_lambda_.26} parent=0 // pred_region
    _
  $region13: #{_lambda_.26} parent=0 // pred_fallthru
    _
  %v14 = vld [vmem:[%s0] sm:$0xf]
  %v15 = vld [vmem:[%s0 + $0x4] sm:$0xf]
  %v16 = vunpack.c.l.bf16 %v14
  %v17 = vunpack.c.l.bf16 %v15
  %vm18 = vcmask 523264
  %v19 = vsel %vm18, %v16, 0.0
  %20 = vadd.xlane.f32.xlu0 %v19
  %v21 = vpop.xlane.xlu0 %20
  %v22 = vsel %vm18, %v17, 0.0
  %23 = vadd.xlane.f32.xlu0 %v22
  %v24 = vpop.xlane.xlu0 %23
  %v25 = vrcp.pop 64.0
  %v26 = vmul.f32 64.0, %v25
  %v27 = vsub.f32 1.0, %v26
  %v28 = vmul.f32 %v25, %v27
  %v29 = vadd.f32 %v25, %v28
  %vm30 = vweird.f32 %v25
  %v31 = vsel %vm30, %v25, %v29
  %v32 = vmul.f32 %v21, %v31
  %v33 = vmul.f32 %v24, %v31
  %v34 = vsub.f32 %v16, %v32
  %v35 = vsub.f32 %v17, %v33
  %v36 = vmul.f32 %v34, %v34
  %v37 = vmul.f32 %v35, %v35
  %v38 = vsel %vm18, %v36, 0.0
  %39 = vadd.xlane.f32.xlu0 %v38
  %v40 = vpop.xlane.xlu0 %39
  %v41 = vsel %vm18, %v37, 0.0
  %42 = vadd.xlane.f32.xlu0 %v41
  %v43 = vpop.xlane.xlu0 %42
  %v44 = vmul.f32 %v40, %v31
  %v45 = vmul.f32 %v43, %v31
  %v46 = vadd.f32 %v44, 1e-05
  %v47 = vadd.f32 %v45, 1e-05
  %v48 = vrsqrt.pop %v46
  %v49 = vmul.f32 %v48, %v46
  %v50 = vmul.f32 %v49, %v48
  %v51 = vmul.f32 0.5, %v50
  %v52 = vsub.f32 1.5, %v51
  %v53 = vmul.f32 %v48, %v52
  %vm54 = vweird.f32 %v46
  %vm55 = vweird.f32 %v48
  %vm56 = vmor %vm54, %vm55
  %v57 = vsel %vm56, %v48, %v53
  %v58 = vrsqrt.pop %v47
  %v59 = vmul.f32 %v58, %v47
  %v60 = vmul.f32 %v59, %v58
  %v61 = vmul.f32 0.5, %v60
  %v62 = vsub.f32 1.5, %v61
  %v63 = vmul.f32 %v58, %v62
  %vm64 = vweird.f32 %v47
  %vm65 = vweird.f32 %v58
  %vm66 = vmor %vm64, %vm65
  %v67 = vsel %vm66, %v58, %v63
  %v68 = vmul.f32 %v34, %v57
  %v69 = vmul.f32 %v35, %v67
  %v70 = vld [vmem:[%s1] sm:$0x1]
  %v72 = vperm.slane %v70, 0
  %v74 = vmul.f32 %v68, %v72
  %v75 = vmul.f32 %v69, %v72
  %v76 = vld [vmem:[%s2] sm:$0x1]
  %v78 = vperm.slane %v76, 0
  %v80 = vadd.f32 %v74, %v78
  %v81 = vadd.f32 %v75, %v78
  %v82 = vpack.c.bf16 %v80, %v80
  %v83 = vpack.c.bf16 %v81, %v81
  %vm84 = vcmask 519168
  %85 = vst.msk [vmem:[%s3] sm:$0xf] %vm84, %v82
  %86 = vst.msk [vmem:[%s3 + $0x4] sm:$0xf] %vm84, %v83
  // Predicated region
  $region14: #{_lambda_.26} parent=0 // pred_check
    _
  $region15: #{_lambda_.26} parent=0 // pred_check_branch
    %88 = sbr.rel (0) target = $region17
  $region16: #{_lambda_.26} parent=0 // pred_region
    _
  $region17: #{_lambda_.26} parent=0 // pred_fallthru
    _
  // Predicated region
  $region18: #{_lambda_.26} parent=0 // pred_check
    _
  $region19: #{_lambda_.26} parent=0 // pred_check_branch
    %90 = sbr.rel (0) target = $region21
  $region20: #{_lambda_.26} parent=0 // pred_region
    _
  $region21: #{_lambda_.26} parent=0 // pred_fallthru
    _

// kernel: _lambda_.28
$region0: #{_lambda_.28}
  #allocation0 [shape = 'u32[]', space=smem, size = 0x4, offset = 0x4, fixed_abs, tag = 'smem constant byte address 0x4 - core index']
  #allocation1 [shape = 'u32[72,128]{1,0:T(1,128)}', space=vmem, size = 0x9000, scoped, tag = 'internal scratch']
  %s0 = inlined_call_operand.vmem [shape: bf16[2,3,1,8,64], index: 0, kind: input, shape index: {}]
  %s1 = inlined_call_operand.vmem [shape: bf16[2,1,8,64], index: 1, kind: output, shape index: {}]
  %s2 = sld [smem:[#allocation0]]
  $region37: #{_lambda_.28} parent=0
    _
  %s4 = ssub.s32 1, %s2
  %s5 = scalar_select 0, %s4, %s2
  loop: start=0, step=1, limit=4
  $region2: #{_lambda_.28} parent=0 // loop_pre_header
    _
  $region3: #{_lambda_.28} parent=0 // loop_header
    %s7 = sphi 0, %s11
    %p8 = scmp.ge.s32.totalorder %s7, 4
    %s14 = sphi 0, %s26
    %s15 = sphi 0, %s22
    %s16 = sphi 0, %s14
    %s17 = sphi 0, %s15
    %s18 = sphi 0, %s16
    %s19 = sphi 0, %s17
    %s31 = sphi 0, %s33
    %s34 = sphi 0, %s31
    %s35 = sphi 0, %s34
    %s51 = sphi 0, %s35
    %s59 = sphi 0, %s61
    %s62 = sphi 0, %s59
    %s63 = sphi 0, %s62
    %s79 = sphi 0, %s63
  $region4: #{_lambda_.28} parent=0 // loop_header_branch
    %10 = sbr.rel (%p8) target = $region8
  $region5: #{_lambda_.28} parent=0 // loop_body
    %s12 = ssub.s32 %s7, 1
    %s13 = ssub.s32 %s7, 2
    %s20 = sadd.s32 1, %s15
    %p21 = scmp.ge.s32.totalorder %s20, 1
    %s22 = scalar_select %p21, 0, %s20
    %s23 = sadd.s32 1, %s14
    %s24 = scalar_select %p21, %s23, %s14
    %p25 = scmp.ge.s32.totalorder %s24, 2
    %s26 = scalar_select %p25, 0, %s24
    %s27 = ssub.s32 %s14, %s26
    %s28 = ssub.s32 %s15, %s22
    %s29 = sor.u32 %s27, %s28
    %p30 = scmp.eq.s32.totalorder %s29, 0
    %s32 = sadd.s32 %s31, 1
    %s33 = scalar_select %p30, %s31, %s32
    %p36 = pneg %p30
    %p37 = scmp.eq.s32.totalorder %s7, 1
    %p38 = por %p36, %p37
    %p39 = scmp.ne.s32.totalorder %s31, %s34
    %p40 = scmp.eq.s32.totalorder %s7, 0
    %p41 = por %p39, %p40
    %p42 = scmp.ne.s32.totalorder %s31, %s34
    %p43 = scmp.eq.s32.totalorder %s12, 1
    %p44 = por %p42, %p43
    %p45 = scmp.ne.s32.totalorder %s34, %s35
    %p46 = scmp.eq.s32.totalorder %s12, 0
    %p47 = por %p45, %p46
    %p48 = scmp.ne.s32.totalorder %s34, %s35
    %p49 = scmp.eq.s32.totalorder %s13, 1
    %p50 = por %p48, %p49
    %p52 = scmp.ne.s32.totalorder %s35, %s51
    %p53 = scmp.eq.s32.totalorder %s13, 0
    %p54 = por %p52, %p53
    %s55 = ssub.s32 %s14, %s26
    %s56 = ssub.s32 %s15, %s22
    %s57 = sor.u32 %s55, %s56
    %p58 = scmp.eq.s32.totalorder %s57, 0
    %s60 = sadd.s32 %s59, 1
    %s61 = scalar_select %p58, %s59, %s60
    %p64 = pneg %p58
    %p65 = scmp.eq.s32.totalorder %s7, 1
    %p66 = por %p64, %p65
    %p67 = scmp.ne.s32.totalorder %s59, %s62
    %p68 = scmp.eq.s32.totalorder %s7, 0
    %p69 = por %p67, %p68
    %p70 = scmp.ne.s32.totalorder %s59, %s62
    %p71 = scmp.eq.s32.totalorder %s12, 1
    %p72 = por %p70, %p71
    %p73 = scmp.ne.s32.totalorder %s62, %s63
    %p74 = scmp.eq.s32.totalorder %s12, 0
    %p75 = por %p73, %p74
    %p76 = scmp.ne.s32.totalorder %s62, %s63
    %p77 = scmp.eq.s32.totalorder %s13, 1
    %p78 = por %p76, %p77
    %p80 = scmp.ne.s32.totalorder %s63, %s79
    %p81 = scmp.eq.s32.totalorder %s13, 0
    %p82 = por %p80, %p81
    %p83 = scmp.le.s32.totalorder 1, %s7
    %p84 = scmp.lt.s32.totalorder %s7, 3
    %p85 = pnand %p83, %p84
    %p86 = pneg %p85
    // Predicated region
    $region9: #{_lambda_.28} parent=5 // pred_check
      _
    $region10: #{_lambda_.28} parent=5 // pred_check_branch
      %88 = sbr.rel (%p85) target = $region12
    $region11: #{_lambda_.28} parent=5 // pred_region
      %s89 = ssub.s32 %s7, 1
    $region12: #{_lambda_.28} parent=5 // pred_fallthru
      _
    %p90 = scmp.lt.s32.totalorder %s7, 2
    // Predicated region
    $region13: #{_lambda_.28} parent=5 // pred_check
      %p91 = pneg %p90
    $region14: #{_lambda_.28} parent=5 // pred_check_branch
      %93 = sbr.rel (%p91) target = $region16
    $region15: #{_lambda_.28} parent=5 // pred_region
      // Predicated region
      $region17: #{_lambda_.28} parent=15 // pred_check
        %p94 = pneg %p41
      $region18: #{_lambda_.28} parent=15 // pred_check_branch
        %96 = sbr.rel (%p94) target = $region20
      $region19: #{_lambda_.28} parent=15 // pred_region
        %p97 = scmp.lt.s32.totalorder %s14, 1
        %s98 = scalar_select %p97, %s14, 1
        %p99 = scmp.lt.s32.totalorder %s15, 0
        %s100 = scalar_select %p99, %s15, 0
        %s101 = smul.addr %s98, 3
        %s102 = sadd.s32 %s100, %s101
        %s103 = smul.addr %s102, 4
        %s104 = scalar_lea.vmem %s0, %s103
      $region20: #{_lambda_.28} parent=15 // pred_fallthru
        _
    $region16: #{_lambda_.28} parent=5 // pred_fallthru
      _
    %p105 = scmp.le.s32.totalorder 1, %s7
    %p106 = scmp.lt.s32.totalorder %s7, 3
    %p107 = pnand %p105, %p106
    %p108 = pneg %p107
    // Predicated region
    $region21: #{_lambda_.28} parent=5 // pred_check
      _
    $region22: #{_lambda_.28} parent=5 // pred_check_branch
      %110 = sbr.rel (%p107) target = $region24
    $region23: #{_lambda_.28} parent=5 // pred_region
      %s111 = ssub.s32 %s7, 1
      %p112 = scmp.lt.s32.totalorder %s16, 1
      %s113 = scalar_select %p112, %s16, 1
      %p114 = scmp.lt.s32.totalorder %s17, 0
      %s115 = scalar_select %p114, %s17, 0
      %s116 = smul.addr %s113, 3
      %s117 = sadd.s32 %s115, %s116
      %s118 = smul.addr %s117, 4
      %s119 = scalar_lea.vmem %s0, %s118
      %p120 = pneg %p47
      %p121 = pneg %p44
      %p122 = pneg %p75
      %p123 = pneg %p72
      %p124 = scmp.lt.s32.totalorder %s16, 1
      %s125 = scalar_select %p124, %s16, 1
      %p126 = scmp.lt.s32.totalorder %s17, 0
      %s127 = scalar_select %p126, %s17, 0
      %s128 = sadd.s32 %s127, %s125
      %s129 = smul.addr %s128, 4
      %s130 = scalar_lea.vmem %s1, %s129
      %p131 = scmp.lt.s32.totalorder %s16, 1
      %s132 = scalar_select %p131, %s16, 1
      %p133 = scmp.lt.s32.totalorder %s17, 0
      %s134 = scalar_select %p133, %s17, 0
      %s135 = smul.addr %s132, 3
      %s136 = sadd.s32 %s134, %s135
      %s137 = smul.addr %s136, 4
      %s138 = scalar_lea.vmem %s0, %s137
      %p139 = scmp.lt.s32.totalorder %s16, 1
      %s140 = scalar_select %p139, %s16, 1
      %p141 = scmp.lt.s32.totalorder %s17, 0
      %s142 = scalar_select %p141, %s17, 0
      %s143 = sadd.s32 %s142, %s140
      %s144 = smul.addr %s143, 4
      %s145 = scalar_lea.vmem %s1, %s144
      %v147 = vld [vmem:[%s138] sm:$0xf]
      %s148 = scalar_lea.vmem %s138, 4
      %v149 = vld [vmem:[%s148] sm:$0xf]
      %s150 = scalar_lea.vmem %s138, 8
      %v151 = vld [vmem:[%s150] sm:$0xf]
      %vm152 = vcmask 523264
      %v154 = vsel %vm152, %v147, 0
      %v157 = vsel %vm152, %v149, 0
      %159 = vmatpush.bf16.xpose.msra.mxu0 0
      %160 = vmatpush.bf16.xpose.msra.mxu0 0
      %161 = vmatpush.bf16.xpose.msra.mxu0 0
      %162 = vmatpush.bf16.xpose.msra.mxu0 0
      %163 = vmatpush.bf16.xpose.msra.mxu0 0
      %164 = vmatpush.bf16.xpose.msra.mxu0 0
      %165 = vmatpush.bf16.xpose.msra.mxu0 0
      %166 = vmatpush.bf16.xpose.msra.mxu0 %v157
      %167 = vmatmul.bf16.gmra.mxu0 %v154
      %v168 = vpop.f32.mrf.mxu0
      %v169 = vadd.f32 0.0, %v168
      %v170 = vpop.f32.mrf.mxu0
      %171 = vdwg.mxu0
      %v172 = vlaneseq
      %v173 = vand.u32 %v172, 127
      %vm174 = vcmp.lt.s32.totalorder %v173, 5
      %v175 = vsel %vm174, %v169, -inf
      %vm176 = vcmask 64512
      %v177 = vsel %vm176, %v175, -inf
      %178 = vmax.xlane.f32.xlu0 %v177
      %v179 = vpop.xlane.xlu0 %178
      %v180 = vsub.f32 %v175, %v179
      %v181 = vmul.f32 %v180, 1.442695
      %v182 = vpow.pop %v181
      %v183 = vsel %vm176, %v182, 0.0
      %184 = vadd.xlane.f32.xlu0 %v183
      %v185 = vpop.xlane.xlu0 %184
      %v186 = vrcp.pop %v185
      %v187 = vmul.f32 %v182, %v186
      %v188 = vpack.c.bf16 %v187, %v187
      %v190 = vsel %vm176, %v188, 0
      %vm192 = vcmask 1043456
      %v194 = vsel %vm192, %v151, 0
      %196 = vmatpush.bf16.msra.mxu0 0
      %197 = vmatpush.bf16.msra.mxu0 0
      %198 = vmatpush.bf16.msra.mxu0 0
      %199 = vmatpush.bf16.msra.mxu0 0
      %200 = vmatpush.bf16.msra.mxu0 0
      %201 = vmatpush.bf16.msra.mxu0 0
      %202 = vmatpush.bf16.msra.mxu0 0
      %203 = vmatpush.bf16.msra.mxu0 %v194
      %204 = vmatmul.bf16.gmra.mxu0 %v190
      %v205 = vpop.f32.mrf.mxu0
      %v206 = vadd.f32 0.0, %v205
      %v207 = vpop.f32.mrf.mxu0
      %208 = vdwg.mxu0
      %v209 = vpack.c.bf16 %v206, %v206
      %vm210 = vcmask 519168
      %211 = vst.msk [vmem:[%s145] sm:$0xf] %vm210, %v209
      %p212 = scmp.lt.s32.totalorder %s16, 1
      %s213 = scalar_select %p212, %s16, 1
      %p214 = scmp.lt.s32.totalorder %s17, 0
      %s215 = scalar_select %p214, %s17, 0
      %s216 = sadd.s32 %s215, %s213
      %s217 = smul.addr %s216, 4
      %s218 = scalar_lea.vmem %s1, %s217
      // Predicated region
      $region25: #{_lambda_.28} parent=23 // pred_check
        %p219 = pneg %p72
      $region26: #{_lambda_.28} parent=23 // pred_check_branch
        %221 = sbr.rel (%p219) target = $region28
      $region27: #{_lambda_.28} parent=23 // pred_region
        _
      $region28: #{_lambda_.28} parent=23 // pred_fallthru
        _
    $region24: #{_lambda_.28} parent=5 // pred_fallthru
      _
    %p222 = scmp.le.s32.totalorder 2, %s7
    // Predicated region
    $region29: #{_lambda_.28} parent=5 // pred_check
      %p223 = pneg %p222
    $region30: #{_lambda_.28} parent=5 // pred_check_branch
      %225 = sbr.rel (%p223) target = $region32
    $region31: #{_lambda_.28} parent=5 // pred_region
      %s226 = ssub.s32 %s7, 2
      // Predicated region
      $region33: #{_lambda_.28} parent=31 // pred_check
        %p227 = pneg %p78
      $region34: #{_lambda_.28} parent=31 // pred_check_branch
        %229 = sbr.rel (%p227) target = $region36
      $region35: #{_lambda_.28} parent=31 // pred_region
        %p230 = scmp.lt.s32.totalorder %s18, 1
        %s231 = scalar_select %p230, %s18, 1
        %p232 = scmp.lt.s32.totalorder %s19, 0
        %s233 = scalar_select %p232, %s19, 0
        %s234 = sadd.s32 %s233, %s231
        %s235 = smul.addr %s234, 4
        %s236 = scalar_lea.vmem %s1, %s235
      $region36: #{_lambda_.28} parent=31 // pred_fallthru
        _
    $region32: #{_lambda_.28} parent=5 // pred_fallthru
      _
  $region6: #{_lambda_.28} parent=0 // loop_footer
    %s11 = sadd.s32 1, %s7
  $region7: #{_lambda_.28} parent=0 // loop_footer_branch
    %6 = sbr.rel target = $region3
  $region8: #{_lambda_.28} parent=0 // loop_exit
    _

// kernel: _lambda_.29
$region0: #{_lambda_.29}
  #allocation0 [shape = 'u32[]', space=smem, size = 0x4, offset = 0x4, fixed_abs, tag = 'smem constant byte address 0x4 - core index']
  #allocation1 [shape = 'u32[72,128]{1,0:T(1,128)}', space=vmem, size = 0x9000, scoped, tag = 'internal scratch']
  #allocation2 [shape = 'f32[16,64]{1,0:T(8,128)}', space=vmem, size = 0x2000, scoped, tag = 'scratch operand']
  %s0 = inlined_call_operand.vmem [shape: bf16[16,64], index: 0, kind: input, shape index: {}]
  %s1 = inlined_call_operand.vmem [shape: bf16[64,64], index: 1, kind: input, shape index: {}]
  %s2 = inlined_call_operand.vmem [shape: f32[1,64], index: 2, kind: input, shape index: {}]
  %s3 = inlined_call_operand.vmem [shape: bf16[16,64], index: 3, kind: input, shape index: {}]
  %s4 = inlined_call_operand.vmem [shape: bf16[16,64], index: 4, kind: output, shape index: {}]
  %s5 = sld [smem:[#allocation0]]
  $region34: #{_lambda_.29} parent=0
    _
  %s7 = ssub.s32 1, %s5
  %s8 = scalar_select 0, %s7, %s5
  // Predicated region
  $region2: #{_lambda_.29} parent=0 // pred_check
    _
  $region3: #{_lambda_.29} parent=0 // pred_check_branch
    %10 = sbr.rel (0) target = $region5
  $region4: #{_lambda_.29} parent=0 // pred_region
    _
  $region5: #{_lambda_.29} parent=0 // pred_fallthru
    _
  // Predicated region
  $region6: #{_lambda_.29} parent=0 // pred_check
    _
  $region7: #{_lambda_.29} parent=0 // pred_check_branch
    %12 = sbr.rel (0) target = $region9
  $region8: #{_lambda_.29} parent=0 // pred_region
    _
  $region9: #{_lambda_.29} parent=0 // pred_fallthru
    _
  // Predicated region
  $region10: #{_lambda_.29} parent=0 // pred_check
    _
  $region11: #{_lambda_.29} parent=0 // pred_check_branch
    %14 = sbr.rel (0) target = $region13
  $region12: #{_lambda_.29} parent=0 // pred_region
    _
  $region13: #{_lambda_.29} parent=0 // pred_fallthru
    _
  // Predicated region
  $region14: #{_lambda_.29} parent=0 // pred_check
    _
  $region15: #{_lambda_.29} parent=0 // pred_check_branch
    %16 = sbr.rel (0) target = $region17
  $region16: #{_lambda_.29} parent=0 // pred_region
    _
  $region17: #{_lambda_.29} parent=0 // pred_fallthru
    _
  %p18 = scmp.eq.s32.totalorder 0, 0
  // Predicated region
  $region18: #{_lambda_.29} parent=0 // pred_check
    %p19 = pneg %p18
  $region19: #{_lambda_.29} parent=0 // pred_check_branch
    %21 = sbr.rel (%p19) target = $region21
  $region20: #{_lambda_.29} parent=0 // pred_region
    %vm22 = vcmask 523264
    %23 = vst.msk [vmem:[#allocation2] sm:$0xff] %vm22, 0.0
    %24 = vst.msk [vmem:[#allocation2 + $0x8] sm:$0xff] %vm22, 0.0
  $region21: #{_lambda_.29} parent=0 // pred_fallthru
    _
  %v25 = vld [vmem:[#allocation2] sm:$0xff]
  %v26 = vld [vmem:[#allocation2 + $0x8] sm:$0xff]
  %v27 = vld [vmem:[%s0] sm:$0xf]
  %v28 = vld [vmem:[%s0 + $0x4] sm:$0xf]
  %v29 = vld [vmem:[%s1] sm:$0xf]
  %v30 = vld [vmem:[%s1 + $0x4] sm:$0xf]
  %v31 = vld [vmem:[%s1 + $0x8] sm:$0xf]
  %v32 = vld [vmem:[%s1 + $0xc] sm:$0xf]
  %v33 = vld [vmem:[%s1 + $0x10] sm:$0xf]
  %v34 = vld [vmem:[%s1 + $0x14] sm:$0xf]
  %v35 = vld [vmem:[%s1 + $0x18] sm:$0xf]
  %v36 = vld [vmem:[%s1 + $0x1c] sm:$0xf]
  %v39 = vunpack.c.l.b16 %v27
  %v40 = vunpack.c.l.b16 %v28
  %v41 = vpack.c.b16 %v40, %v39
  %v50 = vunpack.c.l.b16 %v29
  %v51 = vunpack.c.l.b16 %v30
  %v52 = vunpack.c.l.b16 %v31
  %v53 = vunpack.c.l.b16 %v32
  %v54 = vunpack.c.l.b16 %v33
  %v55 = vunpack.c.l.b16 %v34
  %v56 = vunpack.c.l.b16 %v35
  %v57 = vunpack.c.l.b16 %v36
  %v58 = vpack.c.b16 %v51, %v50
  %v59 = vpack.c.b16 %v53, %v52
  %v60 = vpack.c.b16 %v55, %v54
  %v61 = vpack.c.b16 %v57, %v56
  %vm66 = vcmask 523264
  %v68 = vsel %vm66, %v41, 0
  %70 = vmatpush.bf16.msra.mxu0 0
  %71 = vmatpush.bf16.msra.mxu0 0
  %72 = vmatpush.bf16.msra.mxu0 0
  %73 = vmatpush.bf16.msra.mxu0 0
  %74 = vmatpush.bf16.msra.mxu0 %v61
  %75 = vmatpush.bf16.msra.mxu0 %v60
  %76 = vmatpush.bf16.msra.mxu0 %v59
  %77 = vmatpush.bf16.msra.mxu0 %v58
  %78 = vmatmul.bf16.gmra.mxu0 %v68
  %v79 = vpop.f32.mrf.mxu0
  %v80 = vadd.f32 0.0, %v79
  %v81 = vpop.f32.mrf.mxu0
  %v82 = vadd.f32 0.0, %v81
  %83 = vdwg.mxu0
  %v84 = vadd.f32 %v25, %v80
  %v85 = vadd.f32 %v26, %v82
  %86 = vst.msk [vmem:[#allocation2] sm:$0xff] %vm66, %v84
  %87 = vst.msk [vmem:[#allocation2 + $0x8] sm:$0xff] %vm66, %v85
  // Predicated region
  $region22: #{_lambda_.29} parent=0 // pred_check
    %p88 = pneg %p18
  $region23: #{_lambda_.29} parent=0 // pred_check_branch
    %90 = sbr.rel (%p88) target = $region25
  $region24: #{_lambda_.29} parent=0 // pred_region
    %v91 = vld [vmem:[#allocation2] sm:$0xff]
    %v92 = vld [vmem:[#allocation2 + $0x8] sm:$0xff]
    %v93 = vld [vmem:[%s2] sm:$0x1]
    %v95 = vperm.slane %v93, 0
    %v97 = vadd.f32 %v91, %v95
    %v98 = vadd.f32 %v92, %v95
    %v99 = vld [vmem:[%s3] sm:$0xf]
    %v100 = vld [vmem:[%s3 + $0x4] sm:$0xf]
    %v101 = vunpack.c.l.bf16 %v99
    %v102 = vunpack.c.l.bf16 %v100
    %v103 = vadd.f32 %v97, %v101
    %v104 = vadd.f32 %v98, %v102
    %v105 = vpack.c.bf16 %v103, %v103
    %v106 = vpack.c.bf16 %v104, %v104
    %vm107 = vcmask 519168
    %108 = vst.msk [vmem:[%s4] sm:$0xf] %vm107, %v105
    %109 = vst.msk [vmem:[%s4 + $0x4] sm:$0xf] %vm107, %v106
  $region25: #{_lambda_.29} parent=0 // pred_fallthru
    _
  // Predicated region
  $region26: #{_lambda_.29} parent=0 // pred_check
    _
  $region27: #{_lambda_.29} parent=0 // pred_check_branch
    %111 = sbr.rel (0) target = $region29
  $region28: #{_lambda_.29} parent=0 // pred_region
    _
  $region29: #{_lambda_.29} parent=0 // pred_fallthru
    _
  // Predicated region
  $region30: #{_lambda_.29} parent=0 // pred_check
    _
  $region31: #{_lambda_.29} parent=0 // pred_check_branch
    %113 = sbr.rel (0) target = $region33
  $region32: #{_lambda_.29} parent=0 // pred_region
    _
  $region33: #{_lambda_.29} parent=0 // pred_fallthru
    _

// kernel: _lambda_.30
$region0: #{_lambda_.30}
  #allocation0 [shape = 'u32[]', space=smem, size = 0x4, offset = 0x4, fixed_abs, tag = 'smem constant byte address 0x4 - core index']
  #allocation1 [shape = 'u32[72,128]{1,0:T(1,128)}', space=vmem, size = 0x9000, scoped, tag = 'internal scratch']
  #allocation2 [shape = 'bf16[16,64]{1,0:T(8,128)(2,1)}', space=vmem, size = 0x1000, scoped, tag = 'scratch operand']
  %s0 = inlined_call_operand.vmem [shape: bf16[16,64], index: 0, kind: input, shape index: {}]
  %s1 = inlined_call_operand.vmem [shape: f32[1,64], index: 1, kind: input, shape index: {}]
  %s2 = inlined_call_operand.vmem [shape: f32[1,64], index: 2, kind: input, shape index: {}]
  %s3 = inlined_call_operand.vmem [shape: bf16[64,256], index: 3, kind: input, shape index: {}]
  %s4 = inlined_call_operand.vmem [shape: f32[1,256], index: 4, kind: input, shape index: {}]
  %s5 = inlined_call_operand.vmem [shape: bf16[16,256], index: 5, kind: output, shape index: {}]
  %s6 = sld [smem:[#allocation0]]
  $region34: #{_lambda_.30} parent=0
    _
  %s8 = ssub.s32 1, %s6
  %s9 = scalar_select 0, %s8, %s6
  // Predicated region
  $region2: #{_lambda_.30} parent=0 // pred_check
    _
  $region3: #{_lambda_.30} parent=0 // pred_check_branch
    %11 = sbr.rel (0) target = $region5
  $region4: #{_lambda_.30} parent=0 // pred_region
    _
  $region5: #{_lambda_.30} parent=0 // pred_fallthru
    _
  // Predicated region
  $region6: #{_lambda_.30} parent=0 // pred_check
    _
  $region7: #{_lambda_.30} parent=0 // pred_check_branch
    %13 = sbr.rel (0) target = $region9
  $region8: #{_lambda_.30} parent=0 // pred_region
    _
  $region9: #{_lambda_.30} parent=0 // pred_fallthru
    _
  // Predicated region
  $region10: #{_lambda_.30} parent=0 // pred_check
    _
  $region11: #{_lambda_.30} parent=0 // pred_check_branch
    %15 = sbr.rel (0) target = $region13
  $region12: #{_lambda_.30} parent=0 // pred_region
    _
  $region13: #{_lambda_.30} parent=0 // pred_fallthru
    _
  // Predicated region
  $region14: #{_lambda_.30} parent=0 // pred_check
    _
  $region15: #{_lambda_.30} parent=0 // pred_check_branch
    %17 = sbr.rel (0) target = $region17
  $region16: #{_lambda_.30} parent=0 // pred_region
    _
  $region17: #{_lambda_.30} parent=0 // pred_fallthru
    _
  // Predicated region
  $region18: #{_lambda_.30} parent=0 // pred_check
    _
  $region19: #{_lambda_.30} parent=0 // pred_check_branch
    %19 = sbr.rel (0) target = $region21
  $region20: #{_lambda_.30} parent=0 // pred_region
    _
  $region21: #{_lambda_.30} parent=0 // pred_fallthru
    _
  %p21 = scmp.eq.s32.totalorder 0, 0
  // Predicated region
  $region22: #{_lambda_.30} parent=0 // pred_check
    %p22 = pneg %p21
  $region23: #{_lambda_.30} parent=0 // pred_check_branch
    %24 = sbr.rel (%p22) target = $region25
  $region24: #{_lambda_.30} parent=0 // pred_region
    %v25 = vld [vmem:[%s0] sm:$0xf]
    %v26 = vld [vmem:[%s0 + $0x4] sm:$0xf]
    %v27 = vunpack.c.l.bf16 %v25
    %v28 = vunpack.c.l.bf16 %v26
    %vm29 = vcmask 523264
    %v30 = vsel %vm29, %v27, 0.0
    %31 = vadd.xlane.f32.xlu0 %v30
    %v32 = vpop.xlane.xlu0 %31
    %v33 = vsel %vm29, %v28, 0.0
    %34 = vadd.xlane.f32.xlu0 %v33
    %v35 = vpop.xlane.xlu0 %34
    %v36 = vrcp.pop 64.0
    %v37 = vmul.f32 64.0, %v36
    %v38 = vsub.f32 1.0, %v37
    %v39 = vmul.f32 %v36, %v38
    %v40 = vadd.f32 %v36, %v39
    %vm41 = vweird.f32 %v36
    %v42 = vsel %vm41, %v36, %v40
    %v43 = vmul.f32 %v32, %v42
    %v44 = vmul.f32 %v35, %v42
    %v45 = vsub.f32 %v27, %v43
    %v46 = vsub.f32 %v28, %v44
    %v47 = vmul.f32 %v45, %v45
    %v48 = vmul.f32 %v46, %v46
    %v49 = vsel %vm29, %v47, 0.0
    %50 = vadd.xlane.f32.xlu0 %v49
    %v51 = vpop.xlane.xlu0 %50
    %v52 = vsel %vm29, %v48, 0.0
    %53 = vadd.xlane.f32.xlu0 %v52
    %v54 = vpop.xlane.xlu0 %53
    %v55 = vmul.f32 %v51, %v42
    %v56 = vmul.f32 %v54, %v42
    %v57 = vadd.f32 %v55, 1e-05
    %v58 = vadd.f32 %v56, 1e-05
    %v59 = vrsqrt.pop %v57
    %v60 = vmul.f32 %v59, %v57
    %v61 = vmul.f32 %v60, %v59
    %v62 = vmul.f32 0.5, %v61
    %v63 = vsub.f32 1.5, %v62
    %v64 = vmul.f32 %v59, %v63
    %vm65 = vweird.f32 %v57
    %vm66 = vweird.f32 %v59
    %vm67 = vmor %vm65, %vm66
    %v68 = vsel %vm67, %v59, %v64
    %v69 = vrsqrt.pop %v58
    %v70 = vmul.f32 %v69, %v58
    %v71 = vmul.f32 %v70, %v69
    %v72 = vmul.f32 0.5, %v71
    %v73 = vsub.f32 1.5, %v72
    %v74 = vmul.f32 %v69, %v73
    %vm75 = vweird.f32 %v58
    %vm76 = vweird.f32 %v69
    %vm77 = vmor %vm75, %vm76
    %v78 = vsel %vm77, %v69, %v74
    %v79 = vmul.f32 %v45, %v68
    %v80 = vmul.f32 %v46, %v78
    %v81 = vld [vmem:[%s1] sm:$0x1]
    %v83 = vperm.slane %v81, 0
    %v85 = vmul.f32 %v79, %v83
    %v86 = vmul.f32 %v80, %v83
    %v87 = vld [vmem:[%s2] sm:$0x1]
    %v89 = vperm.slane %v87, 0
    %v91 = vadd.f32 %v85, %v89
    %v92 = vadd.f32 %v86, %v89
    %v93 = vpack.c.bf16 %v91, %v91
    %v94 = vpack.c.bf16 %v92, %v92
    %vm95 = vcmask 519168
    %96 = vst.msk [vmem:[#allocation2] sm:$0xf] %vm95, %v93
    %97 = vst.msk [vmem:[#allocation2 + $0x4] sm:$0xf] %vm95, %v94
  $region25: #{_lambda_.30} parent=0 // pred_fallthru
    _
  %v98 = vld [vmem:[#allocation2] sm:$0xf]
  %v99 = vld [vmem:[#allocation2 + $0x4] sm:$0xf]
  %v100 = vld [vmem:[%s3] sm:$0xff]
  %v101 = vld [vmem:[%s3 + $0x8] sm:$0xff]
  %v102 = vld [vmem:[%s3 + $0x10] sm:$0xff]
  %v103 = vld [vmem:[%s3 + $0x18] sm:$0xff]
  %v104 = vld [vmem:[%s3 + $0x20] sm:$0xff]
  %v105 = vld [vmem:[%s3 + $0x28] sm:$0xff]
  %v106 = vld [vmem:[%s3 + $0x30] sm:$0xff]
  %v107 = vld [vmem:[%s3 + $0x38] sm:$0xff]
  %v108 = vld [vmem:[%s4] sm:$0x3]
  %v110 = vperm.slane %v108, 0
  %v111 = vperm.slane %v108, 1
  %v116 = vunpack.c.l.b16 %v98
  %v117 = vunpack.c.l.b16 %v99
  %v118 = vpack.c.b16 %v117, %v116
  %v127 = vunpack.c.l.b16 %v100
  %v128 = vunpack.c.h.b16 %v100
  %v129 = vunpack.c.l.b16 %v101
  %v130 = vunpack.c.h.b16 %v101
  %v131 = vunpack.c.l.b16 %v102
  %v132 = vunpack.c.h.b16 %v102
  %v133 = vunpack.c.l.b16 %v103
  %v134 = vunpack.c.h.b16 %v103
  %v135 = vunpack.c.l.b16 %v104
  %v136 = vunpack.c.h.b16 %v104
  %v137 = vunpack.c.l.b16 %v105
  %v138 = vunpack.c.h.b16 %v105
  %v139 = vunpack.c.l.b16 %v106
  %v140 = vunpack.c.h.b16 %v106
  %v141 = vunpack.c.l.b16 %v107
  %v142 = vunpack.c.h.b16 %v107
  %v143 = vpack.c.b16 %v129, %v127
  %v144 = vpack.c.b16 %v130, %v128
  %v145 = vpack.c.b16 %v133, %v131
  %v146 = vpack.c.b16 %v134, %v132
  %v147 = vpack.c.b16 %v137, %v135
  %v148 = vpack.c.b16 %v138, %v136
  %v149 = vpack.c.b16 %v141, %v139
  %v150 = vpack.c.b16 %v142, %v140
  %vm159 = vcmask 523264
  %v161 = vsel %vm159, %v118, 0
  %163 = vmatpush.bf16.msra.mxu0 0
  %164 = vmatpush.bf16.msra.mxu0 0
  %165 = vmatpush.bf16.msra.mxu0 0
  %166 = vmatpush.bf16.msra.mxu0 0
  %167 = vmatpush.bf16.msra.mxu0 %v149
  %168 = vmatpush.bf16.msra.mxu0 %v147
  %169 = vmatpush.bf16.msra.mxu0 %v145
  %170 = vmatpush.bf16.msra.mxu0 %v143
  %171 = vmatmul.bf16.gmra.mxu0 %v161
  %v172 = vpop.f32.mrf.mxu0
  %v173 = vadd.f32 %v110, %v172
  %v174 = vpop.f32.mrf.mxu0
  %v175 = vadd.f32 %v110, %v174
  %176 = vdwg.mxu0
  %177 = vmatpush.bf16.msra.mxu0 0
  %178 = vmatpush.bf16.msra.mxu0 0
  %179 = vmatpush.bf16.msra.mxu0 0
  %180 = vmatpush.bf16.msra.mxu0 0
  %181 = vmatpush.bf16.msra.mxu0 %v150
  %182 = vmatpush.bf16.msra.mxu0 %v148
  %183 = vmatpush.bf16.msra.mxu0 %v146
  %184 = vmatpush.bf16.msra.mxu0 %v144
  %185 = vmatmul.bf16.gmra.mxu0 %v161
  %v186 = vpop.f32.mrf.mxu0
  %v187 = vadd.f32 %v111, %v186
  %v188 = vpop.f32.mrf.mxu0
  %v189 = vadd.f32 %v111, %v188
  %190 = vdwg.mxu0
  %v191 = vmul.f32 %v173, 1.702
  %v192 = vmul.f32 %v187, 1.702
  %v193 = vmul.f32 %v175, 1.702
  %v194 = vmul.f32 %v189, 1.702
  %v195 = vxor.u32 %v191, 2147483648
  %v196 = vxor.u32 %v192, 2147483648
  %v197 = vxor.u32 %v193, 2147483648
  %v198 = vxor.u32 %v194, 2147483648
  %v199 = vmul.f32 %v195, 1.442695
  %v200 = vpow.pop %v199
  %v201 = vmul.f32 %v196, 1.442695
  %v202 = vpow.pop %v201
  %v203 = vmul.f32 %v197, 1.442695
  %v204 = vpow.pop %v203
  %v205 = vmul.f32 %v198, 1.442695
  %v206 = vpow.pop %v205
  %v207 = vadd.f32 %v200, 1.0
  %v208 = vadd.f32 %v202, 1.0
  %v209 = vadd.f32 %v204, 1.0
  %v210 = vadd.f32 %v206, 1.0
  %v211 = vrcp.pop %v207
  %v212 = vmul.f32 %v207, %v211
  %v213 = vsub.f32 1.0, %v212
  %v214 = vmul.f32 %v211, %v213
  %v215 = vadd.f32 %v211, %v214
  %vm216 = vweird.f32 %v207
  %vm217 = vweird.f32 %v211
  %vm218 = vmor %vm216, %vm217
  %v219 = vsel %vm218, %v211, %v215
  %v220 = vand.u32 2147483647, %v207
  %vm221 = vcmp.eq.f32.partialorder %v220, 8.507059e+37
  %v222 = vand.u32 %v207, 2147483648
  %v223 = vor.u32 1.1754944e-38, %v222
  %v224 = vsel %vm221, %v223, %v219
  %v225 = vmul.f32 1.0, %v224
  %v226 = vrcp.pop %v208
  %v227 = vmul.f32 %v208, %v226
  %v228 = vsub.f32 1.0, %v227
  %v229 = vmul.f32 %v226, %v228
  %v230 = vadd.f32 %v226, %v229
  %vm231 = vweird.f32 %v208
  %vm232 = vweird.f32 %v226
  %vm233 = vmor %vm231, %vm232
  %v234 = vsel %vm233, %v226, %v230
  %v235 = vand.u32 2147483647, %v208
  %vm236 = vcmp.eq.f32.partialorder %v235, 8.507059e+37
  %v237 = vand.u32 %v208, 2147483648
  %v238 = vor.u32 1.1754944e-38, %v237
  %v239 = vsel %vm236, %v238, %v234
  %v240 = vmul.f32 1.0, %v239
  %v241 = vrcp.pop %v209
  %v242 = vmul.f32 %v209, %v241
  %v243 = vsub.f32 1.0, %v242
  %v244 = vmul.f32 %v241, %v243
  %v245 = vadd.f32 %v241, %v244
  %vm246 = vweird.f32 %v209
  %vm247 = vweird.f32 %v241
  %vm248 = vmor %vm246, %vm247
  %v249 = vsel %vm248, %v241, %v245
  %v250 = vand.u32 2147483647, %v209
  %vm251 = vcmp.eq.f32.partialorder %v250, 8.507059e+37
  %v252 = vand.u32 %v209, 2147483648
  %v253 = vor.u32 1.1754944e-38, %v252
  %v254 = vsel %vm251, %v253, %v249
  %v255 = vmul.f32 1.0, %v254
  %v256 = vrcp.pop %v210
  %v257 = vmul.f32 %v210, %v256
  %v258 = vsub.f32 1.0, %v257
  %v259 = vmul.f32 %v256, %v258
  %v260 = vadd.f32 %v256, %v259
  %vm261 = vweird.f32 %v210
  %vm262 = vweird.f32 %v256
  %vm263 = vmor %vm261, %vm262
  %v264 = vsel %vm263, %v256, %v260
  %v265 = vand.u32 2147483647, %v210
  %vm266 = vcmp.eq.f32.partialorder %v265, 8.507059e+37
  %v267 = vand.u32 %v210, 2147483648
  %v268 = vor.u32 1.1754944e-38, %v267
  %v269 = vsel %vm266, %v268, %v264
  %v270 = vmul.f32 1.0, %v269
  %v271 = vmul.f32 %v173, %v225
  %v272 = vmul.f32 %v187, %v240
  %v273 = vmul.f32 %v175, %v255
  %v274 = vmul.f32 %v189, %v270
  %v275 = vpack.c.bf16 %v272, %v271
  %v276 = vpack.c.bf16 %v274, %v273
  %277 = vst [vmem:[%s5] sm:$0xff] %v275
  %278 = vst [vmem:[%s5 + $0x8] sm:$0xff] %v276
  // Predicated region
  $region26: #{_lambda_.30} parent=0 // pred_check
    _
  $region27: #{_lambda_.30} parent=0 // pred_check_branch
    %280 = sbr.rel (0) target = $region29
  $region28: #{_lambda_.30} parent=0 // pred_region
    _
  $region29: #{_lambda_.30} parent=0 // pred_fallthru
    _
  // Predicated region
  $region30: #{_lambda_.30} parent=0 // pred_check
    _
  $region31: #{_lambda_.30} parent=0 // pred_check_branch
    %282 = sbr.rel (0) target = $region33
  $region32: #{_lambda_.30} parent=0 // pred_region
    _
  $region33: #{_lambda_.30} parent=0 // pred_fallthru
    _

// kernel: _lambda_.31
$region0: #{_lambda_.31}
  #allocation0 [shape = 'u32[]', space=smem, size = 0x4, offset = 0x4, fixed_abs, tag = 'smem constant byte address 0x4 - core index']
  #allocation1 [shape = 'u32[72,128]{1,0:T(1,128)}', space=vmem, size = 0x9000, scoped, tag = 'internal scratch']
  #allocation2 [shape = 'f32[16,64]{1,0:T(8,128)}', space=vmem, size = 0x2000, scoped, tag = 'scratch operand']
  %s0 = inlined_call_operand.vmem [shape: bf16[16,256], index: 0, kind: input, shape index: {}]
  %s1 = inlined_call_operand.vmem [shape: bf16[256,64], index: 1, kind: input, shape index: {}]
  %s2 = inlined_call_operand.vmem [shape: f32[1,64], index: 2, kind: input, shape index: {}]
  %s3 = inlined_call_operand.vmem [shape: bf16[16,64], index: 3, kind: input, shape index: {}]
  %s4 = inlined_call_operand.vmem [shape: bf16[16,64], index: 4, kind: output, shape index: {}]
  %s5 = sld [smem:[#allocation0]]
  $region34: #{_lambda_.31} parent=0
    _
  %s7 = ssub.s32 1, %s5
  %s8 = scalar_select 0, %s7, %s5
  // Predicated region
  $region2: #{_lambda_.31} parent=0 // pred_check
    _
  $region3: #{_lambda_.31} parent=0 // pred_check_branch
    %10 = sbr.rel (0) target = $region5
  $region4: #{_lambda_.31} parent=0 // pred_region
    _
  $region5: #{_lambda_.31} parent=0 // pred_fallthru
    _
  // Predicated region
  $region6: #{_lambda_.31} parent=0 // pred_check
    _
  $region7: #{_lambda_.31} parent=0 // pred_check_branch
    %12 = sbr.rel (0) target = $region9
  $region8: #{_lambda_.31} parent=0 // pred_region
    _
  $region9: #{_lambda_.31} parent=0 // pred_fallthru
    _
  // Predicated region
  $region10: #{_lambda_.31} parent=0 // pred_check
    _
  $region11: #{_lambda_.31} parent=0 // pred_check_branch
    %14 = sbr.rel (0) target = $region13
  $region12: #{_lambda_.31} parent=0 // pred_region
    _
  $region13: #{_lambda_.31} parent=0 // pred_fallthru
    _
  // Predicated region
  $region14: #{_lambda_.31} parent=0 // pred_check
    _
  $region15: #{_lambda_.31} parent=0 // pred_check_branch
    %16 = sbr.rel (0) target = $region17
  $region16: #{_lambda_.31} parent=0 // pred_region
    _
  $region17: #{_lambda_.31} parent=0 // pred_fallthru
    _
  %p17 = scmp.eq.s32.totalorder 0, 0
  // Predicated region
  $region18: #{_lambda_.31} parent=0 // pred_check
    %p18 = pneg %p17
  $region19: #{_lambda_.31} parent=0 // pred_check_branch
    %20 = sbr.rel (%p18) target = $region21
  $region20: #{_lambda_.31} parent=0 // pred_region
    %vm21 = vcmask 523264
    %22 = vst.msk [vmem:[#allocation2] sm:$0xff] %vm21, 0.0
    %23 = vst.msk [vmem:[#allocation2 + $0x8] sm:$0xff] %vm21, 0.0
  $region21: #{_lambda_.31} parent=0 // pred_fallthru
    _
  %v24 = vld [vmem:[#allocation2] sm:$0xff]
  %v25 = vld [vmem:[#allocation2 + $0x8] sm:$0xff]
  %v26 = vld [vmem:[%s0] sm:$0xff]
  %v27 = vld [vmem:[%s0 + $0x8] sm:$0xff]
  %v28 = vld [vmem:[%s1] sm:$0xf]
  %v29 = vld [vmem:[%s1 + $0x4] sm:$0xf]
  %v30 = vld [vmem:[%s1 + $0x8] sm:$0xf]
  %v31 = vld [vmem:[%s1 + $0xc] sm:$0xf]
  %v32 = vld [vmem:[%s1 + $0x10] sm:$0xf]
  %v33 = vld [vmem:[%s1 + $0x14] sm:$0xf]
  %v34 = vld [vmem:[%s1 + $0x18] sm:$0xf]
  %v35 = vld [vmem:[%s1 + $0x1c] sm:$0xf]
  %v36 = vld [vmem:[%s1 + $0x20] sm:$0xf]
  %v37 = vld [vmem:[%s1 + $0x24] sm:$0xf]
  %v38 = vld [vmem:[%s1 + $0x28] sm:$0xf]
  %v39 = vld [vmem:[%s1 + $0x2c] sm:$0xf]
  %v40 = vld [vmem:[%s1 + $0x30] sm:$0xf]
  %v41 = vld [vmem:[%s1 + $0x34] sm:$0xf]
  %v42 = vld [vmem:[%s1 + $0x38] sm:$0xf]
  %v43 = vld [vmem:[%s1 + $0x3c] sm:$0xf]
  %v44 = vld [vmem:[%s1 + $0x40] sm:$0xf]
  %v45 = vld [vmem:[%s1 + $0x44] sm:$0xf]
  %v46 = vld [vmem:[%s1 + $0x48] sm:$0xf]
  %v47 = vld [vmem:[%s1 + $0x4c] sm:$0xf]
  %v48 = vld [vmem:[%s1 + $0x50] sm:$0xf]
  %v49 = vld [vmem:[%s1 + $0x54] sm:$0xf]
  %v50 = vld [vmem:[%s1 + $0x58] sm:$0xf]
  %v51 = vld [vmem:[%s1 + $0x5c] sm:$0xf]
  %v52 = vld [vmem:[%s1 + $0x60] sm:$0xf]
  %v53 = vld [vmem:[%s1 + $0x64] sm:$0xf]
  %v54 = vld [vmem:[%s1 + $0x68] sm:$0xf]
  %v55 = vld [vmem:[%s1 + $0x6c] sm:$0xf]
  %v56 = vld [vmem:[%s1 + $0x70] sm:$0xf]
  %v57 = vld [vmem:[%s1 + $0x74] sm:$0xf]
  %v58 = vld [vmem:[%s1 + $0x78] sm:$0xf]
  %v59 = vld [vmem:[%s1 + $0x7c] sm:$0xf]
  %v62 = vunpack.c.l.b16 %v26
  %v63 = vunpack.c.h.b16 %v26
  %v64 = vunpack.c.l.b16 %v27
  %v65 = vunpack.c.h.b16 %v27
  %v66 = vpack.c.b16 %v64, %v62
  %v67 = vpack.c.b16 %v65, %v63
  %v102 = vunpack.c.l.b16 %v28
  %v103 = vunpack.c.l.b16 %v29
  %v104 = vunpack.c.l.b16 %v30
  %v105 = vunpack.c.l.b16 %v31
  %v106 = vunpack.c.l.b16 %v32
  %v107 = vunpack.c.l.b16 %v33
  %v108 = vunpack.c.l.b16 %v34
  %v109 = vunpack.c.l.b16 %v35
  %v110 = vunpack.c.l.b16 %v36
  %v111 = vunpack.c.l.b16 %v37
  %v112 = vunpack.c.l.b16 %v38
  %v113 = vunpack.c.l.b16 %v39
  %v114 = vunpack.c.l.b16 %v40
  %v115 = vunpack.c.l.b16 %v41
  %v116 = vunpack.c.l.b16 %v42
  %v117 = vunpack.c.l.b16 %v43
  %v118 = vunpack.c.l.b16 %v44
  %v119 = vunpack.c.l.b16 %v45
  %v120 = vunpack.c.l.b16 %v46
  %v121 = vunpack.c.l.b16 %v47
  %v122 = vunpack.c.l.b16 %v48
  %v123 = vunpack.c.l.b16 %v49
  %v124 = vunpack.c.l.b16 %v50
  %v125 = vunpack.c.l.b16 %v51
  %v126 = vunpack.c.l.b16 %v52
  %v127 = vunpack.c.l.b16 %v53
  %v128 = vunpack.c.l.b16 %v54
  %v129 = vunpack.c.l.b16 %v55
  %v130 = vunpack.c.l.b16 %v56
  %v131 = vunpack.c.l.b16 %v57
  %v132 = vunpack.c.l.b16 %v58
  %v133 = vunpack.c.l.b16 %v59
  %v134 = vpack.c.b16 %v103, %v102
  %v135 = vpack.c.b16 %v105, %v104
  %v136 = vpack.c.b16 %v107, %v106
  %v137 = vpack.c.b16 %v109, %v108
  %v138 = vpack.c.b16 %v111, %v110
  %v139 = vpack.c.b16 %v113, %v112
  %v140 = vpack.c.b16 %v115, %v114
  %v141 = vpack.c.b16 %v117, %v116
  %v142 = vpack.c.b16 %v119, %v118
  %v143 = vpack.c.b16 %v121, %v120
  %v144 = vpack.c.b16 %v123, %v122
  %v145 = vpack.c.b16 %v125, %v124
  %v146 = vpack.c.b16 %v127, %v126
  %v147 = vpack.c.b16 %v129, %v128
  %v148 = vpack.c.b16 %v131, %v130
  %v149 = vpack.c.b16 %v133, %v132
  %166 = vmatpush.bf16.msra.mxu0 %v141
  %167 = vmatpush.bf16.msra.mxu0 %v140
  %168 = vmatpush.bf16.msra.mxu0 %v139
  %169 = vmatpush.bf16.msra.mxu0 %v138
  %170 = vmatpush.bf16.msra.mxu0 %v137
  %171 = vmatpush.bf16.msra.mxu0 %v136
  %172 = vmatpush.bf16.msra.mxu0 %v135
  %173 = vmatpush.bf16.msra.mxu0 %v134
  %174 = vmatmul.bf16.gmra.mxu0 %v66
  %v175 = vpop.f32.mrf.mxu0
  %v176 = vadd.f32 0.0, %v175
  %v177 = vpop.f32.mrf.mxu0
  %v178 = vadd.f32 0.0, %v177
  %179 = vdwg.mxu0
  %180 = vmatpush.bf16.msra.mxu0 %v149
  %181 = vmatpush.bf16.msra.mxu0 %v148
  %182 = vmatpush.bf16.msra.mxu0 %v147
  %183 = vmatpush.bf16.msra.mxu0 %v146
  %184 = vmatpush.bf16.msra.mxu0 %v145
  %185 = vmatpush.bf16.msra.mxu0 %v144
  %186 = vmatpush.bf16.msra.mxu0 %v143
  %187 = vmatpush.bf16.msra.mxu0 %v142
  %188 = vmatmul.bf16.gmra.mxu0 %v67
  %v189 = vpop.f32.mrf.mxu0
  %v190 = vadd.f32 %v176, %v189
  %v191 = vpop.f32.mrf.mxu0
  %v192 = vadd.f32 %v178, %v191
  %193 = vdwg.mxu0
  %v194 = vadd.f32 %v24, %v190
  %v195 = vadd.f32 %v25, %v192
  %vm196 = vcmask 523264
  %197 = vst.msk [vmem:[#allocation2] sm:$0xff] %vm196, %v194
  %198 = vst.msk [vmem:[#allocation2 + $0x8] sm:$0xff] %vm196, %v195
  // Predicated region
  $region22: #{_lambda_.31} parent=0 // pred_check
    %p199 = pneg %p17
  $region23: #{_lambda_.31} parent=0 // pred_check_branch
    %201 = sbr.rel (%p199) target = $region25
  $region24: #{_lambda_.31} parent=0 // pred_region
    %v202 = vld [vmem:[#allocation2] sm:$0xff]
    %v203 = vld [vmem:[#allocation2 + $0x8] sm:$0xff]
    %v204 = vld [vmem:[%s2] sm:$0x1]
    %v206 = vperm.slane %v204, 0
    %v208 = vadd.f32 %v202, %v206
    %v209 = vadd.f32 %v203, %v206
    %v210 = vld [vmem:[%s3] sm:$0xf]
    %v211 = vld [vmem:[%s3 + $0x4] sm:$0xf]
    %v212 = vunpack.c.l.bf16 %v210
    %v213 = vunpack.c.l.bf16 %v211
    %v214 = vadd.f32 %v208, %v212
    %v215 = vadd.f32 %v209, %v213
    %v216 = vpack.c.bf16 %v214, %v214
    %v217 = vpack.c.bf16 %v215, %v215
    %vm218 = vcmask 519168
    %219 = vst.msk [vmem:[%s4] sm:$0xf] %vm218, %v216
    %220 = vst.msk [vmem:[%s4 + $0x4] sm:$0xf] %vm218, %v217
  $region25: #{_lambda_.31} parent=0 // pred_fallthru
    _
  // Predicated region
  $region26: #{_lambda_.31} parent=0 // pred_check
    _
  $region27: #{_lambda_.31} parent=0 // pred_check_branch
    %222 = sbr.rel (0) target = $region29
  $region28: #{_lambda_.31} parent=0 // pred_region
    _
  $region29: #{_lambda_.31} parent=0 // pred_fallthru
    _
  // Predicated region
  $region30: #{_lambda_.31} parent=0 // pred_check
    _
  $region31: #{_lambda_.31} parent=0 // pred_check_branch
    %224 = sbr.rel (0) target = $region33
  $region32: #{_lambda_.31} parent=0 // pred_region
    _
  $region33: #{_lambda_.31} parent=0 // pred_fallthru
    _

// kernel: _lambda_.37
$region0: #{_lambda_.37}
  #allocation0 [shape = 'u32[]', space=smem, size = 0x4, offset = 0x4, fixed_abs, tag = 'smem constant byte address 0x4 - core index']
  #allocation1 [shape = 'u32[72,128]{1,0:T(1,128)}', space=vmem, size = 0x9000, scoped, tag = 'internal scratch']
  #allocation2 [shape = 'bf16[8,64]{1,0:T(8,128)(2,1)}', space=vmem, size = 0x800, scoped, tag = 'scratch operand']
  %s0 = inlined_call_operand.vmem [shape: bf16[8,64], index: 0, kind: input, shape index: {}]
  %s1 = inlined_call_operand.vmem [shape: f32[1,64], index: 1, kind: input, shape index: {}]
  %s2 = inlined_call_operand.vmem [shape: f32[1,64], index: 2, kind: input, shape index: {}]
  %s3 = inlined_call_operand.vmem [shape: bf16[64,32], index: 3, kind: input, shape index: {}]
  %s4 = inlined_call_operand.vmem [shape: bf16[8,32], index: 4, kind: output, shape index: {}]
  %s5 = sld [smem:[#allocation0]]
  $region30: #{_lambda_.37} parent=0
    _
  %s7 = ssub.s32 1, %s5
  %s8 = scalar_select 0, %s7, %s5
  // Predicated region
  $region2: #{_lambda_.37} parent=0 // pred_check
    _
  $region3: #{_lambda_.37} parent=0 // pred_check_branch
    %10 = sbr.rel (0) target = $region5
  $region4: #{_lambda_.37} parent=0 // pred_region
    _
  $region5: #{_lambda_.37} parent=0 // pred_fallthru
    _
  // Predicated region
  $region6: #{_lambda_.37} parent=0 // pred_check
    _
  $region7: #{_lambda_.37} parent=0 // pred_check_branch
    %12 = sbr.rel (0) target = $region9
  $region8: #{_lambda_.37} parent=0 // pred_region
    _
  $region9: #{_lambda_.37} parent=0 // pred_fallthru
    _
  // Predicated region
  $region10: #{_lambda_.37} parent=0 // pred_check
    _
  $region11: #{_lambda_.37} parent=0 // pred_check_branch
    %14 = sbr.rel (0) target = $region13
  $region12: #{_lambda_.37} parent=0 // pred_region
    _
  $region13: #{_lambda_.37} parent=0 // pred_fallthru
    _
  // Predicated region
  $region14: #{_lambda_.37} parent=0 // pred_check
    _
  $region15: #{_lambda_.37} parent=0 // pred_check_branch
    %16 = sbr.rel (0) target = $region17
  $region16: #{_lambda_.37} parent=0 // pred_region
    _
  $region17: #{_lambda_.37} parent=0 // pred_fallthru
    _
  %p18 = scmp.eq.s32.totalorder 0, 0
  // Predicated region
  $region18: #{_lambda_.37} parent=0 // pred_check
    %p19 = pneg %p18
  $region19: #{_lambda_.37} parent=0 // pred_check_branch
    %21 = sbr.rel (%p19) target = $region21
  $region20: #{_lambda_.37} parent=0 // pred_region
    %v22 = vld [vmem:[%s0] sm:$0xf]
    %v23 = vunpack.c.l.bf16 %v22
    %vm24 = vcmask 523264
    %v25 = vsel %vm24, %v23, 0.0
    %26 = vadd.xlane.f32.xlu0 %v25
    %v27 = vpop.xlane.xlu0 %26
    %v28 = vrcp.pop 64.0
    %v29 = vmul.f32 64.0, %v28
    %v30 = vsub.f32 1.0, %v29
    %v31 = vmul.f32 %v28, %v30
    %v32 = vadd.f32 %v28, %v31
    %vm33 = vweird.f32 %v28
    %v34 = vsel %vm33, %v28, %v32
    %v35 = vmul.f32 %v27, %v34
    %v36 = vsub.f32 %v23, %v35
    %v37 = vmul.f32 %v36, %v36
    %v38 = vsel %vm24, %v37, 0.0
    %39 = vadd.xlane.f32.xlu0 %v38
    %v40 = vpop.xlane.xlu0 %39
    %v41 = vmul.f32 %v40, %v34
    %v42 = vadd.f32 %v41, 1e-05
    %v43 = vrsqrt.pop %v42
    %v44 = vmul.f32 %v43, %v42
    %v45 = vmul.f32 %v44, %v43
    %v46 = vmul.f32 0.5, %v45
    %v47 = vsub.f32 1.5, %v46
    %v48 = vmul.f32 %v43, %v47
    %vm49 = vweird.f32 %v42
    %vm50 = vweird.f32 %v43
    %vm51 = vmor %vm49, %vm50
    %v52 = vsel %vm51, %v43, %v48
    %v53 = vmul.f32 %v36, %v52
    %v54 = vld [vmem:[%s1] sm:$0x1]
    %v56 = vperm.slane %v54, 0
    %v58 = vmul.f32 %v53, %v56
    %v59 = vld [vmem:[%s2] sm:$0x1]
    %v61 = vperm.slane %v59, 0
    %v63 = vadd.f32 %v58, %v61
    %v64 = vpack.c.bf16 %v63, %v63
    %vm65 = vcmask 519168
    %66 = vst.msk [vmem:[#allocation2] sm:$0xf] %vm65, %v64
  $region21: #{_lambda_.37} parent=0 // pred_fallthru
    _
  %v67 = vld [vmem:[#allocation2] sm:$0xf]
  %v68 = vld [vmem:[%s3] sm:$0xf]
  %v69 = vld [vmem:[%s3 + $0x4] sm:$0xf]
  %v70 = vld [vmem:[%s3 + $0x8] sm:$0xf]
  %v71 = vld [vmem:[%s3 + $0xc] sm:$0xf]
  %v72 = vld [vmem:[%s3 + $0x10] sm:$0xf]
  %v73 = vld [vmem:[%s3 + $0x14] sm:$0xf]
  %v74 = vld [vmem:[%s3 + $0x18] sm:$0xf]
  %v75 = vld [vmem:[%s3 + $0x1c] sm:$0xf]
  %v84 = vunpack.c.l.b16 %v68
  %v85 = vunpack.c.l.b16 %v69
  %v86 = vunpack.c.l.b16 %v70
  %v87 = vunpack.c.l.b16 %v71
  %v88 = vunpack.c.l.b16 %v72
  %v89 = vunpack.c.l.b16 %v73
  %v90 = vunpack.c.l.b16 %v74
  %v91 = vunpack.c.l.b16 %v75
  %v92 = vpack.c.b16 %v85, %v84
  %v93 = vpack.c.b16 %v87, %v86
  %v94 = vpack.c.b16 %v89, %v88
  %v95 = vpack.c.b16 %v91, %v90
  %vm100 = vcmask 523264
  %v102 = vsel %vm100, %v67, 0
  %104 = vmatpush.bf16.msra.mxu0 0
  %105 = vmatpush.bf16.msra.mxu0 0
  %106 = vmatpush.bf16.msra.mxu0 0
  %107 = vmatpush.bf16.msra.mxu0 0
  %108 = vmatpush.bf16.msra.mxu0 %v95
  %109 = vmatpush.bf16.msra.mxu0 %v94
  %110 = vmatpush.bf16.msra.mxu0 %v93
  %111 = vmatpush.bf16.msra.mxu0 %v92
  %112 = vmatmul.bf16.gmra.mxu0 %v102
  %v113 = vpop.f32.mrf.mxu0
  %v114 = vadd.f32 0.0, %v113
  %v115 = vpop.f32.mrf.mxu0
  %116 = vdwg.mxu0
  %v117 = vpack.c.bf16 %v114, %v114
  %vm118 = vcmask 257024
  %119 = vst.msk [vmem:[%s4] sm:$0xf] %vm118, %v117
  // Predicated region
  $region22: #{_lambda_.37} parent=0 // pred_check
    _
  $region23: #{_lambda_.37} parent=0 // pred_check_branch
    %121 = sbr.rel (0) target = $region25
  $region24: #{_lambda_.37} parent=0 // pred_region
    _
  $region25: #{_lambda_.37} parent=0 // pred_fallthru
    _
  // Predicated region
  $region26: #{_lambda_.37} parent=0 // pred_check
    _
  $region27: #{_lambda_.37} parent=0 // pred_check_branch
    %123 = sbr.rel (0) target = $region29
  $region28: #{_lambda_.37} parent=0 // pred_region
    _
  $region29: #{_lambda_.37} parent=0 // pred_fallthru
    _

// kernel: _lambda_.49
$region0: #{_lambda_.49}
  #allocation0 [shape = 'u32[]', space=smem, size = 0x4, offset = 0x4, fixed_abs, tag = 'smem constant byte address 0x4 - core index']
  #allocation1 [shape = 'u32[72,128]{1,0:T(1,128)}', space=vmem, size = 0x9000, scoped, tag = 'internal scratch']
  #allocation2 [shape = 'f32[1]{0:T(128)S(6)}', space=smem, size = 0x200, scoped, tag = 'scoped memory for _lambda_.49']
  %s0 = inlined_call_operand.vmem [shape: bf16[2,4,32], index: 0, kind: input, shape index: {}]
  %s1 = inlined_call_operand.vmem [shape: bf16[2,32], index: 1, kind: input, shape index: {}]
  %s2 = inlined_call_operand.<no memory space> [shape: f32[1], index: 2, kind: input, shape index: {}]
  %s3 = inlined_call_operand.vmem [shape: f32[2,4,2], index: 3, kind: output, shape index: {}]
  %s4 = sld [smem:[#allocation0]]
  $region45: #{_lambda_.49} parent=0
    _
  %s6 = ssub.s32 1, %s4
  %s7 = scalar_select 0, %s6, %s4
  %8 = sst [smem:[#allocation2]] %s2
  loop: start=0, step=1, limit=4
  $region2: #{_lambda_.49} parent=0 // loop_pre_header
    _
  $region3: #{_lambda_.49} parent=0 // loop_header
    %s10 = sphi 0, %s14
    %p11 = scmp.ge.s32.totalorder %s10, 4
    %s20 = sphi 0, %s22
    %s23 = sphi 0, %s20
    %s24 = sphi 0, %s23
    %s40 = sphi 0, %s24
    %s44 = sphi 0, %s44
    %s46 = sphi 0, %s44
    %s47 = sphi 0, %s46
    %s61 = sphi 0, %s47
    %s65 = sphi 0, %s65
    %s67 = sphi 0, %s65
    %s68 = sphi 0, %s67
    %s82 = sphi 0, %s68
    %s88 = sphi 0, %s90
    %s91 = sphi 0, %s88
    %s92 = sphi 0, %s91
    %s108 = sphi 0, %s92
  $region4: #{_lambda_.49} parent=0 // loop_header_branch
    %13 = sbr.rel (%p11) target = $region8
  $region5: #{_lambda_.49} parent=0 // loop_body
    %s15 = ssub.s32 %s10, 1
    %s16 = ssub.s32 %s10, 2
    %s17 = sadd.s32 %s10, 1
    %s18 = ssub.s32 %s10, %s17
    %p19 = scmp.eq.s32.totalorder %s18, 0
    %s21 = sadd.s32 %s20, 1
    %s22 = scalar_select %p19, %s20, %s21
    %p25 = pneg %p19
    %p26 = scmp.eq.s32.totalorder %s10, 1
    %p27 = por %p25, %p26
    %p28 = scmp.ne.s32.totalorder %s20, %s23
    %p29 = scmp.eq.s32.totalorder %s10, 0
    %p30 = por %p28, %p29
    %p31 = scmp.ne.s32.totalorder %s20, %s23
    %p32 = scmp.eq.s32.totalorder %s15, 1
    %p33 = por %p31, %p32
    %p34 = scmp.ne.s32.totalorder %s23, %s24
    %p35 = scmp.eq.s32.totalorder %s15, 0
    %p36 = por %p34, %p35
    %p37 = scmp.ne.s32.totalorder %s23, %s24
    %p38 = scmp.eq.s32.totalorder %s16, 1
    %p39 = por %p37, %p38
    %p41 = scmp.ne.s32.totalorder %s24, %s40
    %p42 = scmp.eq.s32.totalorder %s16, 0
    %p43 = por %p41, %p42
    %s45 = sadd.s32 %s44, 1
    %p48 = scmp.eq.s32.totalorder %s10, 1
    %p49 = scmp.ne.s32.totalorder %s44, %s46
    %p50 = scmp.eq.s32.totalorder %s10, 0
    %p51 = por %p49, %p50
    %p52 = scmp.ne.s32.totalorder %s44, %s46
    %p53 = scmp.eq.s32.totalorder %s15, 1
    %p54 = por %p52, %p53
    %p55 = scmp.ne.s32.totalorder %s46, %s47
    %p56 = scmp.eq.s32.totalorder %s15, 0
    %p57 = por %p55, %p56
    %p58 = scmp.ne.s32.totalorder %s46, %s47
    %p59 = scmp.eq.s32.totalorder %s16, 1
    %p60 = por %p58, %p59
    %p62 = scmp.ne.s32.totalorder %s47, %s61
    %p63 = scmp.eq.s32.totalorder %s16, 0
    %p64 = por %p62, %p63
    %s66 = sadd.s32 %s65, 1
    %p69 = scmp.eq.s32.totalorder %s10, 1
    %p70 = scmp.ne.s32.totalorder %s65, %s67
    %p71 = scmp.eq.s32.totalorder %s10, 0
    %p72 = por %p70, %p71
    %p73 = scmp.ne.s32.totalorder %s65, %s67
    %p74 = scmp.eq.s32.totalorder %s15, 1
    %p75 = por %p73, %p74
    %p76 = scmp.ne.s32.totalorder %s67, %s68
    %p77 = scmp.eq.s32.totalorder %s15, 0
    %p78 = por %p76, %p77
    %p79 = scmp.ne.s32.totalorder %s67, %s68
    %p80 = scmp.eq.s32.totalorder %s16, 1
    %p81 = por %p79, %p80
    %p83 = scmp.ne.s32.totalorder %s68, %s82
    %p84 = scmp.eq.s32.totalorder %s16, 0
    %p85 = por %p83, %p84
    %s86 = ssub.s32 %s10, %s17
    %p87 = scmp.eq.s32.totalorder %s86, 0
    %s89 = sadd.s32 %s88, 1
    %s90 = scalar_select %p87, %s88, %s89
    %p93 = pneg %p87
    %p94 = scmp.eq.s32.totalorder %s10, 1
    %p95 = por %p93, %p94
    %p96 = scmp.ne.s32.totalorder %s88, %s91
    %p97 = scmp.eq.s32.totalorder %s10, 0
    %p98 = por %p96, %p97
    %p99 = scmp.ne.s32.totalorder %s88, %s91
    %p100 = scmp.eq.s32.totalorder %s15, 1
    %p101 = por %p99, %p100
    %p102 = scmp.ne.s32.totalorder %s91, %s92
    %p103 = scmp.eq.s32.totalorder %s15, 0
    %p104 = por %p102, %p103
    %p105 = scmp.ne.s32.totalorder %s91, %s92
    %p106 = scmp.eq.s32.totalorder %s16, 1
    %p107 = por %p105, %p106
    %p109 = scmp.ne.s32.totalorder %s92, %s108
    %p110 = scmp.eq.s32.totalorder %s16, 0
    %p111 = por %p109, %p110
    %p112 = scmp.le.s32.totalorder 1, %s10
    %p113 = scmp.lt.s32.totalorder %s10, 3
    %p114 = pnand %p112, %p113
    %p115 = pneg %p114
    // Predicated region
    $region9: #{_lambda_.49} parent=5 // pred_check
      _
    $region10: #{_lambda_.49} parent=5 // pred_check_branch
      %117 = sbr.rel (%p114) target = $region12
    $region11: #{_lambda_.49} parent=5 // pred_region
      %s118 = ssub.s32 %s10, 1
      // Predicated region
      $region13: #{_lambda_.49} parent=11 // pred_check
        %p119 = pneg %p57
      $region14: #{_lambda_.49} parent=11 // pred_check_branch
        %121 = sbr.rel (%p119) target = $region16
      $region15: #{_lambda_.49} parent=11 // pred_region
        _
      $region16: #{_lambda_.49} parent=11 // pred_fallthru
        _
      // Predicated region
      $region17: #{_lambda_.49} parent=11 // pred_check
        %p122 = pneg %p78
      $region18: #{_lambda_.49} parent=11 // pred_check_branch
        %124 = sbr.rel (%p122) target = $region20
      $region19: #{_lambda_.49} parent=11 // pred_region
        _
      $region20: #{_lambda_.49} parent=11 // pred_fallthru
        _
    $region12: #{_lambda_.49} parent=5 // pred_fallthru
      _
    %p125 = scmp.lt.s32.totalorder %s10, 2
    // Predicated region
    $region21: #{_lambda_.49} parent=5 // pred_check
      %p126 = pneg %p125
    $region22: #{_lambda_.49} parent=5 // pred_check_branch
      %128 = sbr.rel (%p126) target = $region24
    $region23: #{_lambda_.49} parent=5 // pred_region
      // Predicated region
      $region25: #{_lambda_.49} parent=23 // pred_check
        %p129 = pneg %p30
      $region26: #{_lambda_.49} parent=23 // pred_check_branch
        %131 = sbr.rel (%p129) target = $region28
      $region27: #{_lambda_.49} parent=23 // pred_region
        %p132 = scmp.lt.s32.totalorder %s10, 1
        %s133 = scalar_select %p132, %s10, 1
        %s134 = smul.addr %s133, 2
        %s135 = scalar_lea.vmem %s0, %s134
      $region28: #{_lambda_.49} parent=23 // pred_fallthru
        _
    $region24: #{_lambda_.49} parent=5 // pred_fallthru
      _
    %p136 = scmp.le.s32.totalorder 1, %s10
    %p137 = scmp.lt.s32.totalorder %s10, 3
    %p138 = pnand %p136, %p137
    %p139 = pneg %p138
    // Predicated region
    $region29: #{_lambda_.49} parent=5 // pred_check
      _
    $region30: #{_lambda_.49} parent=5 // pred_check_branch
      %141 = sbr.rel (%p138) target = $region32
    $region31: #{_lambda_.49} parent=5 // pred_region
      %s142 = ssub.s32 %s10, 1
      %p143 = scmp.lt.s32.totalorder %s15, 1
      %s144 = scalar_select %p143, %s15, 1
      %s145 = smul.addr %s144, 2
      %s146 = scalar_lea.vmem %s0, %s145
      %p147 = pneg %p36
      %p148 = pneg %p33
      %p149 = pneg %p57
      %p150 = pneg %p54
      %p151 = pneg %p78
      %p152 = pneg %p75
      %p153 = pneg %p104
      %p154 = pneg %p101
      %p155 = scmp.lt.s32.totalorder %s15, 1
      %s156 = scalar_select %p155, %s15, 1
      %s157 = smul.addr %s156, 4
      %s158 = scalar_lea.vmem %s3, %s157
      %p159 = scmp.lt.s32.totalorder %s15, 1
      %s160 = scalar_select %p159, %s15, 1
      %s161 = smul.addr %s160, 2
      %s162 = scalar_lea.vmem %s0, %s161
      %p163 = scmp.lt.s32.totalorder %s15, 1
      %s164 = scalar_select %p163, %s15, 1
      %s165 = smul.addr %s164, 4
      %s166 = scalar_lea.vmem %s3, %s165
      %v168 = vld [vmem:[%s162] sm:$0x3]
      %v169 = vunpack.c.l.bf16 %v168
      %v170 = vld [vmem:[%s1] sm:$0x1]
      %v171 = vunpack.c.l.bf16 %v170
      %v172 = vmul.f32 %v169, %v169
      %vm173 = vcmask 257024
      %v174 = vsel %vm173, %v172, 0.0
      %v175 = vrot.slane %v174, 4
      %v176 = vadd.f32 %v174, %v175
      %v177 = vrot.slane %v176, 2
      %v178 = vadd.f32 %v176, %v177
      %v179 = vrot.slane %v178, 1
      %v180 = vadd.f32 %v178, %v179
      %v181 = vrsqrt.pop %v180
      %v182 = vmul.f32 %v181, %v180
      %v183 = vmul.f32 %v182, %v181
      %v184 = vmul.f32 0.5, %v183
      %v185 = vsub.f32 1.5, %v184
      %v186 = vmul.f32 %v181, %v185
      %vm187 = vweird.f32 %v180
      %vm188 = vweird.f32 %v181
      %vm189 = vmor %vm187, %vm188
      %v190 = vsel %vm189, %v181, %v186
      %v191 = vmul.f32 %v169, %v190
      %v192 = vmul.f32 %v171, %v171
      %vm193 = vcmask 254976
      %v194 = vsel %vm193, %v192, 0.0
      %195 = vadd.xlane.f32.xlu0 %v194
      %v196 = vpop.xlane.xlu0 %195
      %v197 = vrsqrt.pop %v196
      %v198 = vmul.f32 %v197, %v196
      %v199 = vmul.f32 %v198, %v197
      %v200 = vmul.f32 0.5, %v199
      %v201 = vsub.f32 1.5, %v200
      %v202 = vmul.f32 %v197, %v201
      %vm203 = vweird.f32 %v196
      %vm204 = vweird.f32 %v197
      %vm205 = vmor %vm203, %vm204
      %v206 = vsel %vm205, %v197, %v202
      %v207 = vmul.f32 %v171, %v206
      %s208 = sld [smem:[#allocation2]]
      %v209 = vstv %s208
      %v210 = vmul.f32 %v209, 1.442695
      %v211 = vpow.pop %v210
      %s212 = vtos %v211
      %v213 = vpack.c.bf16 %v191, %v191
      %v214 = vpack.c.bf16 %v207, %v207
      %vm215 = vcmask 261120
      %v217 = vsel %vm215, %v213, 0
      %v220 = vsel %vm215, %v214, 0
      %222 = vmatpush.bf16.xpose.msra.mxu0 0
      %223 = vmatpush.bf16.xpose.msra.mxu0 0
      %224 = vmatpush.bf16.xpose.msra.mxu0 0
      %225 = vmatpush.bf16.xpose.msra.mxu0 0
      %226 = vmatpush.bf16.xpose.msra.mxu0 0
      %227 = vmatpush.bf16.xpose.msra.mxu0 0
      %228 = vmatpush.bf16.xpose.msra.mxu0 0
      %229 = vmatpush.bf16.xpose.msra.mxu0 %v220
      %230 = vmatmul.bf16.gmra.mxu0 %v217
      %v231 = vpop.f32.mrf.mxu0
      %v232 = vadd.f32 0.0, %v231
      %v233 = vpop.f32.mrf.mxu0
      %234 = vdwg.mxu0
      %v235 = vstv %s212
      %v236 = vmul.f32 %v235, %v232
      %vm237 = vcmask 11264
      %238 = vst.msk [vmem:[%s166] sm:$0xf] %vm237, %v236
      %p239 = scmp.lt.s32.totalorder %s15, 1
      %s240 = scalar_select %p239, %s15, 1
      %s241 = smul.addr %s240, 4
      %s242 = scalar_lea.vmem %s3, %s241
      // Predicated region
      $region33: #{_lambda_.49} parent=31 // pred_check
        %p243 = pneg %p101
      $region34: #{_lambda_.49} parent=31 // pred_check_branch
        %245 = sbr.rel (%p243) target = $region36
      $region35: #{_lambda_.49} parent=31 // pred_region
        _
      $region36: #{_lambda_.49} parent=31 // pred_fallthru
        _
    $region32: #{_lambda_.49} parent=5 // pred_fallthru
      _
    %p246 = scmp.le.s32.totalorder 2, %s10
    // Predicated region
    $region37: #{_lambda_.49} parent=5 // pred_check
      %p247 = pneg %p246
    $region38: #{_lambda_.49} parent=5 // pred_check_branch
      %249 = sbr.rel (%p247) target = $region40
    $region39: #{_lambda_.49} parent=5 // pred_region
      %s250 = ssub.s32 %s10, 2
      // Predicated region
      $region41: #{_lambda_.49} parent=39 // pred_check
        %p251 = pneg %p107
      $region42: #{_lambda_.49} parent=39 // pred_check_branch
        %253 = sbr.rel (%p251) target = $region44
      $region43: #{_lambda_.49} parent=39 // pred_region
        %p254 = scmp.lt.s32.totalorder %s16, 1
        %s255 = scalar_select %p254, %s16, 1
        %s256 = smul.addr %s255, 4
        %s257 = scalar_lea.vmem %s3, %s256
      $region44: #{_lambda_.49} parent=39 // pred_fallthru
        _
    $region40: #{_lambda_.49} parent=5 // pred_fallthru
      _
  $region6: #{_lambda_.49} parent=0 // loop_footer
    %s14 = sadd.s32 1, %s10
  $region7: #{_lambda_.49} parent=0 // loop_footer_branch
    %9 = sbr.rel target = $region3
  $region8: #{_lambda_.49} parent=0 // loop_exit
    _

</llo_original>
